<compile_context>
chip_gen: v7x
topology: tpu7x:2x2x1
jax: 0.10.0
libtpu: 0.0.40
codegen_flags: <defaults>
</compile_context>

<pallas_src>
import functools

import jax
import jax.numpy as jnp
from jax.experimental import pallas as pl
from jax.experimental.pallas import tpu as pltpu


NZ_PAD = 128  # latent dim zero-padded to one full lane width


# ---------------------------------------------------------------------------
# Kernel
# ---------------------------------------------------------------------------
def sigma_vae_kernel(
    # batch-tiled activations
    x_ref, eps_ref,
    # encoder
    ew1_ref, eb1_ref,          # Linear(nin, nh)                       (bf16 / f32 bias)
    ew2_ref, eb2_ref,          # Linear(nh, nh)   (encoder BN1 folded)
    # latent heads
    zh1_ref, zb1_ref,          # (nh, 2*nh) packed [zmu1 | zlogvar1]   (encoder BN2 folded)
    zm2_ref, zm2b_ref,         # (nh, NZ_PAD)  zmu second linear, cols zero-padded nz->NZ_PAD
    zl2_ref, zl2b_ref,         # (nh, NZ_PAD)  zlogvar second linear
    # decoder
    dw1_ref, db1_ref,          # (NZ_PAD, nh)  K rows zero-padded beyond nz
    dw2_ref, db2_ref,          # Linear(nh, nh)   (decoder BN1 folded)
    # xmu head
    xw1_ref, xb1_ref,          # Linear(nh, nh)   (decoder BN2 folded)
    xw2_ref, xb2_ref,          # Linear(nh, nin)
    # outputs
    zmu_ref,                   # (TB, NZ_PAD)
    zlogvar_ref,               # (TB, NZ_PAD)
    xmu_ref,                   # (TB, nin)
):
    relu = lambda v: jnp.maximum(v, 0.0)
    lrelu = lambda v: jnp.where(v > 0, v, 0.01 * v)   # nn.LeakyReLU default slope

    # bf16 operands, f32 accumulation; bias add and everything downstream in f32.
    def lin(a, w_ref, b_ref):
        return (
            jnp.dot(a.astype(jnp.bfloat16), w_ref[...],
                    preferred_element_type=jnp.float32)
            + b_ref[...]
        )

    nh = ew1_ref.shape[1]

    # ---- encoder (Dropout = eval identity; BN folded into the following linear) ----
    h = relu(lin(x_ref[...], ew1_ref, eb1_ref))
    h = relu(lin(h, ew2_ref, eb2_ref))

    # ---- latent heads: fused first linears, split dense second linears ----
    g = lrelu(lin(h, zh1_ref, zb1_ref))               # (TB, 2*nh)
    zmu_p = lin(g[:, :nh], zm2_ref, zm2b_ref)         # (TB, NZ_PAD), lane-dense
    zmu_ref[...] = zmu_p                              # store early: short live range
    zlogvar_p = lin(g[:, nh:], zl2_ref, zl2b_ref)     # (TB, NZ_PAD), lane-dense
    zlogvar_ref[...] = zlogvar_p

    # ---- reparameterize: z = mu + exp(0.5 * logvar) * eps   (f32) ----
    z = zmu_p + jnp.exp(0.5 * zlogvar_p) * eps_ref[...]

    # ---- decoder ----
    h = relu(lin(z, dw1_ref, db1_ref))
    h = relu(lin(h, dw2_ref, db2_ref))

    # ---- xmu head ----
    xmu_ref[...] = lin(lrelu(lin(h, xw1_ref, xb1_ref)), xw2_ref, xb2_ref)


# ---------------------------------------------------------------------------
# Parameter construction (PyTorch-style init), BN folding and head packing
# ---------------------------------------------------------------------------
def _init_linear(key, n_in, n_out):
    # nn.Linear default init: U(-1/sqrt(n_in), 1/sqrt(n_in)); stored as (in, out).
    kw, kb = jax.random.split(key)
    bound = 1.0 / (float(n_in) ** 0.5)
    w = jax.random.uniform(kw, (n_in, n_out), jnp.float32, -bound, bound)
    b = jax.random.uniform(kb, (n_out,), jnp.float32, -bound, bound)
    return w, b


def _init_bn(key, n):
    # nn.BatchNorm1d eval mode -> per-feature scale/shift.  Running stats are
    # randomized (mild ranges) so the BN->Linear fold is actually exercised.
    kg, kb, km, kv = jax.random.split(key, 4)
    gamma = jax.random.uniform(kg, (n,), jnp.float32, 0.8, 1.2)
    beta = jax.random.uniform(kb, (n,), jnp.float32, -0.1, 0.1)
    running_mean = jax.random.uniform(km, (n,), jnp.float32, -0.1, 0.1)
    running_var = jax.random.uniform(kv, (n,), jnp.float32, 0.8, 1.2)
    eps = 1e-5
    scale = gamma / jnp.sqrt(running_var + eps)
    shift = beta - running_mean * scale
    return scale, shift


def make_sigma_vae_params(key, nin, nh, nz):
    keys = jax.random.split(key, 14)
    p = {}
    p["ew1"], p["eb1"] = _init_linear(keys[0], nin, nh)
    p["es1"], p["et1"] = _init_bn(keys[10], nh)
    p["ew2"], p["eb2"] = _init_linear(keys[1], nh, nh)
    p["es2"], p["et2"] = _init_bn(keys[11], nh)

    p["zmw1"], p["zmb1"] = _init_linear(keys[2], nh, nh)
    p["zmw2"], p["zmb2"] = _init_linear(keys[3], nh, nz)
    p["zlw1"], p["zlb1"] = _init_linear(keys[4], nh, nh)
    p["zlw2"], p["zlb2"] = _init_linear(keys[5], nh, nz)

    p["dw1"], p["db1"] = _init_linear(keys[6], nz, nh)
    p["ds1"], p["dt1"] = _init_bn(keys[12], nh)
    p["dw2"], p["db2"] = _init_linear(keys[7], nh, nh)
    p["ds2"], p["dt2"] = _init_bn(keys[13], nh)

    p["xw1"], p["xb1"] = _init_linear(keys[8], nh, nh)
    p["xw2"], p["xb2"] = _init_linear(keys[9], nh, nin)
    return p


def _fold_bn_into_next(scale, shift, w, b):
    # Linear(BN(y)) = (y*scale + shift) @ W + b = y @ (scale[:,None]*W) + (shift@W + b)
    return scale[:, None] * w, b + shift @ w


def pack_sigma_vae_params(p, *, nz, nzp=NZ_PAD, weight_dtype=jnp.bfloat16):
    """Fold eval-mode BN into the following linear, pack/pad latent heads,
    and cast weights to bf16 (biases stay f32)."""
    nh = p["ew2"].shape[0]

    # encoder BN1 -> ew2
    ew2, eb2 = _fold_bn_into_next(p["es1"], p["et1"], p["ew2"], p["eb2"])

    # fused latent-head first linears: (nh, 2*nh) = [zmw1 | zlw1]; encoder BN2 folded in.
    zh1 = jnp.concatenate([p["zmw1"], p["zlw1"]], axis=1)
    zb1 = jnp.concatenate([p["zmb1"], p["zlb1"]], axis=0)
    zh1, zb1 = _fold_bn_into_next(p["es2"], p["et2"], zh1, zb1)

    # latent-head second linears kept dense & separate (no block-diag zero padding
    # in K), output columns zero-padded nz -> nzp so stores are lane-dense.
    zm2 = jnp.zeros((nh, nzp), jnp.float32).at[:, :nz].set(p["zmw2"])
    zm2b = jnp.zeros((nzp,), jnp.float32).at[:nz].set(p["zmb2"])
    zl2 = jnp.zeros((nh, nzp), jnp.float32).at[:, :nz].set(p["zlw2"])
    zl2b = jnp.zeros((nzp,), jnp.float32).at[:nz].set(p["zlb2"])

    # decoder first linear: pad the contracting dim nz -> nzp with zero rows.
    dw1 = jnp.zeros((nzp, nh), jnp.float32).at[:nz, :].set(p["dw1"])
    db1 = p["db1"]

    # decoder BN1 -> dw2 ; decoder BN2 -> xw1
    dw2, db2 = _fold_bn_into_next(p["ds1"], p["dt1"], p["dw2"], p["db2"])
    xw1, xb1 = _fold_bn_into_next(p["ds2"], p["dt2"], p["xw1"], p["xb1"])

    w = lambda a: a.astype(weight_dtype)
    row = lambda b: b.reshape(1, -1).astype(jnp.float32)
    return (
        w(p["ew1"]), row(p["eb1"]),
        w(ew2), row(eb2),
        w(zh1), row(zb1),
        w(zm2), row(zm2b),
        w(zl2), row(zl2b),
        w(dw1), row(db1),
        w(dw2), row(db2),
        w(xw1), row(xb1),
        w(p["xw2"]), row(p["xb2"]),
    )


# ---------------------------------------------------------------------------
# Wrapper
# ---------------------------------------------------------------------------
@functools.partial(jax.jit, static_argnames=("nz", "batch_tile", "vmem_limit_bytes"))
def sigma_vae_forward(x, eps, packed, *, nz, batch_tile=128, vmem_limit_bytes=16 << 20):
    """x: (B, nin) flattened image, eps: (B, nz) standard normal noise.

    batch_tile guidance: 128 keeps grid >= 2 at small B (both v7x TensorCores
    busy); use 256 on v6e / large-B v7x to fill the 256x256 MXU.
    """
    B, nin = x.shape
    nzp = NZ_PAD

    # No host-side padding of x: Pallas masks the partial tail block.  Tail
    # rows compute on unspecified data but every row is independent and their
    # output stores are dropped, so valid rows are unaffected.  eps is padded
    # only along its tiny latent axis to one full lane width.
    eps_p = jnp.zeros((B, nzp), jnp.float32).at[:, :nz].set(eps)

    # Batch-tiled activations are pipelined; weights/biases are whole-array
    # VMEM residents (loaded once, single-buffered).
    act = lambda cols: pl.BlockSpec((batch_tile, cols), lambda i: (i, 0))
    resident = pl.BlockSpec(memory_space=pltpu.MemorySpace.VMEM)

    zmu_p, zlogvar_p, xmu = pl.pallas_call(
        sigma_vae_kernel,
        grid=(pl.cdiv(B, batch_tile),),
        in_specs=[act(nin), act(nzp)] + [resident] * len(packed),
        out_specs=(act(nzp), act(nzp), act(nin)),
        out_shape=(
            jax.ShapeDtypeStruct((B, nzp), jnp.float32),
            jax.ShapeDtypeStruct((B, nzp), jnp.float32),
            jax.ShapeDtypeStruct((B, nin), jnp.float32),
        ),
        compiler_params=pltpu.CompilerParams(
            dimension_semantics=("parallel",),   # shard batch tiles over v7x's two TCs
            vmem_limit_bytes=vmem_limit_bytes,   # ~1.1 MiB bf16 weights + small tiles << 16 MiB
        ),
    )(x, eps_p, *packed)

    return zmu_p[:, :nz], zlogvar_p[:, :nz], xmu


# ---------------------------------------------------------------------------
# Pure-JAX reference of the original (unfolded, unpacked, f32) forward graph
# ---------------------------------------------------------------------------
def sigma_vae_reference(x, eps, p):
    relu = lambda v: jnp.maximum(v, 0.0)
    lrelu = lambda v: jnp.where(v > 0, v, 0.01 * v)
    bn = lambda v, s, t: v * s + t
    lin = lambda v, w, b: v @ w + b

    h = bn(relu(lin(x, p["ew1"], p["eb1"])), p["es1"], p["et1"])
    h = bn(relu(lin(h, p["ew2"], p["eb2"])), p["es2"], p["et2"])
    zmu = lin(lrelu(lin(h, p["zmw1"], p["zmb1"])), p["zmw2"], p["zmb2"])
    zlogvar = lin(lrelu(lin(h, p["zlw1"], p["zlb1"])), p["zlw2"], p["zlb2"])
    z = zmu + jnp.exp(0.5 * zlogvar) * eps
    h = bn(relu(lin(z, p["dw1"], p["db1"])), p["ds1"], p["dt1"])
    h = bn(relu(lin(h, p["dw2"], p["db2"])), p["ds2"], p["dt2"])
    xmu = lin(lrelu(lin(h, p["xw1"], p["xb1"])), p["xw2"], p["xb2"])
    return zmu, zlogvar, xmu


if __name__ == "__main__":
    # Small shapes consistent with the module: nin = imgsize**2, hidden nh, latent nz.
    B, imgsize, nh, nz = 200, 16, 256, 32
    nin = imgsize * imgsize  # 256

    key = jax.random.PRNGKey(0)
    kx, keps, kparams = jax.random.split(key, 3)

    # NCHW image (B, 1, 16, 16) flattened exactly like nn.Flatten / data.flatten(1).
    img = jax.random.uniform(kx, (B, 1, imgsize, imgsize), jnp.float32)
    x = img.reshape(B, nin)
    eps = jax.random.normal(keps, (B, nz), jnp.float32)

    raw_params = make_sigma_vae_params(kparams, nin, nh, nz)
    packed = pack_sigma_vae_params(raw_params, nz=nz)

    zmu, zlogvar, xmu = sigma_vae_forward(x, eps, packed, nz=nz)
    jax.block_until_ready((zmu, zlogvar, xmu))

    assert zmu.shape == (B, nz)
    assert zlogvar.shape == (B, nz)
    assert xmu.shape == (B, nin)
    assert jnp.all(jnp.isfinite(zmu)) and jnp.all(jnp.isfinite(zlogvar)) and jnp.all(jnp.isfinite(xmu))

    # Cross-check against the plain-JAX f32 reference of the original graph
    # (with randomized BN running stats, so the fold is exercised).  Tolerance
    # accounts for bf16 matmul operands in the kernel vs. the f32 reference.
    rzmu, rzlogvar, rxmu = sigma_vae_reference(x, eps, raw_params)
    tol = 1e-1
    assert float(jnp.max(jnp.abs(zmu - rzmu))) < tol
    assert float(jnp.max(jnp.abs(zlogvar - rzlogvar))) < tol
    assert float(jnp.max(jnp.abs(xmu - rxmu))) < tol

    print("KERNEL_OK")
</pallas_src>

<mosaic_0001>
module attributes {stable_mosaic.version = 11 : i64} {
  func.func @sigma_vae_kernel(%arg0: i32, %arg1: memref<128x256xf32, #tpu.memory_space<vmem>>, %arg2: memref<128x128xf32, #tpu.memory_space<vmem>>, %arg3: memref<256x256xbf16, #tpu.memory_space<vmem>>, %arg4: memref<1x256xf32, #tpu.memory_space<vmem>>, %arg5: memref<256x256xbf16, #tpu.memory_space<vmem>>, %arg6: memref<1x256xf32, #tpu.memory_space<vmem>>, %arg7: memref<256x512xbf16, #tpu.memory_space<vmem>>, %arg8: memref<1x512xf32, #tpu.memory_space<vmem>>, %arg9: memref<256x128xbf16, #tpu.memory_space<vmem>>, %arg10: memref<1x128xf32, #tpu.memory_space<vmem>>, %arg11: memref<256x128xbf16, #tpu.memory_space<vmem>>, %arg12: memref<1x128xf32, #tpu.memory_space<vmem>>, %arg13: memref<128x256xbf16, #tpu.memory_space<vmem>>, %arg14: memref<1x256xf32, #tpu.memory_space<vmem>>, %arg15: memref<256x256xbf16, #tpu.memory_space<vmem>>, %arg16: memref<1x256xf32, #tpu.memory_space<vmem>>, %arg17: memref<256x256xbf16, #tpu.memory_space<vmem>>, %arg18: memref<1x256xf32, #tpu.memory_space<vmem>>, %arg19: memref<256x256xbf16, #tpu.memory_space<vmem>>, %arg20: memref<1x256xf32, #tpu.memory_space<vmem>>, %arg21: memref<128x128xf32, #tpu.memory_space<vmem>>, %arg22: memref<128x128xf32, #tpu.memory_space<vmem>>, %arg23: memref<128x256xf32, #tpu.memory_space<vmem>>) attributes {dimension_semantics = [#tpu.dimension_semantics<parallel>], iteration_bounds = array<i64: 2>, scalar_prefetch = 0 : i64, scratch_operands = 0 : i64, tpu.core_type = #tpu.core_type<tc>, window_params = [{transform_indices = @transform_0, window_bounds = array<i64: 128, 256>}, {transform_indices = @transform_1, window_bounds = array<i64: 128, 128>}, {pipeline_mode = #tpu.pipeline_mode<synchronous>, transform_indices = @transform_2, window_bounds = array<i64: 256, 256>}, {pipeline_mode = #tpu.pipeline_mode<synchronous>, transform_indices = @transform_3, window_bounds = array<i64: 1, 256>}, {pipeline_mode = #tpu.pipeline_mode<synchronous>, transform_indices = @transform_4, window_bounds = array<i64: 256, 256>}, {pipeline_mode = #tpu.pipeline_mode<synchronous>, transform_indices = @transform_5, window_bounds = array<i64: 1, 256>}, {pipeline_mode = #tpu.pipeline_mode<synchronous>, transform_indices = @transform_6, window_bounds = array<i64: 256, 512>}, {pipeline_mode = #tpu.pipeline_mode<synchronous>, transform_indices = @transform_7, window_bounds = array<i64: 1, 512>}, {pipeline_mode = #tpu.pipeline_mode<synchronous>, transform_indices = @transform_8, window_bounds = array<i64: 256, 128>}, {pipeline_mode = #tpu.pipeline_mode<synchronous>, transform_indices = @transform_9, window_bounds = array<i64: 1, 128>}, {pipeline_mode = #tpu.pipeline_mode<synchronous>, transform_indices = @transform_10, window_bounds = array<i64: 256, 128>}, {pipeline_mode = #tpu.pipeline_mode<synchronous>, transform_indices = @transform_11, window_bounds = array<i64: 1, 128>}, {pipeline_mode = #tpu.pipeline_mode<synchronous>, transform_indices = @transform_12, window_bounds = array<i64: 128, 256>}, {pipeline_mode = #tpu.pipeline_mode<synchronous>, transform_indices = @transform_13, window_bounds = array<i64: 1, 256>}, {pipeline_mode = #tpu.pipeline_mode<synchronous>, transform_indices = @transform_14, window_bounds = array<i64: 256, 256>}, {pipeline_mode = #tpu.pipeline_mode<synchronous>, transform_indices = @transform_15, window_bounds = array<i64: 1, 256>}, {pipeline_mode = #tpu.pipeline_mode<synchronous>, transform_indices = @transform_16, window_bounds = array<i64: 256, 256>}, {pipeline_mode = #tpu.pipeline_mode<synchronous>, transform_indices = @transform_17, window_bounds = array<i64: 1, 256>}, {pipeline_mode = #tpu.pipeline_mode<synchronous>, transform_indices = @transform_18, window_bounds = array<i64: 256, 256>}, {pipeline_mode = #tpu.pipeline_mode<synchronous>, transform_indices = @transform_19, window_bounds = array<i64: 1, 256>}, {transform_indices = @transform_20, window_bounds = array<i64: 128, 128>}, {transform_indices = @transform_21, window_bounds = array<i64: 128, 128>}, {transform_indices = @transform_22, window_bounds = array<i64: 128, 256>}]} {
    %c0 = arith.constant 0 : index
    %c0_0 = arith.constant 0 : index
    %0 = vector.load %arg1[%c0, %c0_0] : memref<128x256xf32, #tpu.memory_space<vmem>>, vector<128x256xf32>
    %1 = arith.truncf %0 : vector<128x256xf32> to vector<128x256xbf16>
    %c0_1 = arith.constant 0 : index
    %c0_2 = arith.constant 0 : index
    %2 = vector.load %arg3[%c0_1, %c0_2] : memref<256x256xbf16, #tpu.memory_space<vmem>>, vector<256x256xbf16>
    %cst = arith.constant dense<0.000000e+00> : vector<128x256xf32>
    %3 = tpu.matmul %1, %2, %cst {dimension_numbers = #tpu.dot_dimension_numbers<[1], [0], [0], [1], [0, 0, 1, 1], [], []>} : vector<128x256xbf16>, vector<256x256xbf16>, vector<128x256xf32> -> vector<128x256xf32>
    %c0_3 = arith.constant 0 : index
    %c0_4 = arith.constant 0 : index
    %4 = vector.load %arg4[%c0_3, %c0_4] : memref<1x256xf32, #tpu.memory_space<vmem>>, vector<1x256xf32>
    %5 = vector.broadcast %4 : vector<1x256xf32> to vector<128x256xf32>
    %6 = arith.addf %3, %5 : vector<128x256xf32>
    %cst_5 = arith.constant 0.000000e+00 : f32
    %7 = vector.broadcast %cst_5 : f32 to vector<128x256xf32>
    %8 = arith.maximumf %6, %7 : vector<128x256xf32>
    %9 = arith.truncf %8 : vector<128x256xf32> to vector<128x256xbf16>
    %c0_6 = arith.constant 0 : index
    %c0_7 = arith.constant 0 : index
    %10 = vector.load %arg5[%c0_6, %c0_7] : memref<256x256xbf16, #tpu.memory_space<vmem>>, vector<256x256xbf16>
    %cst_8 = arith.constant dense<0.000000e+00> : vector<128x256xf32>
    %11 = tpu.matmul %9, %10, %cst_8 {dimension_numbers = #tpu.dot_dimension_numbers<[1], [0], [0], [1], [0, 0, 1, 1], [], []>} : vector<128x256xbf16>, vector<256x256xbf16>, vector<128x256xf32> -> vector<128x256xf32>
    %c0_9 = arith.constant 0 : index
    %c0_10 = arith.constant 0 : index
    %12 = vector.load %arg6[%c0_9, %c0_10] : memref<1x256xf32, #tpu.memory_space<vmem>>, vector<1x256xf32>
    %13 = vector.broadcast %12 : vector<1x256xf32> to vector<128x256xf32>
    %14 = arith.addf %11, %13 : vector<128x256xf32>
    %cst_11 = arith.constant 0.000000e+00 : f32
    %15 = vector.broadcast %cst_11 : f32 to vector<128x256xf32>
    %16 = arith.maximumf %14, %15 : vector<128x256xf32>
    %17 = arith.truncf %16 : vector<128x256xf32> to vector<128x256xbf16>
    %c0_12 = arith.constant 0 : index
    %c0_13 = arith.constant 0 : index
    %18 = vector.load %arg7[%c0_12, %c0_13] : memref<256x512xbf16, #tpu.memory_space<vmem>>, vector<256x512xbf16>
    %cst_14 = arith.constant dense<0.000000e+00> : vector<128x512xf32>
    %19 = tpu.matmul %17, %18, %cst_14 {dimension_numbers = #tpu.dot_dimension_numbers<[1], [0], [0], [1], [0, 0, 1, 1], [], []>} : vector<128x256xbf16>, vector<256x512xbf16>, vector<128x512xf32> -> vector<128x512xf32>
    %c0_15 = arith.constant 0 : index
    %c0_16 = arith.constant 0 : index
    %20 = vector.load %arg8[%c0_15, %c0_16] : memref<1x512xf32, #tpu.memory_space<vmem>>, vector<1x512xf32>
    %21 = vector.broadcast %20 : vector<1x512xf32> to vector<128x512xf32>
    %22 = arith.addf %19, %21 : vector<128x512xf32>
    %cst_17 = arith.constant 0.000000e+00 : f32
    %23 = vector.broadcast %cst_17 : f32 to vector<128x512xf32>
    %24 = arith.cmpf ogt, %22, %23 : vector<128x512xf32>
    %cst_18 = arith.constant 0.00999999977 : f32
    %25 = vector.broadcast %cst_18 : f32 to vector<128x512xf32>
    %26 = arith.mulf %25, %22 : vector<128x512xf32>
    %27 = arith.select %24, %22, %26 : vector<128x512xi1>, vector<128x512xf32>
    %28 = vector.extract_strided_slice %27 {offsets = [0, 0], sizes = [128, 256], strides = [1, 1]} : vector<128x512xf32> to vector<128x256xf32>
    %29 = arith.truncf %28 : vector<128x256xf32> to vector<128x256xbf16>
    %c0_19 = arith.constant 0 : index
    %c0_20 = arith.constant 0 : index
    %30 = vector.load %arg9[%c0_19, %c0_20] : memref<256x128xbf16, #tpu.memory_space<vmem>>, vector<256x128xbf16>
    %cst_21 = arith.constant dense<0.000000e+00> : vector<128x128xf32>
    %31 = tpu.matmul %29, %30, %cst_21 {dimension_numbers = #tpu.dot_dimension_numbers<[1], [0], [0], [1], [0, 0, 1, 1], [], []>} : vector<128x256xbf16>, vector<256x128xbf16>, vector<128x128xf32> -> vector<128x128xf32>
    %c0_22 = arith.constant 0 : index
    %c0_23 = arith.constant 0 : index
    %32 = vector.load %arg10[%c0_22, %c0_23] : memref<1x128xf32, #tpu.memory_space<vmem>>, vector<1x128xf32>
    %33 = vector.broadcast %32 : vector<1x128xf32> to vector<128x128xf32>
    %34 = arith.addf %31, %33 : vector<128x128xf32>
    %c0_24 = arith.constant 0 : index
    %c0_25 = arith.constant 0 : index
    %35 = vector.load %arg21[%c0_24, %c0_25] : memref<128x128xf32, #tpu.memory_space<vmem>>, vector<128x128xf32>
    tpu.vector_store %arg21[%c0_24, %c0_25], %34 {strides = array<i32>} : memref<128x128xf32, #tpu.memory_space<vmem>>, vector<128x128xf32>,
    %36 = vector.extract_strided_slice %27 {offsets = [0, 256], sizes = [128, 256], strides = [1, 1]} : vector<128x512xf32> to vector<128x256xf32>
    %37 = arith.truncf %36 : vector<128x256xf32> to vector<128x256xbf16>
    %c0_26 = arith.constant 0 : index
    %c0_27 = arith.constant 0 : index
    %38 = vector.load %arg11[%c0_26, %c0_27] : memref<256x128xbf16, #tpu.memory_space<vmem>>, vector<256x128xbf16>
    %cst_28 = arith.constant dense<0.000000e+00> : vector<128x128xf32>
    %39 = tpu.matmul %37, %38, %cst_28 {dimension_numbers = #tpu.dot_dimension_numbers<[1], [0], [0], [1], [0, 0, 1, 1], [], []>} : vector<128x256xbf16>, vector<256x128xbf16>, vector<128x128xf32> -> vector<128x128xf32>
    %c0_29 = arith.constant 0 : index
    %c0_30 = arith.constant 0 : index
    %40 = vector.load %arg12[%c0_29, %c0_30] : memref<1x128xf32, #tpu.memory_space<vmem>>, vector<1x128xf32>
    %41 = vector.broadcast %40 : vector<1x128xf32> to vector<128x128xf32>
    %42 = arith.addf %39, %41 : vector<128x128xf32>
    %c0_31 = arith.constant 0 : index
    %c0_32 = arith.constant 0 : index
    %43 = vector.load %arg22[%c0_31, %c0_32] : memref<128x128xf32, #tpu.memory_space<vmem>>, vector<128x128xf32>
    tpu.vector_store %arg22[%c0_31, %c0_32], %42 {strides = array<i32>} : memref<128x128xf32, #tpu.memory_space<vmem>>, vector<128x128xf32>,
    %cst_33 = arith.constant 5.000000e-01 : f32
    %44 = vector.broadcast %cst_33 : f32 to vector<128x128xf32>
    %45 = arith.mulf %44, %42 : vector<128x128xf32>
    %46 = math.exp %45 : vector<128x128xf32>
    %c0_34 = arith.constant 0 : index
    %c0_35 = arith.constant 0 : index
    %47 = vector.load %arg2[%c0_34, %c0_35] : memref<128x128xf32, #tpu.memory_space<vmem>>, vector<128x128xf32>
    %48 = arith.mulf %46, %47 : vector<128x128xf32>
    %49 = arith.addf %34, %48 : vector<128x128xf32>
    %50 = arith.truncf %49 : vector<128x128xf32> to vector<128x128xbf16>
    %c0_36 = arith.constant 0 : index
    %c0_37 = arith.constant 0 : index
    %51 = vector.load %arg13[%c0_36, %c0_37] : memref<128x256xbf16, #tpu.memory_space<vmem>>, vector<128x256xbf16>
    %cst_38 = arith.constant dense<0.000000e+00> : vector<128x256xf32>
    %52 = tpu.matmul %50, %51, %cst_38 {dimension_numbers = #tpu.dot_dimension_numbers<[1], [0], [0], [1], [0, 0, 1, 1], [], []>} : vector<128x128xbf16>, vector<128x256xbf16>, vector<128x256xf32> -> vector<128x256xf32>
    %c0_39 = arith.constant 0 : index
    %c0_40 = arith.constant 0 : index
    %53 = vector.load %arg14[%c0_39, %c0_40] : memref<1x256xf32, #tpu.memory_space<vmem>>, vector<1x256xf32>
    %54 = vector.broadcast %53 : vector<1x256xf32> to vector<128x256xf32>
    %55 = arith.addf %52, %54 : vector<128x256xf32>
    %cst_41 = arith.constant 0.000000e+00 : f32
    %56 = vector.broadcast %cst_41 : f32 to vector<128x256xf32>
    %57 = arith.maximumf %55, %56 : vector<128x256xf32>
    %58 = arith.truncf %57 : vector<128x256xf32> to vector<128x256xbf16>
    %c0_42 = arith.constant 0 : index
    %c0_43 = arith.constant 0 : index
    %59 = vector.load %arg15[%c0_42, %c0_43] : memref<256x256xbf16, #tpu.memory_space<vmem>>, vector<256x256xbf16>
    %cst_44 = arith.constant dense<0.000000e+00> : vector<128x256xf32>
    %60 = tpu.matmul %58, %59, %cst_44 {dimension_numbers = #tpu.dot_dimension_numbers<[1], [0], [0], [1], [0, 0, 1, 1], [], []>} : vector<128x256xbf16>, vector<256x256xbf16>, vector<128x256xf32> -> vector<128x256xf32>
    %c0_45 = arith.constant 0 : index
    %c0_46 = arith.constant 0 : index
    %61 = vector.load %arg16[%c0_45, %c0_46] : memref<1x256xf32, #tpu.memory_space<vmem>>, vector<1x256xf32>
    %62 = vector.broadcast %61 : vector<1x256xf32> to vector<128x256xf32>
    %63 = arith.addf %60, %62 : vector<128x256xf32>
    %cst_47 = arith.constant 0.000000e+00 : f32
    %64 = vector.broadcast %cst_47 : f32 to vector<128x256xf32>
    %65 = arith.maximumf %63, %64 : vector<128x256xf32>
    %66 = arith.truncf %65 : vector<128x256xf32> to vector<128x256xbf16>
    %c0_48 = arith.constant 0 : index
    %c0_49 = arith.constant 0 : index
    %67 = vector.load %arg17[%c0_48, %c0_49] : memref<256x256xbf16, #tpu.memory_space<vmem>>, vector<256x256xbf16>
    %cst_50 = arith.constant dense<0.000000e+00> : vector<128x256xf32>
    %68 = tpu.matmul %66, %67, %cst_50 {dimension_numbers = #tpu.dot_dimension_numbers<[1], [0], [0], [1], [0, 0, 1, 1], [], []>} : vector<128x256xbf16>, vector<256x256xbf16>, vector<128x256xf32> -> vector<128x256xf32>
    %c0_51 = arith.constant 0 : index
    %c0_52 = arith.constant 0 : index
    %69 = vector.load %arg18[%c0_51, %c0_52] : memref<1x256xf32, #tpu.memory_space<vmem>>, vector<1x256xf32>
    %70 = vector.broadcast %69 : vector<1x256xf32> to vector<128x256xf32>
    %71 = arith.addf %68, %70 : vector<128x256xf32>
    %cst_53 = arith.constant 0.000000e+00 : f32
    %72 = vector.broadcast %cst_53 : f32 to vector<128x256xf32>
    %73 = arith.cmpf ogt, %71, %72 : vector<128x256xf32>
    %cst_54 = arith.constant 0.00999999977 : f32
    %74 = vector.broadcast %cst_54 : f32 to vector<128x256xf32>
    %75 = arith.mulf %74, %71 : vector<128x256xf32>
    %76 = arith.select %73, %71, %75 : vector<128x256xi1>, vector<128x256xf32>
    %77 = arith.truncf %76 : vector<128x256xf32> to vector<128x256xbf16>
    %c0_55 = arith.constant 0 : index
    %c0_56 = arith.constant 0 : index
    %78 = vector.load %arg19[%c0_55, %c0_56] : memref<256x256xbf16, #tpu.memory_space<vmem>>, vector<256x256xbf16>
    %cst_57 = arith.constant dense<0.000000e+00> : vector<128x256xf32>
    %79 = tpu.matmul %77, %78, %cst_57 {dimension_numbers = #tpu.dot_dimension_numbers<[1], [0], [0], [1], [0, 0, 1, 1], [], []>} : vector<128x256xbf16>, vector<256x256xbf16>, vector<128x256xf32> -> vector<128x256xf32>
    %c0_58 = arith.constant 0 : index
    %c0_59 = arith.constant 0 : index
    %80 = vector.load %arg20[%c0_58, %c0_59] : memref<1x256xf32, #tpu.memory_space<vmem>>, vector<1x256xf32>
    %81 = vector.broadcast %80 : vector<1x256xf32> to vector<128x256xf32>
    %82 = arith.addf %79, %81 : vector<128x256xf32>
    %c0_60 = arith.constant 0 : index
    %c0_61 = arith.constant 0 : index
    %83 = vector.load %arg23[%c0_60, %c0_61] : memref<128x256xf32, #tpu.memory_space<vmem>>, vector<128x256xf32>
    tpu.vector_store %arg23[%c0_60, %c0_61], %82 {strides = array<i32>} : memref<128x256xf32, #tpu.memory_space<vmem>>, vector<128x256xf32>,
    return
  }
  func.func @transform_0(%arg0: i32) -> (i32, i32) {
    %c0_i32 = arith.constant 0 : i32
    %c0_i32_0 = arith.constant 0 : i32
    return %arg0, %c0_i32 : i32, i32
  }
  func.func @transform_1(%arg0: i32) -> (i32, i32) {
    %c0_i32 = arith.constant 0 : i32
    %c0_i32_0 = arith.constant 0 : i32
    return %arg0, %c0_i32 : i32, i32
  }
  func.func @transform_2(%arg0: i32) -> (i32, i32) {
    %c0_i32 = arith.constant 0 : i32
    %c0_i32_0 = arith.constant 0 : i32
    %c0_i32_1 = arith.constant 0 : i32
    return %c0_i32, %c0_i32_0 : i32, i32
  }
  func.func @transform_3(%arg0: i32) -> (i32, i32) {
    %c0_i32 = arith.constant 0 : i32
    %c0_i32_0 = arith.constant 0 : i32
    %c0_i32_1 = arith.constant 0 : i32
    return %c0_i32, %c0_i32_0 : i32, i32
  }
  func.func @transform_4(%arg0: i32) -> (i32, i32) {
    %c0_i32 = arith.constant 0 : i32
    %c0_i32_0 = arith.constant 0 : i32
    %c0_i32_1 = arith.constant 0 : i32
    return %c0_i32, %c0_i32_0 : i32, i32
  }
  func.func @transform_5(%arg0: i32) -> (i32, i32) {
    %c0_i32 = arith.constant 0 : i32
    %c0_i32_0 = arith.constant 0 : i32
    %c0_i32_1 = arith.constant 0 : i32
    return %c0_i32, %c0_i32_0 : i32, i32
  }
  func.func @transform_6(%arg0: i32) -> (i32, i32) {
    %c0_i32 = arith.constant 0 : i32
    %c0_i32_0 = arith.constant 0 : i32
    %c0_i32_1 = arith.constant 0 : i32
    return %c0_i32, %c0_i32_0 : i32, i32
  }
  func.func @transform_7(%arg0: i32) -> (i32, i32) {
    %c0_i32 = arith.constant 0 : i32
    %c0_i32_0 = arith.constant 0 : i32
    %c0_i32_1 = arith.constant 0 : i32
    return %c0_i32, %c0_i32_0 : i32, i32
  }
  func.func @transform_8(%arg0: i32) -> (i32, i32) {
    %c0_i32 = arith.constant 0 : i32
    %c0_i32_0 = arith.constant 0 : i32
    %c0_i32_1 = arith.constant 0 : i32
    return %c0_i32, %c0_i32_0 : i32, i32
  }
  func.func @transform_9(%arg0: i32) -> (i32, i32) {
    %c0_i32 = arith.constant 0 : i32
    %c0_i32_0 = arith.constant 0 : i32
    %c0_i32_1 = arith.constant 0 : i32
    return %c0_i32, %c0_i32_0 : i32, i32
  }
  func.func @transform_10(%arg0: i32) -> (i32, i32) {
    %c0_i32 = arith.constant 0 : i32
    %c0_i32_0 = arith.constant 0 : i32
    %c0_i32_1 = arith.constant 0 : i32
    return %c0_i32, %c0_i32_0 : i32, i32
  }
  func.func @transform_11(%arg0: i32) -> (i32, i32) {
    %c0_i32 = arith.constant 0 : i32
    %c0_i32_0 = arith.constant 0 : i32
    %c0_i32_1 = arith.constant 0 : i32
    return %c0_i32, %c0_i32_0 : i32, i32
  }
  func.func @transform_12(%arg0: i32) -> (i32, i32) {
    %c0_i32 = arith.constant 0 : i32
    %c0_i32_0 = arith.constant 0 : i32
    %c0_i32_1 = arith.constant 0 : i32
    return %c0_i32, %c0_i32_0 : i32, i32
  }
  func.func @transform_13(%arg0: i32) -> (i32, i32) {
    %c0_i32 = arith.constant 0 : i32
    %c0_i32_0 = arith.constant 0 : i32
    %c0_i32_1 = arith.constant 0 : i32
    return %c0_i32, %c0_i32_0 : i32, i32
  }
  func.func @transform_14(%arg0: i32) -> (i32, i32) {
    %c0_i32 = arith.constant 0 : i32
    %c0_i32_0 = arith.constant 0 : i32
    %c0_i32_1 = arith.constant 0 : i32
    return %c0_i32, %c0_i32_0 : i32, i32
  }
  func.func @transform_15(%arg0: i32) -> (i32, i32) {
    %c0_i32 = arith.constant 0 : i32
    %c0_i32_0 = arith.constant 0 : i32
    %c0_i32_1 = arith.constant 0 : i32
    return %c0_i32, %c0_i32_0 : i32, i32
  }
  func.func @transform_16(%arg0: i32) -> (i32, i32) {
    %c0_i32 = arith.constant 0 : i32
    %c0_i32_0 = arith.constant 0 : i32
    %c0_i32_1 = arith.constant 0 : i32
    return %c0_i32, %c0_i32_0 : i32, i32
  }
  func.func @transform_17(%arg0: i32) -> (i32, i32) {
    %c0_i32 = arith.constant 0 : i32
    %c0_i32_0 = arith.constant 0 : i32
    %c0_i32_1 = arith.constant 0 : i32
    return %c0_i32, %c0_i32_0 : i32, i32
  }
  func.func @transform_18(%arg0: i32) -> (i32, i32) {
    %c0_i32 = arith.constant 0 : i32
    %c0_i32_0 = arith.constant 0 : i32
    %c0_i32_1 = arith.constant 0 : i32
    return %c0_i32, %c0_i32_0 : i32, i32
  }
  func.func @transform_19(%arg0: i32) -> (i32, i32) {
    %c0_i32 = arith.constant 0 : i32
    %c0_i32_0 = arith.constant 0 : i32
    %c0_i32_1 = arith.constant 0 : i32
    return %c0_i32, %c0_i32_0 : i32, i32
  }
  func.func @transform_20(%arg0: i32) -> (i32, i32) {
    %c0_i32 = arith.constant 0 : i32
    %c0_i32_0 = arith.constant 0 : i32
    return %arg0, %c0_i32 : i32, i32
  }
  func.func @transform_21(%arg0: i32) -> (i32, i32) {
    %c0_i32 = arith.constant 0 : i32
    %c0_i32_0 = arith.constant 0 : i32
    return %arg0, %c0_i32 : i32, i32
  }
  func.func @transform_22(%arg0: i32) -> (i32, i32) {
    %c0_i32 = arith.constant 0 : i32
    %c0_i32_0 = arith.constant 0 : i32
    return %arg0, %c0_i32 : i32, i32
  }
}

</mosaic_0001>

<llo_original>
// kernel: sigma_vae_forward.1
$region0: #{sigma_vae_forward.1}
  #allocation0 [shape = 'u32[]', space=smem, size = 0x4, offset = 0x4, fixed_abs, tag = 'smem constant byte address 0x4 - core index']
  #allocation1 [shape = 'u32[144,128]{1,0:T(1,128)}', space=vmem, size = 0x12000, scoped, tag = 'internal scratch']
  %s0 = inlined_call_operand.vmem [shape: f32[200,256], index: 0, kind: input, shape index: {}]
  %s1 = inlined_call_operand.vmem [shape: f32[200,128], index: 1, kind: input, shape index: {}]
  %s2 = inlined_call_operand.hbm [shape: bf16[256,256], index: 2, kind: input, shape index: {}]
  %s3 = inlined_call_operand.vmem [shape: f32[1,256], index: 3, kind: input, shape index: {}]
  %s4 = inlined_call_operand.hbm [shape: bf16[256,256], index: 4, kind: input, shape index: {}]
  %s5 = inlined_call_operand.vmem [shape: f32[1,256], index: 5, kind: input, shape index: {}]
  %s6 = inlined_call_operand.vmem [shape: bf16[256,512], index: 6, kind: input, shape index: {}]
  %s7 = inlined_call_operand.vmem [shape: f32[1,512], index: 7, kind: input, shape index: {}]
  %s8 = inlined_call_operand.vmem [shape: bf16[256,128], index: 8, kind: input, shape index: {}]
  %s9 = inlined_call_operand.vmem [shape: f32[1,128], index: 9, kind: input, shape index: {}]
  %s10 = inlined_call_operand.hbm [shape: bf16[256,128], index: 10, kind: input, shape index: {}]
  %s11 = inlined_call_operand.vmem [shape: f32[1,128], index: 11, kind: input, shape index: {}]
  %s12 = inlined_call_operand.hbm [shape: bf16[128,256], index: 12, kind: input, shape index: {}]
  %s13 = inlined_call_operand.vmem [shape: f32[1,256], index: 13, kind: input, shape index: {}]
  %s14 = inlined_call_operand.hbm [shape: bf16[256,256], index: 14, kind: input, shape index: {}]
  %s15 = inlined_call_operand.vmem [shape: f32[1,256], index: 15, kind: input, shape index: {}]
  %s16 = inlined_call_operand.hbm [shape: bf16[256,256], index: 16, kind: input, shape index: {}]
  %s17 = inlined_call_operand.vmem [shape: f32[1,256], index: 17, kind: input, shape index: {}]
  %s18 = inlined_call_operand.hbm [shape: bf16[256,256], index: 18, kind: input, shape index: {}]
  %s19 = inlined_call_operand.vmem [shape: f32[1,256], index: 19, kind: input, shape index: {}]
  %s20 = inlined_call_operand.vmem [shape: f32[200,128], index: 20, kind: output, shape index: {0}]
  %s21 = inlined_call_operand.vmem [shape: f32[200,128], index: 21, kind: output, shape index: {1}]
  %s22 = inlined_call_operand.hbm [shape: f32[200,256], index: 22, kind: output, shape index: {2}]
  %23 = xla_tuple %s20, %s21, %s22
  %s24 = sld [smem:[#allocation0]]
  $region253: #{sigma_vae_forward.1} parent=0
    _
  %s26 = ssub.s32 1, %s24
  %s27 = scalar_select 0, %s26, %s24
  $region1: #{sigma_vae_forward.1} parent=0
    #allocation2 [shape = 'u8[131072]{0}', space=vmem, size = 0x20000, scoped, tag = 'input window, operand 2, single buffered']
    #allocation3 [shape = 's32[2]{0}', space=sflag, size = 0x8, scoped, tag = 'scoped memory for sigma_vae_forward.1']
    #allocation4 [shape = 's32[2]{0}', space=sflag, size = 0x8, scoped, tag = 'scoped memory for sigma_vae_forward.1']
    #allocation5 [shape = 'u8[131072]{0}', space=vmem, size = 0x20000, scoped, tag = 'input window, operand 4, single buffered']
    #allocation6 [shape = 's32[1]{0}', space=sflag, size = 0x4, scoped, tag = 'scoped memory for sigma_vae_forward.1']
    #allocation7 [shape = 'u8[65536]{0}', space=vmem, size = 0x10000, scoped, tag = 'input window, operand 10, single buffered']
    #allocation8 [shape = 'u8[65536]{0}', space=vmem, size = 0x10000, scoped, tag = 'input window, operand 12, single buffered']
    #allocation9 [shape = 's32[1]{0}', space=sflag, size = 0x4, scoped, tag = 'scoped memory for sigma_vae_forward.1']
    #allocation10 [shape = 'u8[131072]{0}', space=vmem, size = 0x20000, scoped, tag = 'input window, operand 14, single buffered']
    #allocation11 [shape = 'u8[131072]{0}', space=vmem, size = 0x20000, scoped, tag = 'input window, operand 16, single buffered']
    #allocation12 [shape = 's32[1]{0}', space=sflag, size = 0x4, scoped, tag = 'scoped memory for sigma_vae_forward.1']
    #allocation13 [shape = 'u8[131072]{0}', space=vmem, size = 0x20000, scoped, tag = 'input window, operand 18, single buffered']
    #allocation14 [shape = 'u8[131072]{0}', space=vmem, size = 0x20000, scoped, tag = 'output window, operand 0']
    #allocation15 [shape = 'u8[131072]{0}', space=vmem, size = 0x20000, scoped, tag = 'output window, operand 1']
    #allocation16 [shape = 'u8[262144]{0}', space=vmem, size = 0x40000, scoped, tag = 'output window, operand 2']
    %28 = vsyncpa [#allocation3], 0
    %29 = vsyncpa [#allocation6], 0
    %30 = vsyncpa [#allocation9], 0
    %31 = vsyncpa [#allocation12], 0
    %32 = vsyncpa [#allocation4], 0
    %s33 = scalar_lea.sflag [#allocation4], 1
    %34 = vsyncpa %s33, 0
    loop: start=0, step=1, limit=4
    $region2: #{sigma_vae_forward.1} parent=1 // loop_pre_header
      _
    $region3: #{sigma_vae_forward.1} parent=1 // loop_header
      %s36 = sphi 0, %s40
      %p37 = scmp.ge.s32.totalorder %s36, 4
      %s46 = sphi 0, %s48
      %s49 = sphi 0, %s46
      %s50 = sphi 0, %s49
      %s66 = sphi 0, %s50
      %s72 = sphi 0, %s74
      %s75 = sphi 0, %s72
      %s76 = sphi 0, %s75
      %s92 = sphi 0, %s76
      %s96 = sphi 0, %s96
      %s98 = sphi 0, %s96
      %s99 = sphi 0, %s98
      %s113 = sphi 0, %s99
      %s117 = sphi 0, %s117
      %s119 = sphi 0, %s117
      %s120 = sphi 0, %s119
      %s134 = sphi 0, %s120
      %s138 = sphi 0, %s138
      %s140 = sphi 0, %s138
      %s141 = sphi 0, %s140
      %s155 = sphi 0, %s141
      %s159 = sphi 0, %s159
      %s161 = sphi 0, %s159
      %s162 = sphi 0, %s161
      %s176 = sphi 0, %s162
      %s180 = sphi 0, %s180
      %s182 = sphi 0, %s180
      %s183 = sphi 0, %s182
      %s197 = sphi 0, %s183
      %s201 = sphi 0, %s201
      %s203 = sphi 0, %s201
      %s204 = sphi 0, %s203
      %s218 = sphi 0, %s204
      %s222 = sphi 0, %s222
      %s224 = sphi 0, %s222
      %s225 = sphi 0, %s224
      %s239 = sphi 0, %s225
      %s243 = sphi 0, %s243
      %s245 = sphi 0, %s243
      %s246 = sphi 0, %s245
      %s260 = sphi 0, %s246
      %s264 = sphi 0, %s264
      %s266 = sphi 0, %s264
      %s267 = sphi 0, %s266
      %s281 = sphi 0, %s267
      %s285 = sphi 0, %s285
      %s287 = sphi 0, %s285
      %s288 = sphi 0, %s287
      %s302 = sphi 0, %s288
      %s306 = sphi 0, %s306
      %s308 = sphi 0, %s306
      %s309 = sphi 0, %s308
      %s323 = sphi 0, %s309
      %s327 = sphi 0, %s327
      %s329 = sphi 0, %s327
      %s330 = sphi 0, %s329
      %s344 = sphi 0, %s330
      %s348 = sphi 0, %s348
      %s350 = sphi 0, %s348
      %s351 = sphi 0, %s350
      %s365 = sphi 0, %s351
      %s369 = sphi 0, %s369
      %s371 = sphi 0, %s369
      %s372 = sphi 0, %s371
      %s386 = sphi 0, %s372
      %s390 = sphi 0, %s390
      %s392 = sphi 0, %s390
      %s393 = sphi 0, %s392
      %s407 = sphi 0, %s393
      %s411 = sphi 0, %s411
      %s413 = sphi 0, %s411
      %s414 = sphi 0, %s413
      %s428 = sphi 0, %s414
      %s432 = sphi 0, %s432
      %s434 = sphi 0, %s432
      %s435 = sphi 0, %s434
      %s449 = sphi 0, %s435
      %s453 = sphi 0, %s453
      %s455 = sphi 0, %s453
      %s456 = sphi 0, %s455
      %s470 = sphi 0, %s456
      %s476 = sphi 0, %s478
      %s479 = sphi 0, %s476
      %s480 = sphi 0, %s479
      %s496 = sphi 0, %s480
      %s502 = sphi 0, %s504
      %s505 = sphi 0, %s502
      %s506 = sphi 0, %s505
      %s522 = sphi 0, %s506
      %s528 = sphi 0, %s530
      %s531 = sphi 0, %s528
      %s532 = sphi 0, %s531
      %s548 = sphi 0, %s532
    $region4: #{sigma_vae_forward.1} parent=1 // loop_header_branch
      %39 = sbr.rel (%p37) target = $region8
    $region5: #{sigma_vae_forward.1} parent=1 // loop_body
      %s41 = ssub.s32 %s36, 1
      %s42 = ssub.s32 %s36, 2
      %s43 = sadd.s32 %s36, 1
      %s44 = ssub.s32 %s36, %s43
      %p45 = scmp.eq.s32.totalorder %s44, 0
      %s47 = sadd.s32 %s46, 1
      %s48 = scalar_select %p45, %s46, %s47
      %p51 = pneg %p45
      %p52 = scmp.eq.s32.totalorder %s36, 1
      %p53 = por %p51, %p52
      %p54 = scmp.ne.s32.totalorder %s46, %s49
      %p55 = scmp.eq.s32.totalorder %s36, 0
      %p56 = por %p54, %p55
      %p57 = scmp.ne.s32.totalorder %s46, %s49
      %p58 = scmp.eq.s32.totalorder %s41, 1
      %p59 = por %p57, %p58
      %p60 = scmp.ne.s32.totalorder %s49, %s50
      %p61 = scmp.eq.s32.totalorder %s41, 0
      %p62 = por %p60, %p61
      %p63 = scmp.ne.s32.totalorder %s49, %s50
      %p64 = scmp.eq.s32.totalorder %s42, 1
      %p65 = por %p63, %p64
      %p67 = scmp.ne.s32.totalorder %s50, %s66
      %p68 = scmp.eq.s32.totalorder %s42, 0
      %p69 = por %p67, %p68
      %s70 = ssub.s32 %s36, %s43
      %p71 = scmp.eq.s32.totalorder %s70, 0
      %s73 = sadd.s32 %s72, 1
      %s74 = scalar_select %p71, %s72, %s73
      %p77 = pneg %p71
      %p78 = scmp.eq.s32.totalorder %s36, 1
      %p79 = por %p77, %p78
      %p80 = scmp.ne.s32.totalorder %s72, %s75
      %p81 = scmp.eq.s32.totalorder %s36, 0
      %p82 = por %p80, %p81
      %p83 = scmp.ne.s32.totalorder %s72, %s75
      %p84 = scmp.eq.s32.totalorder %s41, 1
      %p85 = por %p83, %p84
      %p86 = scmp.ne.s32.totalorder %s75, %s76
      %p87 = scmp.eq.s32.totalorder %s41, 0
      %p88 = por %p86, %p87
      %p89 = scmp.ne.s32.totalorder %s75, %s76
      %p90 = scmp.eq.s32.totalorder %s42, 1
      %p91 = por %p89, %p90
      %p93 = scmp.ne.s32.totalorder %s76, %s92
      %p94 = scmp.eq.s32.totalorder %s42, 0
      %p95 = por %p93, %p94
      %s97 = sadd.s32 %s96, 1
      %p100 = scmp.eq.s32.totalorder %s36, 1
      %p101 = scmp.ne.s32.totalorder %s96, %s98
      %p102 = scmp.eq.s32.totalorder %s36, 0
      %p103 = por %p101, %p102
      %p104 = scmp.ne.s32.totalorder %s96, %s98
      %p105 = scmp.eq.s32.totalorder %s41, 1
      %p106 = por %p104, %p105
      %p107 = scmp.ne.s32.totalorder %s98, %s99
      %p108 = scmp.eq.s32.totalorder %s41, 0
      %p109 = por %p107, %p108
      %p110 = scmp.ne.s32.totalorder %s98, %s99
      %p111 = scmp.eq.s32.totalorder %s42, 1
      %p112 = por %p110, %p111
      %p114 = scmp.ne.s32.totalorder %s99, %s113
      %p115 = scmp.eq.s32.totalorder %s42, 0
      %p116 = por %p114, %p115
      %s118 = sadd.s32 %s117, 1
      %p121 = scmp.eq.s32.totalorder %s36, 1
      %p122 = scmp.ne.s32.totalorder %s117, %s119
      %p123 = scmp.eq.s32.totalorder %s36, 0
      %p124 = por %p122, %p123
      %p125 = scmp.ne.s32.totalorder %s117, %s119
      %p126 = scmp.eq.s32.totalorder %s41, 1
      %p127 = por %p125, %p126
      %p128 = scmp.ne.s32.totalorder %s119, %s120
      %p129 = scmp.eq.s32.totalorder %s41, 0
      %p130 = por %p128, %p129
      %p131 = scmp.ne.s32.totalorder %s119, %s120
      %p132 = scmp.eq.s32.totalorder %s42, 1
      %p133 = por %p131, %p132
      %p135 = scmp.ne.s32.totalorder %s120, %s134
      %p136 = scmp.eq.s32.totalorder %s42, 0
      %p137 = por %p135, %p136
      %s139 = sadd.s32 %s138, 1
      %p142 = scmp.eq.s32.totalorder %s36, 1
      %p143 = scmp.ne.s32.totalorder %s138, %s140
      %p144 = scmp.eq.s32.totalorder %s36, 0
      %p145 = por %p143, %p144
      %p146 = scmp.ne.s32.totalorder %s138, %s140
      %p147 = scmp.eq.s32.totalorder %s41, 1
      %p148 = por %p146, %p147
      %p149 = scmp.ne.s32.totalorder %s140, %s141
      %p150 = scmp.eq.s32.totalorder %s41, 0
      %p151 = por %p149, %p150
      %p152 = scmp.ne.s32.totalorder %s140, %s141
      %p153 = scmp.eq.s32.totalorder %s42, 1
      %p154 = por %p152, %p153
      %p156 = scmp.ne.s32.totalorder %s141, %s155
      %p157 = scmp.eq.s32.totalorder %s42, 0
      %p158 = por %p156, %p157
      %s160 = sadd.s32 %s159, 1
      %p163 = scmp.eq.s32.totalorder %s36, 1
      %p164 = scmp.ne.s32.totalorder %s159, %s161
      %p165 = scmp.eq.s32.totalorder %s36, 0
      %p166 = por %p164, %p165
      %p167 = scmp.ne.s32.totalorder %s159, %s161
      %p168 = scmp.eq.s32.totalorder %s41, 1
      %p169 = por %p167, %p168
      %p170 = scmp.ne.s32.totalorder %s161, %s162
      %p171 = scmp.eq.s32.totalorder %s41, 0
      %p172 = por %p170, %p171
      %p173 = scmp.ne.s32.totalorder %s161, %s162
      %p174 = scmp.eq.s32.totalorder %s42, 1
      %p175 = por %p173, %p174
      %p177 = scmp.ne.s32.totalorder %s162, %s176
      %p178 = scmp.eq.s32.totalorder %s42, 0
      %p179 = por %p177, %p178
      %s181 = sadd.s32 %s180, 1
      %p184 = scmp.eq.s32.totalorder %s36, 1
      %p185 = scmp.ne.s32.totalorder %s180, %s182
      %p186 = scmp.eq.s32.totalorder %s36, 0
      %p187 = por %p185, %p186
      %p188 = scmp.ne.s32.totalorder %s180, %s182
      %p189 = scmp.eq.s32.totalorder %s41, 1
      %p190 = por %p188, %p189
      %p191 = scmp.ne.s32.totalorder %s182, %s183
      %p192 = scmp.eq.s32.totalorder %s41, 0
      %p193 = por %p191, %p192
      %p194 = scmp.ne.s32.totalorder %s182, %s183
      %p195 = scmp.eq.s32.totalorder %s42, 1
      %p196 = por %p194, %p195
      %p198 = scmp.ne.s32.totalorder %s183, %s197
      %p199 = scmp.eq.s32.totalorder %s42, 0
      %p200 = por %p198, %p199
      %s202 = sadd.s32 %s201, 1
      %p205 = scmp.eq.s32.totalorder %s36, 1
      %p206 = scmp.ne.s32.totalorder %s201, %s203
      %p207 = scmp.eq.s32.totalorder %s36, 0
      %p208 = por %p206, %p207
      %p209 = scmp.ne.s32.totalorder %s201, %s203
      %p210 = scmp.eq.s32.totalorder %s41, 1
      %p211 = por %p209, %p210
      %p212 = scmp.ne.s32.totalorder %s203, %s204
      %p213 = scmp.eq.s32.totalorder %s41, 0
      %p214 = por %p212, %p213
      %p215 = scmp.ne.s32.totalorder %s203, %s204
      %p216 = scmp.eq.s32.totalorder %s42, 1
      %p217 = por %p215, %p216
      %p219 = scmp.ne.s32.totalorder %s204, %s218
      %p220 = scmp.eq.s32.totalorder %s42, 0
      %p221 = por %p219, %p220
      %s223 = sadd.s32 %s222, 1
      %p226 = scmp.eq.s32.totalorder %s36, 1
      %p227 = scmp.ne.s32.totalorder %s222, %s224
      %p228 = scmp.eq.s32.totalorder %s36, 0
      %p229 = por %p227, %p228
      %p230 = scmp.ne.s32.totalorder %s222, %s224
      %p231 = scmp.eq.s32.totalorder %s41, 1
      %p232 = por %p230, %p231
      %p233 = scmp.ne.s32.totalorder %s224, %s225
      %p234 = scmp.eq.s32.totalorder %s41, 0
      %p235 = por %p233, %p234
      %p236 = scmp.ne.s32.totalorder %s224, %s225
      %p237 = scmp.eq.s32.totalorder %s42, 1
      %p238 = por %p236, %p237
      %p240 = scmp.ne.s32.totalorder %s225, %s239
      %p241 = scmp.eq.s32.totalorder %s42, 0
      %p242 = por %p240, %p241
      %s244 = sadd.s32 %s243, 1
      %p247 = scmp.eq.s32.totalorder %s36, 1
      %p248 = scmp.ne.s32.totalorder %s243, %s245
      %p249 = scmp.eq.s32.totalorder %s36, 0
      %p250 = por %p248, %p249
      %p251 = scmp.ne.s32.totalorder %s243, %s245
      %p252 = scmp.eq.s32.totalorder %s41, 1
      %p253 = por %p251, %p252
      %p254 = scmp.ne.s32.totalorder %s245, %s246
      %p255 = scmp.eq.s32.totalorder %s41, 0
      %p256 = por %p254, %p255
      %p257 = scmp.ne.s32.totalorder %s245, %s246
      %p258 = scmp.eq.s32.totalorder %s42, 1
      %p259 = por %p257, %p258
      %p261 = scmp.ne.s32.totalorder %s246, %s260
      %p262 = scmp.eq.s32.totalorder %s42, 0
      %p263 = por %p261, %p262
      %s265 = sadd.s32 %s264, 1
      %p268 = scmp.eq.s32.totalorder %s36, 1
      %p269 = scmp.ne.s32.totalorder %s264, %s266
      %p270 = scmp.eq.s32.totalorder %s36, 0
      %p271 = por %p269, %p270
      %p272 = scmp.ne.s32.totalorder %s264, %s266
      %p273 = scmp.eq.s32.totalorder %s41, 1
      %p274 = por %p272, %p273
      %p275 = scmp.ne.s32.totalorder %s266, %s267
      %p276 = scmp.eq.s32.totalorder %s41, 0
      %p277 = por %p275, %p276
      %p278 = scmp.ne.s32.totalorder %s266, %s267
      %p279 = scmp.eq.s32.totalorder %s42, 1
      %p280 = por %p278, %p279
      %p282 = scmp.ne.s32.totalorder %s267, %s281
      %p283 = scmp.eq.s32.totalorder %s42, 0
      %p284 = por %p282, %p283
      %s286 = sadd.s32 %s285, 1
      %p289 = scmp.eq.s32.totalorder %s36, 1
      %p290 = scmp.ne.s32.totalorder %s285, %s287
      %p291 = scmp.eq.s32.totalorder %s36, 0
      %p292 = por %p290, %p291
      %p293 = scmp.ne.s32.totalorder %s285, %s287
      %p294 = scmp.eq.s32.totalorder %s41, 1
      %p295 = por %p293, %p294
      %p296 = scmp.ne.s32.totalorder %s287, %s288
      %p297 = scmp.eq.s32.totalorder %s41, 0
      %p298 = por %p296, %p297
      %p299 = scmp.ne.s32.totalorder %s287, %s288
      %p300 = scmp.eq.s32.totalorder %s42, 1
      %p301 = por %p299, %p300
      %p303 = scmp.ne.s32.totalorder %s288, %s302
      %p304 = scmp.eq.s32.totalorder %s42, 0
      %p305 = por %p303, %p304
      %s307 = sadd.s32 %s306, 1
      %p310 = scmp.eq.s32.totalorder %s36, 1
      %p311 = scmp.ne.s32.totalorder %s306, %s308
      %p312 = scmp.eq.s32.totalorder %s36, 0
      %p313 = por %p311, %p312
      %p314 = scmp.ne.s32.totalorder %s306, %s308
      %p315 = scmp.eq.s32.totalorder %s41, 1
      %p316 = por %p314, %p315
      %p317 = scmp.ne.s32.totalorder %s308, %s309
      %p318 = scmp.eq.s32.totalorder %s41, 0
      %p319 = por %p317, %p318
      %p320 = scmp.ne.s32.totalorder %s308, %s309
      %p321 = scmp.eq.s32.totalorder %s42, 1
      %p322 = por %p320, %p321
      %p324 = scmp.ne.s32.totalorder %s309, %s323
      %p325 = scmp.eq.s32.totalorder %s42, 0
      %p326 = por %p324, %p325
      %s328 = sadd.s32 %s327, 1
      %p331 = scmp.eq.s32.totalorder %s36, 1
      %p332 = scmp.ne.s32.totalorder %s327, %s329
      %p333 = scmp.eq.s32.totalorder %s36, 0
      %p334 = por %p332, %p333
      %p335 = scmp.ne.s32.totalorder %s327, %s329
      %p336 = scmp.eq.s32.totalorder %s41, 1
      %p337 = por %p335, %p336
      %p338 = scmp.ne.s32.totalorder %s329, %s330
      %p339 = scmp.eq.s32.totalorder %s41, 0
      %p340 = por %p338, %p339
      %p341 = scmp.ne.s32.totalorder %s329, %s330
      %p342 = scmp.eq.s32.totalorder %s42, 1
      %p343 = por %p341, %p342
      %p345 = scmp.ne.s32.totalorder %s330, %s344
      %p346 = scmp.eq.s32.totalorder %s42, 0
      %p347 = por %p345, %p346
      %s349 = sadd.s32 %s348, 1
      %p352 = scmp.eq.s32.totalorder %s36, 1
      %p353 = scmp.ne.s32.totalorder %s348, %s350
      %p354 = scmp.eq.s32.totalorder %s36, 0
      %p355 = por %p353, %p354
      %p356 = scmp.ne.s32.totalorder %s348, %s350
      %p357 = scmp.eq.s32.totalorder %s41, 1
      %p358 = por %p356, %p357
      %p359 = scmp.ne.s32.totalorder %s350, %s351
      %p360 = scmp.eq.s32.totalorder %s41, 0
      %p361 = por %p359, %p360
      %p362 = scmp.ne.s32.totalorder %s350, %s351
      %p363 = scmp.eq.s32.totalorder %s42, 1
      %p364 = por %p362, %p363
      %p366 = scmp.ne.s32.totalorder %s351, %s365
      %p367 = scmp.eq.s32.totalorder %s42, 0
      %p368 = por %p366, %p367
      %s370 = sadd.s32 %s369, 1
      %p373 = scmp.eq.s32.totalorder %s36, 1
      %p374 = scmp.ne.s32.totalorder %s369, %s371
      %p375 = scmp.eq.s32.totalorder %s36, 0
      %p376 = por %p374, %p375
      %p377 = scmp.ne.s32.totalorder %s369, %s371
      %p378 = scmp.eq.s32.totalorder %s41, 1
      %p379 = por %p377, %p378
      %p380 = scmp.ne.s32.totalorder %s371, %s372
      %p381 = scmp.eq.s32.totalorder %s41, 0
      %p382 = por %p380, %p381
      %p383 = scmp.ne.s32.totalorder %s371, %s372
      %p384 = scmp.eq.s32.totalorder %s42, 1
      %p385 = por %p383, %p384
      %p387 = scmp.ne.s32.totalorder %s372, %s386
      %p388 = scmp.eq.s32.totalorder %s42, 0
      %p389 = por %p387, %p388
      %s391 = sadd.s32 %s390, 1
      %p394 = scmp.eq.s32.totalorder %s36, 1
      %p395 = scmp.ne.s32.totalorder %s390, %s392
      %p396 = scmp.eq.s32.totalorder %s36, 0
      %p397 = por %p395, %p396
      %p398 = scmp.ne.s32.totalorder %s390, %s392
      %p399 = scmp.eq.s32.totalorder %s41, 1
      %p400 = por %p398, %p399
      %p401 = scmp.ne.s32.totalorder %s392, %s393
      %p402 = scmp.eq.s32.totalorder %s41, 0
      %p403 = por %p401, %p402
      %p404 = scmp.ne.s32.totalorder %s392, %s393
      %p405 = scmp.eq.s32.totalorder %s42, 1
      %p406 = por %p404, %p405
      %p408 = scmp.ne.s32.totalorder %s393, %s407
      %p409 = scmp.eq.s32.totalorder %s42, 0
      %p410 = por %p408, %p409
      %s412 = sadd.s32 %s411, 1
      %p415 = scmp.eq.s32.totalorder %s36, 1
      %p416 = scmp.ne.s32.totalorder %s411, %s413
      %p417 = scmp.eq.s32.totalorder %s36, 0
      %p418 = por %p416, %p417
      %p419 = scmp.ne.s32.totalorder %s411, %s413
      %p420 = scmp.eq.s32.totalorder %s41, 1
      %p421 = por %p419, %p420
      %p422 = scmp.ne.s32.totalorder %s413, %s414
      %p423 = scmp.eq.s32.totalorder %s41, 0
      %p424 = por %p422, %p423
      %p425 = scmp.ne.s32.totalorder %s413, %s414
      %p426 = scmp.eq.s32.totalorder %s42, 1
      %p427 = por %p425, %p426
      %p429 = scmp.ne.s32.totalorder %s414, %s428
      %p430 = scmp.eq.s32.totalorder %s42, 0
      %p431 = por %p429, %p430
      %s433 = sadd.s32 %s432, 1
      %p436 = scmp.eq.s32.totalorder %s36, 1
      %p437 = scmp.ne.s32.totalorder %s432, %s434
      %p438 = scmp.eq.s32.totalorder %s36, 0
      %p439 = por %p437, %p438
      %p440 = scmp.ne.s32.totalorder %s432, %s434
      %p441 = scmp.eq.s32.totalorder %s41, 1
      %p442 = por %p440, %p441
      %p443 = scmp.ne.s32.totalorder %s434, %s435
      %p444 = scmp.eq.s32.totalorder %s41, 0
      %p445 = por %p443, %p444
      %p446 = scmp.ne.s32.totalorder %s434, %s435
      %p447 = scmp.eq.s32.totalorder %s42, 1
      %p448 = por %p446, %p447
      %p450 = scmp.ne.s32.totalorder %s435, %s449
      %p451 = scmp.eq.s32.totalorder %s42, 0
      %p452 = por %p450, %p451
      %s454 = sadd.s32 %s453, 1
      %p457 = scmp.eq.s32.totalorder %s36, 1
      %p458 = scmp.ne.s32.totalorder %s453, %s455
      %p459 = scmp.eq.s32.totalorder %s36, 0
      %p460 = por %p458, %p459
      %p461 = scmp.ne.s32.totalorder %s453, %s455
      %p462 = scmp.eq.s32.totalorder %s41, 1
      %p463 = por %p461, %p462
      %p464 = scmp.ne.s32.totalorder %s455, %s456
      %p465 = scmp.eq.s32.totalorder %s41, 0
      %p466 = por %p464, %p465
      %p467 = scmp.ne.s32.totalorder %s455, %s456
      %p468 = scmp.eq.s32.totalorder %s42, 1
      %p469 = por %p467, %p468
      %p471 = scmp.ne.s32.totalorder %s456, %s470
      %p472 = scmp.eq.s32.totalorder %s42, 0
      %p473 = por %p471, %p472
      %s474 = ssub.s32 %s36, %s43
      %p475 = scmp.eq.s32.totalorder %s474, 0
      %s477 = sadd.s32 %s476, 1
      %s478 = scalar_select %p475, %s476, %s477
      %p481 = pneg %p475
      %p482 = scmp.eq.s32.totalorder %s36, 1
      %p483 = por %p481, %p482
      %p484 = scmp.ne.s32.totalorder %s476, %s479
      %p485 = scmp.eq.s32.totalorder %s36, 0
      %p486 = por %p484, %p485
      %p487 = scmp.ne.s32.totalorder %s476, %s479
      %p488 = scmp.eq.s32.totalorder %s41, 1
      %p489 = por %p487, %p488
      %p490 = scmp.ne.s32.totalorder %s479, %s480
      %p491 = scmp.eq.s32.totalorder %s41, 0
      %p492 = por %p490, %p491
      %p493 = scmp.ne.s32.totalorder %s479, %s480
      %p494 = scmp.eq.s32.totalorder %s42, 1
      %p495 = por %p493, %p494
      %p497 = scmp.ne.s32.totalorder %s480, %s496
      %p498 = scmp.eq.s32.totalorder %s42, 0
      %p499 = por %p497, %p498
      %s500 = ssub.s32 %s36, %s43
      %p501 = scmp.eq.s32.totalorder %s500, 0
      %s503 = sadd.s32 %s502, 1
      %s504 = scalar_select %p501, %s502, %s503
      %p507 = pneg %p501
      %p508 = scmp.eq.s32.totalorder %s36, 1
      %p509 = por %p507, %p508
      %p510 = scmp.ne.s32.totalorder %s502, %s505
      %p511 = scmp.eq.s32.totalorder %s36, 0
      %p512 = por %p510, %p511
      %p513 = scmp.ne.s32.totalorder %s502, %s505
      %p514 = scmp.eq.s32.totalorder %s41, 1
      %p515 = por %p513, %p514
      %p516 = scmp.ne.s32.totalorder %s505, %s506
      %p517 = scmp.eq.s32.totalorder %s41, 0
      %p518 = por %p516, %p517
      %p519 = scmp.ne.s32.totalorder %s505, %s506
      %p520 = scmp.eq.s32.totalorder %s42, 1
      %p521 = por %p519, %p520
      %p523 = scmp.ne.s32.totalorder %s506, %s522
      %p524 = scmp.eq.s32.totalorder %s42, 0
      %p525 = por %p523, %p524
      %s526 = ssub.s32 %s36, %s43
      %p527 = scmp.eq.s32.totalorder %s526, 0
      %s529 = sadd.s32 %s528, 1
      %s530 = scalar_select %p527, %s528, %s529
      %p533 = pneg %p527
      %p534 = scmp.eq.s32.totalorder %s36, 1
      %p535 = por %p533, %p534
      %p536 = scmp.ne.s32.totalorder %s528, %s531
      %p537 = scmp.eq.s32.totalorder %s36, 0
      %p538 = por %p536, %p537
      %p539 = scmp.ne.s32.totalorder %s528, %s531
      %p540 = scmp.eq.s32.totalorder %s41, 1
      %p541 = por %p539, %p540
      %p542 = scmp.ne.s32.totalorder %s531, %s532
      %p543 = scmp.eq.s32.totalorder %s41, 0
      %p544 = por %p542, %p543
      %p545 = scmp.ne.s32.totalorder %s531, %s532
      %p546 = scmp.eq.s32.totalorder %s42, 1
      %p547 = por %p545, %p546
      %p549 = scmp.ne.s32.totalorder %s532, %s548
      %p550 = scmp.eq.s32.totalorder %s42, 0
      %p551 = por %p549, %p550
      %p552 = scmp.le.s32.totalorder 1, %s36
      %p553 = scmp.lt.s32.totalorder %s36, 3
      %p554 = pnand %p552, %p553
      %p555 = pneg %p554
      // Predicated region
      $region9: #{sigma_vae_forward.1} parent=5 // pred_check
        _
      $region10: #{sigma_vae_forward.1} parent=5 // pred_check_branch
        %557 = sbr.rel (%p554) target = $region12
      $region11: #{sigma_vae_forward.1} parent=5 // pred_region
        %s558 = ssub.s32 %s36, 1
        // Predicated region
        $region13: #{sigma_vae_forward.1} parent=11 // pred_check
          %p559 = pneg %p109
        $region14: #{sigma_vae_forward.1} parent=11 // pred_check_branch
          %561 = sbr.rel (%p559) target = $region16
        $region15: #{sigma_vae_forward.1} parent=11 // pred_region
          %s563 = ssub.s32 4096, 4096
          %564 = vsyncadd [#allocation3], %s563
          %s565 = sshll.u32 [#allocation2], 4
          %s566 = int_to_ptr.vmem [resolvable:$true] %s565
          %571 = dma.hbm_to_vmem [thread:$0]  %s2, 4096, %s566, [#allocation3], 128, 128, 8
        $region16: #{sigma_vae_forward.1} parent=11 // pred_fallthru
          _
        // Predicated region
        $region17: #{sigma_vae_forward.1} parent=11 // pred_check
          %p572 = pneg %p130
        $region18: #{sigma_vae_forward.1} parent=11 // pred_check_branch
          %574 = sbr.rel (%p572) target = $region20
        $region19: #{sigma_vae_forward.1} parent=11 // pred_region
          _
        $region20: #{sigma_vae_forward.1} parent=11 // pred_fallthru
          _
        // Predicated region
        $region21: #{sigma_vae_forward.1} parent=11 // pred_check
          %p575 = pneg %p151
        $region22: #{sigma_vae_forward.1} parent=11 // pred_check_branch
          %577 = sbr.rel (%p575) target = $region24
        $region23: #{sigma_vae_forward.1} parent=11 // pred_region
          %s579 = ssub.s32 4096, 4096
          %580 = vsyncadd [#allocation6], %s579
          %s581 = sshll.u32 [#allocation5], 4
          %s582 = int_to_ptr.vmem [resolvable:$true] %s581
          %587 = dma.hbm_to_vmem [thread:$0]  %s4, 4096, %s582, [#allocation6], 128, 128, 8
        $region24: #{sigma_vae_forward.1} parent=11 // pred_fallthru
          _
        // Predicated region
        $region25: #{sigma_vae_forward.1} parent=11 // pred_check
          %p588 = pneg %p172
        $region26: #{sigma_vae_forward.1} parent=11 // pred_check_branch
          %590 = sbr.rel (%p588) target = $region28
        $region27: #{sigma_vae_forward.1} parent=11 // pred_region
          _
        $region28: #{sigma_vae_forward.1} parent=11 // pred_fallthru
          _
        // Predicated region
        $region29: #{sigma_vae_forward.1} parent=11 // pred_check
          %p591 = pneg %p193
        $region30: #{sigma_vae_forward.1} parent=11 // pred_check_branch
          %593 = sbr.rel (%p591) target = $region32
        $region31: #{sigma_vae_forward.1} parent=11 // pred_region
          _
        $region32: #{sigma_vae_forward.1} parent=11 // pred_fallthru
          _
        // Predicated region
        $region33: #{sigma_vae_forward.1} parent=11 // pred_check
          %p594 = pneg %p214
        $region34: #{sigma_vae_forward.1} parent=11 // pred_check_branch
          %596 = sbr.rel (%p594) target = $region36
        $region35: #{sigma_vae_forward.1} parent=11 // pred_region
          _
        $region36: #{sigma_vae_forward.1} parent=11 // pred_fallthru
          _
        // Predicated region
        $region37: #{sigma_vae_forward.1} parent=11 // pred_check
          %p597 = pneg %p235
        $region38: #{sigma_vae_forward.1} parent=11 // pred_check_branch
          %599 = sbr.rel (%p597) target = $region40
        $region39: #{sigma_vae_forward.1} parent=11 // pred_region
          _
        $region40: #{sigma_vae_forward.1} parent=11 // pred_fallthru
          _
        // Predicated region
        $region41: #{sigma_vae_forward.1} parent=11 // pred_check
          %p600 = pneg %p256
        $region42: #{sigma_vae_forward.1} parent=11 // pred_check_branch
          %602 = sbr.rel (%p600) target = $region44
        $region43: #{sigma_vae_forward.1} parent=11 // pred_region
          _
        $region44: #{sigma_vae_forward.1} parent=11 // pred_fallthru
          _
        // Predicated region
        $region45: #{sigma_vae_forward.1} parent=11 // pred_check
          %p603 = pneg %p277
        $region46: #{sigma_vae_forward.1} parent=11 // pred_check_branch
          %605 = sbr.rel (%p603) target = $region48
        $region47: #{sigma_vae_forward.1} parent=11 // pred_region
          %s607 = ssub.s32 2048, 2048
          %608 = vsyncadd [#allocation6], %s607
          %s609 = sshll.u32 [#allocation7], 4
          %s610 = int_to_ptr.vmem [resolvable:$true] %s609
          %615 = dma.hbm_to_vmem [thread:$0]  %s10, 2048, %s610, [#allocation6], 64, 64, 4
        $region48: #{sigma_vae_forward.1} parent=11 // pred_fallthru
          _
        // Predicated region
        $region49: #{sigma_vae_forward.1} parent=11 // pred_check
          %p616 = pneg %p298
        $region50: #{sigma_vae_forward.1} parent=11 // pred_check_branch
          %618 = sbr.rel (%p616) target = $region52
        $region51: #{sigma_vae_forward.1} parent=11 // pred_region
          _
        $region52: #{sigma_vae_forward.1} parent=11 // pred_fallthru
          _
        // Predicated region
        $region53: #{sigma_vae_forward.1} parent=11 // pred_check
          %p619 = pneg %p319
        $region54: #{sigma_vae_forward.1} parent=11 // pred_check_branch
          %621 = sbr.rel (%p619) target = $region56
        $region55: #{sigma_vae_forward.1} parent=11 // pred_region
          %s623 = ssub.s32 2048, 2048
          %624 = vsyncadd [#allocation9], %s623
          %s625 = sshll.u32 [#allocation8], 4
          %s626 = int_to_ptr.vmem [resolvable:$true] %s625
          %631 = dma.hbm_to_vmem [thread:$0]  %s12, 2048, %s626, [#allocation9], 128, 128, 8
        $region56: #{sigma_vae_forward.1} parent=11 // pred_fallthru
          _
        // Predicated region
        $region57: #{sigma_vae_forward.1} parent=11 // pred_check
          %p632 = pneg %p340
        $region58: #{sigma_vae_forward.1} parent=11 // pred_check_branch
          %634 = sbr.rel (%p632) target = $region60
        $region59: #{sigma_vae_forward.1} parent=11 // pred_region
          _
        $region60: #{sigma_vae_forward.1} parent=11 // pred_fallthru
          _
        // Predicated region
        $region61: #{sigma_vae_forward.1} parent=11 // pred_check
          %p635 = pneg %p361
        $region62: #{sigma_vae_forward.1} parent=11 // pred_check_branch
          %637 = sbr.rel (%p635) target = $region64
        $region63: #{sigma_vae_forward.1} parent=11 // pred_region
          %s639 = ssub.s32 4096, 4096
          %640 = vsyncadd [#allocation9], %s639
          %s641 = sshll.u32 [#allocation10], 4
          %s642 = int_to_ptr.vmem [resolvable:$true] %s641
          %647 = dma.hbm_to_vmem [thread:$0]  %s14, 4096, %s642, [#allocation9], 128, 128, 8
        $region64: #{sigma_vae_forward.1} parent=11 // pred_fallthru
          _
        // Predicated region
        $region65: #{sigma_vae_forward.1} parent=11 // pred_check
          %p648 = pneg %p382
        $region66: #{sigma_vae_forward.1} parent=11 // pred_check_branch
          %650 = sbr.rel (%p648) target = $region68
        $region67: #{sigma_vae_forward.1} parent=11 // pred_region
          _
        $region68: #{sigma_vae_forward.1} parent=11 // pred_fallthru
          _
        // Predicated region
        $region69: #{sigma_vae_forward.1} parent=11 // pred_check
          %p651 = pneg %p403
        $region70: #{sigma_vae_forward.1} parent=11 // pred_check_branch
          %653 = sbr.rel (%p651) target = $region72
        $region71: #{sigma_vae_forward.1} parent=11 // pred_region
          %s655 = ssub.s32 4096, 4096
          %656 = vsyncadd [#allocation12], %s655
          %s657 = sshll.u32 [#allocation11], 4
          %s658 = int_to_ptr.vmem [resolvable:$true] %s657
          %663 = dma.hbm_to_vmem [thread:$0]  %s16, 4096, %s658, [#allocation12], 128, 128, 8
        $region72: #{sigma_vae_forward.1} parent=11 // pred_fallthru
          _
        // Predicated region
        $region73: #{sigma_vae_forward.1} parent=11 // pred_check
          %p664 = pneg %p424
        $region74: #{sigma_vae_forward.1} parent=11 // pred_check_branch
          %666 = sbr.rel (%p664) target = $region76
        $region75: #{sigma_vae_forward.1} parent=11 // pred_region
          _
        $region76: #{sigma_vae_forward.1} parent=11 // pred_fallthru
          _
        // Predicated region
        $region77: #{sigma_vae_forward.1} parent=11 // pred_check
          %p667 = pneg %p445
        $region78: #{sigma_vae_forward.1} parent=11 // pred_check_branch
          %669 = sbr.rel (%p667) target = $region80
        $region79: #{sigma_vae_forward.1} parent=11 // pred_region
          %s671 = ssub.s32 4096, 4096
          %672 = vsyncadd [#allocation12], %s671
          %s673 = sshll.u32 [#allocation13], 4
          %s674 = int_to_ptr.vmem [resolvable:$true] %s673
          %679 = dma.hbm_to_vmem [thread:$0]  %s18, 4096, %s674, [#allocation12], 128, 128, 8
        $region80: #{sigma_vae_forward.1} parent=11 // pred_fallthru
          _
        // Predicated region
        $region81: #{sigma_vae_forward.1} parent=11 // pred_check
          %p680 = pneg %p466
        $region82: #{sigma_vae_forward.1} parent=11 // pred_check_branch
          %682 = sbr.rel (%p680) target = $region84
        $region83: #{sigma_vae_forward.1} parent=11 // pred_region
          _
        $region84: #{sigma_vae_forward.1} parent=11 // pred_fallthru
          _
      $region12: #{sigma_vae_forward.1} parent=5 // pred_fallthru
        _
      %p683 = scmp.lt.s32.totalorder %s36, 2
      // Predicated region
      $region85: #{sigma_vae_forward.1} parent=5 // pred_check
        %p684 = pneg %p683
      $region86: #{sigma_vae_forward.1} parent=5 // pred_check_branch
        %686 = sbr.rel (%p684) target = $region88
      $region87: #{sigma_vae_forward.1} parent=5 // pred_region
        // Predicated region
        $region89: #{sigma_vae_forward.1} parent=87 // pred_check
          %p687 = pneg %p56
        $region90: #{sigma_vae_forward.1} parent=87 // pred_check_branch
          %689 = sbr.rel (%p687) target = $region92
        $region91: #{sigma_vae_forward.1} parent=87 // pred_region
          %s690 = smul.u32 16, %s36
          %s691 = ssub.s32 25, %s690
          %p692 = scmp.lt.s32.totalorder %s691, 16
          %s693 = scalar_select %p692, %s691, 16
          %s694 = smul.u32 128, %s693
          %s695 = smul.u32 %s694, 2
          %p696 = scmp.lt.s32.totalorder %s690, 24
          %s697 = scalar_select %p696, %s690, 24
          %s698 = smul.addr %s697, 2
          %s699 = smul.addr %s698, 8
          %s700 = scalar_lea.vmem %s0, %s699
          %s701 = smul.u32 16, %s36
          %s702 = ssub.s32 25, %s701
          %p703 = scmp.lt.s32.totalorder %s702, 16
          %s704 = scalar_select %p703, %s702, 16
          %s705 = smul.u32 128, %s704
          %s706 = smul.u32 %s705, 2
        $region92: #{sigma_vae_forward.1} parent=87 // pred_fallthru
          _
        // Predicated region
        $region93: #{sigma_vae_forward.1} parent=87 // pred_check
          %p707 = pneg %p82
        $region94: #{sigma_vae_forward.1} parent=87 // pred_check_branch
          %709 = sbr.rel (%p707) target = $region96
        $region95: #{sigma_vae_forward.1} parent=87 // pred_region
          %s710 = smul.u32 16, %s36
          %s711 = ssub.s32 25, %s710
          %p712 = scmp.lt.s32.totalorder %s711, 16
          %s713 = scalar_select %p712, %s711, 16
          %s714 = smul.u32 128, %s713
          %p715 = scmp.lt.s32.totalorder %s710, 24
          %s716 = scalar_select %p715, %s710, 24
          %s717 = smul.addr %s716, 8
          %s718 = scalar_lea.vmem %s1, %s717
          %s719 = smul.u32 16, %s36
          %s720 = ssub.s32 25, %s719
          %p721 = scmp.lt.s32.totalorder %s720, 16
          %s722 = scalar_select %p721, %s720, 16
          %s723 = smul.u32 128, %s722
        $region96: #{sigma_vae_forward.1} parent=87 // pred_fallthru
          _
      $region88: #{sigma_vae_forward.1} parent=5 // pred_fallthru
        _
      %p724 = scmp.le.s32.totalorder 1, %s36
      %p725 = scmp.lt.s32.totalorder %s36, 3
      %p726 = pnand %p724, %p725
      %p727 = pneg %p726
      // Predicated region
      $region97: #{sigma_vae_forward.1} parent=5 // pred_check
        _
      $region98: #{sigma_vae_forward.1} parent=5 // pred_check_branch
        %729 = sbr.rel (%p726) target = $region100
      $region99: #{sigma_vae_forward.1} parent=5 // pred_region
        %s730 = ssub.s32 %s36, 1
        // Predicated region
        $region101: #{sigma_vae_forward.1} parent=99 // pred_check
          %p731 = pneg %p109
        $region102: #{sigma_vae_forward.1} parent=99 // pred_check_branch
          %733 = sbr.rel (%p731) target = $region104
        $region103: #{sigma_vae_forward.1} parent=99 // pred_region
          %734 = dma.done [#allocation3], 4096
        $region104: #{sigma_vae_forward.1} parent=99 // pred_fallthru
          _
        // Predicated region
        $region105: #{sigma_vae_forward.1} parent=99 // pred_check
          %p735 = pneg %p151
        $region106: #{sigma_vae_forward.1} parent=99 // pred_check_branch
          %737 = sbr.rel (%p735) target = $region108
        $region107: #{sigma_vae_forward.1} parent=99 // pred_region
          %738 = dma.done [#allocation6], 4096
        $region108: #{sigma_vae_forward.1} parent=99 // pred_fallthru
          _
        // Predicated region
        $region109: #{sigma_vae_forward.1} parent=99 // pred_check
          %p739 = pneg %p277
        $region110: #{sigma_vae_forward.1} parent=99 // pred_check_branch
          %741 = sbr.rel (%p739) target = $region112
        $region111: #{sigma_vae_forward.1} parent=99 // pred_region
          %742 = dma.done [#allocation6], 2048
        $region112: #{sigma_vae_forward.1} parent=99 // pred_fallthru
          _
        // Predicated region
        $region113: #{sigma_vae_forward.1} parent=99 // pred_check
          %p743 = pneg %p319
        $region114: #{sigma_vae_forward.1} parent=99 // pred_check_branch
          %745 = sbr.rel (%p743) target = $region116
        $region115: #{sigma_vae_forward.1} parent=99 // pred_region
          %746 = dma.done [#allocation9], 2048
        $region116: #{sigma_vae_forward.1} parent=99 // pred_fallthru
          _
        // Predicated region
        $region117: #{sigma_vae_forward.1} parent=99 // pred_check
          %p747 = pneg %p361
        $region118: #{sigma_vae_forward.1} parent=99 // pred_check_branch
          %749 = sbr.rel (%p747) target = $region120
        $region119: #{sigma_vae_forward.1} parent=99 // pred_region
          %750 = dma.done [#allocation9], 4096
        $region120: #{sigma_vae_forward.1} parent=99 // pred_fallthru
          _
        // Predicated region
        $region121: #{sigma_vae_forward.1} parent=99 // pred_check
          %p751 = pneg %p403
        $region122: #{sigma_vae_forward.1} parent=99 // pred_check_branch
          %753 = sbr.rel (%p751) target = $region124
        $region123: #{sigma_vae_forward.1} parent=99 // pred_region
          %754 = dma.done [#allocation12], 4096
        $region124: #{sigma_vae_forward.1} parent=99 // pred_fallthru
          _
        // Predicated region
        $region125: #{sigma_vae_forward.1} parent=99 // pred_check
          %p755 = pneg %p445
        $region126: #{sigma_vae_forward.1} parent=99 // pred_check_branch
          %757 = sbr.rel (%p755) target = $region128
        $region127: #{sigma_vae_forward.1} parent=99 // pred_region
          %758 = dma.done [#allocation12], 4096
        $region128: #{sigma_vae_forward.1} parent=99 // pred_fallthru
          _
        %s759 = smul.u32 16, %s41
        %s760 = ssub.s32 25, %s759
        %p761 = scmp.lt.s32.totalorder %s760, 16
        %s762 = scalar_select %p761, %s760, 16
        %s763 = smul.u32 128, %s762
        %s764 = smul.u32 %s763, 2
        %p765 = scmp.lt.s32.totalorder %s759, 24
        %s766 = scalar_select %p765, %s759, 24
        %s767 = smul.addr %s766, 2
        %s768 = smul.addr %s767, 8
        %s769 = scalar_lea.vmem %s0, %s768
        %p770 = pneg %p62
        %p771 = pneg %p59
        %s772 = smul.u32 16, %s41
        %s773 = ssub.s32 25, %s772
        %p774 = scmp.lt.s32.totalorder %s773, 16
        %s775 = scalar_select %p774, %s773, 16
        %s776 = smul.u32 128, %s775
        %p777 = scmp.lt.s32.totalorder %s772, 24
        %s778 = scalar_select %p777, %s772, 24
        %s779 = smul.addr %s778, 8
        %s780 = scalar_lea.vmem %s1, %s779
        %p781 = pneg %p88
        %p782 = pneg %p85
        %p783 = pneg %p109
        %p784 = pneg %p106
        %p785 = pneg %p130
        %p786 = pneg %p127
        %p787 = pneg %p151
        %p788 = pneg %p148
        %p789 = pneg %p172
        %p790 = pneg %p169
        %p791 = pneg %p193
        %p792 = pneg %p190
        %p793 = pneg %p214
        %p794 = pneg %p211
        %p795 = pneg %p235
        %p796 = pneg %p232
        %p797 = pneg %p256
        %p798 = pneg %p253
        %p799 = pneg %p277
        %p800 = pneg %p274
        %p801 = pneg %p298
        %p802 = pneg %p295
        %p803 = pneg %p319
        %p804 = pneg %p316
        %p805 = pneg %p340
        %p806 = pneg %p337
        %p807 = pneg %p361
        %p808 = pneg %p358
        %p809 = pneg %p382
        %p810 = pneg %p379
        %p811 = pneg %p403
        %p812 = pneg %p400
        %p813 = pneg %p424
        %p814 = pneg %p421
        %p815 = pneg %p445
        %p816 = pneg %p442
        %p817 = pneg %p466
        %p818 = pneg %p463
        %p819 = pneg %p492
        %p820 = pneg %p489
        %s821 = sand.u32 %s479, 1
        %s822 = sand.u32 %s479, 1
        %s823 = smul.addr %s822, 128
        %s824 = scalar_lea.vmem [#allocation14], %s823
        %p825 = pneg %p518
        %p826 = pneg %p515
        %s827 = sand.u32 %s505, 1
        %s828 = sand.u32 %s505, 1
        %s829 = smul.addr %s828, 128
        %s830 = scalar_lea.vmem [#allocation15], %s829
        %p831 = pneg %p544
        %p832 = pneg %p541
        %s833 = sand.u32 %s531, 1
        %s834 = scalar_lea.sflag [#allocation4], %s833
        %s835 = sand.u32 %s531, 1
        %s836 = smul.addr %s835, 256
        %s837 = scalar_lea.vmem [#allocation16], %s836
        %s838 = smul.u32 16, %s41
        %s839 = ssub.s32 25, %s838
        %p840 = scmp.lt.s32.totalorder %s839, 16
        %s841 = scalar_select %p840, %s839, 16
        %s842 = smul.u32 128, %s841
        %s843 = smul.u32 %s842, 2
        %p844 = scmp.lt.s32.totalorder %s838, 24
        %s845 = scalar_select %p844, %s838, 24
        %s846 = smul.addr %s845, 2
        %s847 = smul.addr %s846, 8
        %s848 = scalar_lea.vmem %s0, %s847
        %s849 = smul.u32 16, %s41
        %s850 = ssub.s32 25, %s849
        %p851 = scmp.lt.s32.totalorder %s850, 16
        %s852 = scalar_select %p851, %s850, 16
        %s853 = smul.u32 128, %s852
        %s854 = smul.u32 %s853, 2
        %s855 = smul.u32 16, %s41
        %s856 = ssub.s32 25, %s855
        %p857 = scmp.lt.s32.totalorder %s856, 16
        %s858 = scalar_select %p857, %s856, 16
        %s859 = smul.u32 128, %s858
        %p860 = scmp.lt.s32.totalorder %s855, 24
        %s861 = scalar_select %p860, %s855, 24
        %s862 = smul.addr %s861, 8
        %s863 = scalar_lea.vmem %s1, %s862
        %s864 = smul.u32 16, %s41
        %s865 = ssub.s32 25, %s864
        %p866 = scmp.lt.s32.totalorder %s865, 16
        %s867 = scalar_select %p866, %s865, 16
        %s868 = smul.u32 128, %s867
        %s869 = smul.u32 16, %s41
        %s870 = ssub.s32 25, %s869
        %p871 = scmp.lt.s32.totalorder %s870, 16
        %s872 = scalar_select %p871, %s870, 16
        %s873 = smul.u32 128, %s872
        %s874 = smul.u32 16, %s41
        %s875 = ssub.s32 25, %s874
        %p876 = scmp.lt.s32.totalorder %s875, 16
        %s877 = scalar_select %p876, %s875, 16
        %s878 = smul.u32 128, %s877
        %s879 = smul.u32 16, %s41
        %s880 = ssub.s32 25, %s879
        %p881 = scmp.lt.s32.totalorder %s880, 16
        %s882 = scalar_select %p881, %s880, 16
        %s883 = smul.u32 128, %s882
        %s884 = smul.u32 %s883, 2
        %v886 = vld [vmem:[%s848] sm:$0xff]
        %v887 = vld [vmem:[%s848 + $0x8] sm:$0xff]
        %v888 = vld [vmem:[%s848 + $0x10] sm:$0xff]
        %v889 = vld [vmem:[%s848 + $0x18] sm:$0xff]
        %v890 = vld [vmem:[%s848 + $0x20] sm:$0xff]
        %v891 = vld [vmem:[%s848 + $0x28] sm:$0xff]
        %v892 = vld [vmem:[%s848 + $0x30] sm:$0xff]
        %v893 = vld [vmem:[%s848 + $0x38] sm:$0xff]
        %v894 = vld [vmem:[%s848 + $0x40] sm:$0xff]
        %v895 = vld [vmem:[%s848 + $0x48] sm:$0xff]
        %v896 = vld [vmem:[%s848 + $0x50] sm:$0xff]
        %v897 = vld [vmem:[%s848 + $0x58] sm:$0xff]
        %v898 = vld [vmem:[%s848 + $0x60] sm:$0xff]
        %v899 = vld [vmem:[%s848 + $0x68] sm:$0xff]
        %v900 = vld [vmem:[%s848 + $0x70] sm:$0xff]
        %v901 = vld [vmem:[%s848 + $0x78] sm:$0xff]
        %v902 = vld [vmem:[%s848 + $0x80] sm:$0xff]
        %v903 = vld [vmem:[%s848 + $0x88] sm:$0xff]
        %v904 = vld [vmem:[%s848 + $0x90] sm:$0xff]
        %v905 = vld [vmem:[%s848 + $0x98] sm:$0xff]
        %v906 = vld [vmem:[%s848 + $0xa0] sm:$0xff]
        %v907 = vld [vmem:[%s848 + $0xa8] sm:$0xff]
        %v908 = vld [vmem:[%s848 + $0xb0] sm:$0xff]
        %v909 = vld [vmem:[%s848 + $0xb8] sm:$0xff]
        %v910 = vld [vmem:[%s848 + $0xc0] sm:$0xff]
        %v911 = vld [vmem:[%s848 + $0xc8] sm:$0xff]
        %v912 = vld [vmem:[%s848 + $0xd0] sm:$0xff]
        %v913 = vld [vmem:[%s848 + $0xd8] sm:$0xff]
        %v914 = vld [vmem:[%s848 + $0xe0] sm:$0xff]
        %v915 = vld [vmem:[%s848 + $0xe8] sm:$0xff]
        %v916 = vld [vmem:[%s848 + $0xf0] sm:$0xff]
        %v917 = vld [vmem:[%s848 + $0xf8] sm:$0xff]
        %v918 = vpack.c.bf16 %v888, %v886
        %v919 = vpack.c.bf16 %v889, %v887
        %v920 = vpack.c.bf16 %v892, %v890
        %v921 = vpack.c.bf16 %v893, %v891
        %v922 = vpack.c.bf16 %v896, %v894
        %v923 = vpack.c.bf16 %v897, %v895
        %v924 = vpack.c.bf16 %v900, %v898
        %v925 = vpack.c.bf16 %v901, %v899
        %v926 = vpack.c.bf16 %v904, %v902
        %v927 = vpack.c.bf16 %v905, %v903
        %v928 = vpack.c.bf16 %v908, %v906
        %v929 = vpack.c.bf16 %v909, %v907
        %v930 = vpack.c.bf16 %v912, %v910
        %v931 = vpack.c.bf16 %v913, %v911
        %v932 = vpack.c.bf16 %v916, %v914
        %v933 = vpack.c.bf16 %v917, %v915
        %v934 = vld [vmem:[#allocation2] sm:$0xff]
        %v935 = vld [vmem:[#allocation2 + $0x8] sm:$0xff]
        %v936 = vld [vmem:[#allocation2 + $0x10] sm:$0xff]
        %v937 = vld [vmem:[#allocation2 + $0x18] sm:$0xff]
        %v938 = vld [vmem:[#allocation2 + $0x20] sm:$0xff]
        %v939 = vld [vmem:[#allocation2 + $0x28] sm:$0xff]
        %v940 = vld [vmem:[#allocation2 + $0x30] sm:$0xff]
        %v941 = vld [vmem:[#allocation2 + $0x38] sm:$0xff]
        %v942 = vld [vmem:[#allocation2 + $0x40] sm:$0xff]
        %v943 = vld [vmem:[#allocation2 + $0x48] sm:$0xff]
        %v944 = vld [vmem:[#allocation2 + $0x50] sm:$0xff]
        %v945 = vld [vmem:[#allocation2 + $0x58] sm:$0xff]
        %v946 = vld [vmem:[#allocation2 + $0x60] sm:$0xff]
        %v947 = vld [vmem:[#allocation2 + $0x68] sm:$0xff]
        %v948 = vld [vmem:[#allocation2 + $0x70] sm:$0xff]
        %v949 = vld [vmem:[#allocation2 + $0x78] sm:$0xff]
        %v950 = vld [vmem:[#allocation2 + $0x80] sm:$0xff]
        %v951 = vld [vmem:[#allocation2 + $0x88] sm:$0xff]
        %v952 = vld [vmem:[#allocation2 + $0x90] sm:$0xff]
        %v953 = vld [vmem:[#allocation2 + $0x98] sm:$0xff]
        %v954 = vld [vmem:[#allocation2 + $0xa0] sm:$0xff]
        %v955 = vld [vmem:[#allocation2 + $0xa8] sm:$0xff]
        %v956 = vld [vmem:[#allocation2 + $0xb0] sm:$0xff]
        %v957 = vld [vmem:[#allocation2 + $0xb8] sm:$0xff]
        %v958 = vld [vmem:[#allocation2 + $0xc0] sm:$0xff]
        %v959 = vld [vmem:[#allocation2 + $0xc8] sm:$0xff]
        %v960 = vld [vmem:[#allocation2 + $0xd0] sm:$0xff]
        %v961 = vld [vmem:[#allocation2 + $0xd8] sm:$0xff]
        %v962 = vld [vmem:[#allocation2 + $0xe0] sm:$0xff]
        %v963 = vld [vmem:[#allocation2 + $0xe8] sm:$0xff]
        %v964 = vld [vmem:[#allocation2 + $0xf0] sm:$0xff]
        %v965 = vld [vmem:[#allocation2 + $0xf8] sm:$0xff]
        %v966 = vld [vmem:[%s3] sm:$0x3]
        %v968 = vlaneseq
        %v969 = vshrl.u32 %v968, 7
        %v970 = vsub.s32 0, %v969
        %v971 = vrot.slane %v966, %v970
        %v972 = vlaneseq
        %v973 = vshrl.u32 %v972, 7
        %v974 = vsub.s32 1, %v973
        %v975 = vrot.slane %v966, %v974
        %v1010 = vunpack.c.l.b16 %v934
        %v1011 = vunpack.c.h.b16 %v934
        %v1012 = vunpack.c.l.b16 %v935
        %v1013 = vunpack.c.h.b16 %v935
        %v1014 = vunpack.c.l.b16 %v936
        %v1015 = vunpack.c.h.b16 %v936
        %v1016 = vunpack.c.l.b16 %v937
        %v1017 = vunpack.c.h.b16 %v937
        %v1018 = vunpack.c.l.b16 %v938
        %v1019 = vunpack.c.h.b16 %v938
        %v1020 = vunpack.c.l.b16 %v939
        %v1021 = vunpack.c.h.b16 %v939
        %v1022 = vunpack.c.l.b16 %v940
        %v1023 = vunpack.c.h.b16 %v940
        %v1024 = vunpack.c.l.b16 %v941
        %v1025 = vunpack.c.h.b16 %v941
        %v1026 = vunpack.c.l.b16 %v942
        %v1027 = vunpack.c.h.b16 %v942
        %v1028 = vunpack.c.l.b16 %v943
        %v1029 = vunpack.c.h.b16 %v943
        %v1030 = vunpack.c.l.b16 %v944
        %v1031 = vunpack.c.h.b16 %v944
        %v1032 = vunpack.c.l.b16 %v945
        %v1033 = vunpack.c.h.b16 %v945
        %v1034 = vunpack.c.l.b16 %v946
        %v1035 = vunpack.c.h.b16 %v946
        %v1036 = vunpack.c.l.b16 %v947
        %v1037 = vunpack.c.h.b16 %v947
        %v1038 = vunpack.c.l.b16 %v948
        %v1039 = vunpack.c.h.b16 %v948
        %v1040 = vunpack.c.l.b16 %v949
        %v1041 = vunpack.c.h.b16 %v949
        %v1042 = vunpack.c.l.b16 %v950
        %v1043 = vunpack.c.h.b16 %v950
        %v1044 = vunpack.c.l.b16 %v951
        %v1045 = vunpack.c.h.b16 %v951
        %v1046 = vunpack.c.l.b16 %v952
        %v1047 = vunpack.c.h.b16 %v952
        %v1048 = vunpack.c.l.b16 %v953
        %v1049 = vunpack.c.h.b16 %v953
        %v1050 = vunpack.c.l.b16 %v954
        %v1051 = vunpack.c.h.b16 %v954
        %v1052 = vunpack.c.l.b16 %v955
        %v1053 = vunpack.c.h.b16 %v955
        %v1054 = vunpack.c.l.b16 %v956
        %v1055 = vunpack.c.h.b16 %v956
        %v1056 = vunpack.c.l.b16 %v957
        %v1057 = vunpack.c.h.b16 %v957
        %v1058 = vunpack.c.l.b16 %v958
        %v1059 = vunpack.c.h.b16 %v958
        %v1060 = vunpack.c.l.b16 %v959
        %v1061 = vunpack.c.h.b16 %v959
        %v1062 = vunpack.c.l.b16 %v960
        %v1063 = vunpack.c.h.b16 %v960
        %v1064 = vunpack.c.l.b16 %v961
        %v1065 = vunpack.c.h.b16 %v961
        %v1066 = vunpack.c.l.b16 %v962
        %v1067 = vunpack.c.h.b16 %v962
        %v1068 = vunpack.c.l.b16 %v963
        %v1069 = vunpack.c.h.b16 %v963
        %v1070 = vunpack.c.l.b16 %v964
        %v1071 = vunpack.c.h.b16 %v964
        %v1072 = vunpack.c.l.b16 %v965
        %v1073 = vunpack.c.h.b16 %v965
        %v1074 = vpack.c.b16 %v1012, %v1010
        %v1075 = vpack.c.b16 %v1013, %v1011
        %v1076 = vpack.c.b16 %v1016, %v1014
        %v1077 = vpack.c.b16 %v1017, %v1015
        %v1078 = vpack.c.b16 %v1020, %v1018
        %v1079 = vpack.c.b16 %v1021, %v1019
        %v1080 = vpack.c.b16 %v1024, %v1022
        %v1081 = vpack.c.b16 %v1025, %v1023
        %v1082 = vpack.c.b16 %v1028, %v1026
        %v1083 = vpack.c.b16 %v1029, %v1027
        %v1084 = vpack.c.b16 %v1032, %v1030
        %v1085 = vpack.c.b16 %v1033, %v1031
        %v1086 = vpack.c.b16 %v1036, %v1034
        %v1087 = vpack.c.b16 %v1037, %v1035
        %v1088 = vpack.c.b16 %v1040, %v1038
        %v1089 = vpack.c.b16 %v1041, %v1039
        %v1090 = vpack.c.b16 %v1044, %v1042
        %v1091 = vpack.c.b16 %v1045, %v1043
        %v1092 = vpack.c.b16 %v1048, %v1046
        %v1093 = vpack.c.b16 %v1049, %v1047
        %v1094 = vpack.c.b16 %v1052, %v1050
        %v1095 = vpack.c.b16 %v1053, %v1051
        %v1096 = vpack.c.b16 %v1056, %v1054
        %v1097 = vpack.c.b16 %v1057, %v1055
        %v1098 = vpack.c.b16 %v1060, %v1058
        %v1099 = vpack.c.b16 %v1061, %v1059
        %v1100 = vpack.c.b16 %v1064, %v1062
        %v1101 = vpack.c.b16 %v1065, %v1063
        %v1102 = vpack.c.b16 %v1068, %v1066
        %v1103 = vpack.c.b16 %v1069, %v1067
        %v1104 = vpack.c.b16 %v1072, %v1070
        %v1105 = vpack.c.b16 %v1073, %v1071
        %1138 = vmatprep.subr.bf16.mxu0 %v1075
        %1139 = vmatpush1.bf16.msra.mxu0 %v1074
        %1140 = vmatprep.subr.bf16.mxu0 %v1077
        %1141 = vmatpush1.bf16.msra.mxu0 %v1076
        %1142 = vmatprep.subr.bf16.mxu0 %v1079
        %1143 = vmatpush1.bf16.msra.mxu0 %v1078
        %1144 = vmatprep.subr.bf16.mxu0 %v1081
        %1145 = vmatpush1.bf16.msra.mxu0 %v1080
        %1146 = vmatprep.subr.bf16.mxu0 %v1083
        %1147 = vmatpush1.bf16.msra.mxu0 %v1082
        %1148 = vmatprep.subr.bf16.mxu0 %v1085
        %1149 = vmatpush1.bf16.msra.mxu0 %v1084
        %1150 = vmatprep.subr.bf16.mxu0 %v1087
        %1151 = vmatpush1.bf16.msra.mxu0 %v1086
        %1152 = vmatprep.subr.bf16.mxu0 %v1089
        %1153 = vmatpush1.bf16.msra.mxu0 %v1088
        %1154 = vmatprep.subr.bf16.mxu0 %v1091
        %1155 = vmatpush1.bf16.msra.mxu0 %v1090
        %1156 = vmatprep.subr.bf16.mxu0 %v1093
        %1157 = vmatpush1.bf16.msra.mxu0 %v1092
        %1158 = vmatprep.subr.bf16.mxu0 %v1095
        %1159 = vmatpush1.bf16.msra.mxu0 %v1094
        %1160 = vmatprep.subr.bf16.mxu0 %v1097
        %1161 = vmatpush1.bf16.msra.mxu0 %v1096
        %1162 = vmatprep.subr.bf16.mxu0 %v1099
        %1163 = vmatpush1.bf16.msra.mxu0 %v1098
        %1164 = vmatprep.subr.bf16.mxu0 %v1101
        %1165 = vmatpush1.bf16.msra.mxu0 %v1100
        %1166 = vmatprep.subr.bf16.mxu0 %v1103
        %1167 = vmatpush1.bf16.msra.mxu0 %v1102
        %1168 = vmatprep.subr.bf16.mxu0 %v1105
        %1169 = vmatpush1.bf16.msra.mxu0 %v1104
        %1170 = vmatprep.mubr.bf16.mxu0 %v919
        %1171 = vmatmul.mubr.bf16.gmra.mrb[0].mxu0 %v918
        %v1172 = vpop.f32.mrb[0].mxu0
        %v1173 = vadd.f32 %v971, %v1172
        %v1174 = vpop.f32.mrb[0].mxu0
        %v1175 = vadd.f32 %v975, %v1174
        %v1176 = vpop.f32.mrb[0].mxu0
        %v1177 = vadd.f32 %v971, %v1176
        %v1178 = vpop.f32.mrb[0].mxu0
        %v1179 = vadd.f32 %v975, %v1178
        %1180 = vmatprep.mubr.bf16.mxu0 %v921
        %1181 = vmatmul.mubr.bf16.gmra.mrb[0].mxu0 %v920
        %v1182 = vpop.f32.mrb[0].mxu0
        %v1183 = vadd.f32 %v971, %v1182
        %v1184 = vpop.f32.mrb[0].mxu0
        %v1185 = vadd.f32 %v975, %v1184
        %v1186 = vpop.f32.mrb[0].mxu0
        %v1187 = vadd.f32 %v971, %v1186
        %v1188 = vpop.f32.mrb[0].mxu0
        %v1189 = vadd.f32 %v975, %v1188
        %1190 = vmatprep.mubr.bf16.mxu0 %v923
        %1191 = vmatmul.mubr.bf16.gmra.mrb[0].mxu0 %v922
        %v1192 = vpop.f32.mrb[0].mxu0
        %v1193 = vadd.f32 %v971, %v1192
        %v1194 = vpop.f32.mrb[0].mxu0
        %v1195 = vadd.f32 %v975, %v1194
        %v1196 = vpop.f32.mrb[0].mxu0
        %v1197 = vadd.f32 %v971, %v1196
        %v1198 = vpop.f32.mrb[0].mxu0
        %v1199 = vadd.f32 %v975, %v1198
        %1200 = vmatprep.mubr.bf16.mxu0 %v925
        %1201 = vmatmul.mubr.bf16.gmra.mrb[0].mxu0 %v924
        %v1202 = vpop.f32.mrb[0].mxu0
        %v1203 = vadd.f32 %v971, %v1202
        %v1204 = vpop.f32.mrb[0].mxu0
        %v1205 = vadd.f32 %v975, %v1204
        %v1206 = vpop.f32.mrb[0].mxu0
        %v1207 = vadd.f32 %v971, %v1206
        %v1208 = vpop.f32.mrb[0].mxu0
        %v1209 = vadd.f32 %v975, %v1208
        %1210 = vmatprep.mubr.bf16.mxu0 %v927
        %1211 = vmatmul.mubr.bf16.gmra.mrb[0].mxu0 %v926
        %v1212 = vpop.f32.mrb[0].mxu0
        %v1213 = vadd.f32 %v971, %v1212
        %v1214 = vpop.f32.mrb[0].mxu0
        %v1215 = vadd.f32 %v975, %v1214
        %v1216 = vpop.f32.mrb[0].mxu0
        %v1217 = vadd.f32 %v971, %v1216
        %v1218 = vpop.f32.mrb[0].mxu0
        %v1219 = vadd.f32 %v975, %v1218
        %1220 = vmatprep.mubr.bf16.mxu0 %v929
        %1221 = vmatmul.mubr.bf16.gmra.mrb[0].mxu0 %v928
        %v1222 = vpop.f32.mrb[0].mxu0
        %v1223 = vadd.f32 %v971, %v1222
        %v1224 = vpop.f32.mrb[0].mxu0
        %v1225 = vadd.f32 %v975, %v1224
        %v1226 = vpop.f32.mrb[0].mxu0
        %v1227 = vadd.f32 %v971, %v1226
        %v1228 = vpop.f32.mrb[0].mxu0
        %v1229 = vadd.f32 %v975, %v1228
        %1230 = vmatprep.mubr.bf16.mxu0 %v931
        %1231 = vmatmul.mubr.bf16.gmra.mrb[0].mxu0 %v930
        %v1232 = vpop.f32.mrb[0].mxu0
        %v1233 = vadd.f32 %v971, %v1232
        %v1234 = vpop.f32.mrb[0].mxu0
        %v1235 = vadd.f32 %v975, %v1234
        %v1236 = vpop.f32.mrb[0].mxu0
        %v1237 = vadd.f32 %v971, %v1236
        %v1238 = vpop.f32.mrb[0].mxu0
        %v1239 = vadd.f32 %v975, %v1238
        %1240 = vmatprep.mubr.bf16.mxu0 %v933
        %1241 = vmatmul.mubr.bf16.gmra.mrb[0].mxu0 %v932
        %v1242 = vpop.f32.mrb[0].mxu0
        %v1243 = vadd.f32 %v971, %v1242
        %v1244 = vpop.f32.mrb[0].mxu0
        %v1245 = vadd.f32 %v975, %v1244
        %v1246 = vpop.f32.mrb[0].mxu0
        %v1247 = vadd.f32 %v971, %v1246
        %v1248 = vpop.f32.mrb[0].mxu0
        %v1249 = vadd.f32 %v975, %v1248
        %1250 = vdwg.mxu0
        %v1251 = vmax.f32 %v1173, 0.0
        %v1252 = vmax.f32 %v1175, 0.0
        %v1253 = vmax.f32 %v1177, 0.0
        %v1254 = vmax.f32 %v1179, 0.0
        %v1255 = vmax.f32 %v1183, 0.0
        %v1256 = vmax.f32 %v1185, 0.0
        %v1257 = vmax.f32 %v1187, 0.0
        %v1258 = vmax.f32 %v1189, 0.0
        %v1259 = vmax.f32 %v1193, 0.0
        %v1260 = vmax.f32 %v1195, 0.0
        %v1261 = vmax.f32 %v1197, 0.0
        %v1262 = vmax.f32 %v1199, 0.0
        %v1263 = vmax.f32 %v1203, 0.0
        %v1264 = vmax.f32 %v1205, 0.0
        %v1265 = vmax.f32 %v1207, 0.0
        %v1266 = vmax.f32 %v1209, 0.0
        %v1267 = vmax.f32 %v1213, 0.0
        %v1268 = vmax.f32 %v1215, 0.0
        %v1269 = vmax.f32 %v1217, 0.0
        %v1270 = vmax.f32 %v1219, 0.0
        %v1271 = vmax.f32 %v1223, 0.0
        %v1272 = vmax.f32 %v1225, 0.0
        %v1273 = vmax.f32 %v1227, 0.0
        %v1274 = vmax.f32 %v1229, 0.0
        %v1275 = vmax.f32 %v1233, 0.0
        %v1276 = vmax.f32 %v1235, 0.0
        %v1277 = vmax.f32 %v1237, 0.0
        %v1278 = vmax.f32 %v1239, 0.0
        %v1279 = vmax.f32 %v1243, 0.0
        %v1280 = vmax.f32 %v1245, 0.0
        %v1281 = vmax.f32 %v1247, 0.0
        %v1282 = vmax.f32 %v1249, 0.0
        %v1283 = vpack.c.bf16 %v1253, %v1251
        %v1284 = vpack.c.bf16 %v1254, %v1252
        %v1285 = vpack.c.bf16 %v1257, %v1255
        %v1286 = vpack.c.bf16 %v1258, %v1256
        %v1287 = vpack.c.bf16 %v1261, %v1259
        %v1288 = vpack.c.bf16 %v1262, %v1260
        %v1289 = vpack.c.bf16 %v1265, %v1263
        %v1290 = vpack.c.bf16 %v1266, %v1264
        %v1291 = vpack.c.bf16 %v1269, %v1267
        %v1292 = vpack.c.bf16 %v1270, %v1268
        %v1293 = vpack.c.bf16 %v1273, %v1271
        %v1294 = vpack.c.bf16 %v1274, %v1272
        %v1295 = vpack.c.bf16 %v1277, %v1275
        %v1296 = vpack.c.bf16 %v1278, %v1276
        %v1297 = vpack.c.bf16 %v1281, %v1279
        %v1298 = vpack.c.bf16 %v1282, %v1280
        %v1299 = vld [vmem:[#allocation5] sm:$0xff]
        %v1300 = vld [vmem:[#allocation5 + $0x8] sm:$0xff]
        %v1301 = vld [vmem:[#allocation5 + $0x10] sm:$0xff]
        %v1302 = vld [vmem:[#allocation5 + $0x18] sm:$0xff]
        %v1303 = vld [vmem:[#allocation5 + $0x20] sm:$0xff]
        %v1304 = vld [vmem:[#allocation5 + $0x28] sm:$0xff]
        %v1305 = vld [vmem:[#allocation5 + $0x30] sm:$0xff]
        %v1306 = vld [vmem:[#allocation5 + $0x38] sm:$0xff]
        %v1307 = vld [vmem:[#allocation5 + $0x40] sm:$0xff]
        %v1308 = vld [vmem:[#allocation5 + $0x48] sm:$0xff]
        %v1309 = vld [vmem:[#allocation5 + $0x50] sm:$0xff]
        %v1310 = vld [vmem:[#allocation5 + $0x58] sm:$0xff]
        %v1311 = vld [vmem:[#allocation5 + $0x60] sm:$0xff]
        %v1312 = vld [vmem:[#allocation5 + $0x68] sm:$0xff]
        %v1313 = vld [vmem:[#allocation5 + $0x70] sm:$0xff]
        %v1314 = vld [vmem:[#allocation5 + $0x78] sm:$0xff]
        %v1315 = vld [vmem:[#allocation5 + $0x80] sm:$0xff]
        %v1316 = vld [vmem:[#allocation5 + $0x88] sm:$0xff]
        %v1317 = vld [vmem:[#allocation5 + $0x90] sm:$0xff]
        %v1318 = vld [vmem:[#allocation5 + $0x98] sm:$0xff]
        %v1319 = vld [vmem:[#allocation5 + $0xa0] sm:$0xff]
        %v1320 = vld [vmem:[#allocation5 + $0xa8] sm:$0xff]
        %v1321 = vld [vmem:[#allocation5 + $0xb0] sm:$0xff]
        %v1322 = vld [vmem:[#allocation5 + $0xb8] sm:$0xff]
        %v1323 = vld [vmem:[#allocation5 + $0xc0] sm:$0xff]
        %v1324 = vld [vmem:[#allocation5 + $0xc8] sm:$0xff]
        %v1325 = vld [vmem:[#allocation5 + $0xd0] sm:$0xff]
        %v1326 = vld [vmem:[#allocation5 + $0xd8] sm:$0xff]
        %v1327 = vld [vmem:[#allocation5 + $0xe0] sm:$0xff]
        %v1328 = vld [vmem:[#allocation5 + $0xe8] sm:$0xff]
        %v1329 = vld [vmem:[#allocation5 + $0xf0] sm:$0xff]
        %v1330 = vld [vmem:[#allocation5 + $0xf8] sm:$0xff]
        %v1331 = vld [vmem:[%s5] sm:$0x3]
        %v1333 = vlaneseq
        %v1334 = vshrl.u32 %v1333, 7
        %v1335 = vsub.s32 0, %v1334
        %v1336 = vrot.slane %v1331, %v1335
        %v1337 = vlaneseq
        %v1338 = vshrl.u32 %v1337, 7
        %v1339 = vsub.s32 1, %v1338
        %v1340 = vrot.slane %v1331, %v1339
        %v1375 = vunpack.c.l.b16 %v1299
        %v1376 = vunpack.c.h.b16 %v1299
        %v1377 = vunpack.c.l.b16 %v1300
        %v1378 = vunpack.c.h.b16 %v1300
        %v1379 = vunpack.c.l.b16 %v1301
        %v1380 = vunpack.c.h.b16 %v1301
        %v1381 = vunpack.c.l.b16 %v1302
        %v1382 = vunpack.c.h.b16 %v1302
        %v1383 = vunpack.c.l.b16 %v1303
        %v1384 = vunpack.c.h.b16 %v1303
        %v1385 = vunpack.c.l.b16 %v1304
        %v1386 = vunpack.c.h.b16 %v1304
        %v1387 = vunpack.c.l.b16 %v1305
        %v1388 = vunpack.c.h.b16 %v1305
        %v1389 = vunpack.c.l.b16 %v1306
        %v1390 = vunpack.c.h.b16 %v1306
        %v1391 = vunpack.c.l.b16 %v1307
        %v1392 = vunpack.c.h.b16 %v1307
        %v1393 = vunpack.c.l.b16 %v1308
        %v1394 = vunpack.c.h.b16 %v1308
        %v1395 = vunpack.c.l.b16 %v1309
        %v1396 = vunpack.c.h.b16 %v1309
        %v1397 = vunpack.c.l.b16 %v1310
        %v1398 = vunpack.c.h.b16 %v1310
        %v1399 = vunpack.c.l.b16 %v1311
        %v1400 = vunpack.c.h.b16 %v1311
        %v1401 = vunpack.c.l.b16 %v1312
        %v1402 = vunpack.c.h.b16 %v1312
        %v1403 = vunpack.c.l.b16 %v1313
        %v1404 = vunpack.c.h.b16 %v1313
        %v1405 = vunpack.c.l.b16 %v1314
        %v1406 = vunpack.c.h.b16 %v1314
        %v1407 = vunpack.c.l.b16 %v1315
        %v1408 = vunpack.c.h.b16 %v1315
        %v1409 = vunpack.c.l.b16 %v1316
        %v1410 = vunpack.c.h.b16 %v1316
        %v1411 = vunpack.c.l.b16 %v1317
        %v1412 = vunpack.c.h.b16 %v1317
        %v1413 = vunpack.c.l.b16 %v1318
        %v1414 = vunpack.c.h.b16 %v1318
        %v1415 = vunpack.c.l.b16 %v1319
        %v1416 = vunpack.c.h.b16 %v1319
        %v1417 = vunpack.c.l.b16 %v1320
        %v1418 = vunpack.c.h.b16 %v1320
        %v1419 = vunpack.c.l.b16 %v1321
        %v1420 = vunpack.c.h.b16 %v1321
        %v1421 = vunpack.c.l.b16 %v1322
        %v1422 = vunpack.c.h.b16 %v1322
        %v1423 = vunpack.c.l.b16 %v1323
        %v1424 = vunpack.c.h.b16 %v1323
        %v1425 = vunpack.c.l.b16 %v1324
        %v1426 = vunpack.c.h.b16 %v1324
        %v1427 = vunpack.c.l.b16 %v1325
        %v1428 = vunpack.c.h.b16 %v1325
        %v1429 = vunpack.c.l.b16 %v1326
        %v1430 = vunpack.c.h.b16 %v1326
        %v1431 = vunpack.c.l.b16 %v1327
        %v1432 = vunpack.c.h.b16 %v1327
        %v1433 = vunpack.c.l.b16 %v1328
        %v1434 = vunpack.c.h.b16 %v1328
        %v1435 = vunpack.c.l.b16 %v1329
        %v1436 = vunpack.c.h.b16 %v1329
        %v1437 = vunpack.c.l.b16 %v1330
        %v1438 = vunpack.c.h.b16 %v1330
        %v1439 = vpack.c.b16 %v1377, %v1375
        %v1440 = vpack.c.b16 %v1378, %v1376
        %v1441 = vpack.c.b16 %v1381, %v1379
        %v1442 = vpack.c.b16 %v1382, %v1380
        %v1443 = vpack.c.b16 %v1385, %v1383
        %v1444 = vpack.c.b16 %v1386, %v1384
        %v1445 = vpack.c.b16 %v1389, %v1387
        %v1446 = vpack.c.b16 %v1390, %v1388
        %v1447 = vpack.c.b16 %v1393, %v1391
        %v1448 = vpack.c.b16 %v1394, %v1392
        %v1449 = vpack.c.b16 %v1397, %v1395
        %v1450 = vpack.c.b16 %v1398, %v1396
        %v1451 = vpack.c.b16 %v1401, %v1399
        %v1452 = vpack.c.b16 %v1402, %v1400
        %v1453 = vpack.c.b16 %v1405, %v1403
        %v1454 = vpack.c.b16 %v1406, %v1404
        %v1455 = vpack.c.b16 %v1409, %v1407
        %v1456 = vpack.c.b16 %v1410, %v1408
        %v1457 = vpack.c.b16 %v1413, %v1411
        %v1458 = vpack.c.b16 %v1414, %v1412
        %v1459 = vpack.c.b16 %v1417, %v1415
        %v1460 = vpack.c.b16 %v1418, %v1416
        %v1461 = vpack.c.b16 %v1421, %v1419
        %v1462 = vpack.c.b16 %v1422, %v1420
        %v1463 = vpack.c.b16 %v1425, %v1423
        %v1464 = vpack.c.b16 %v1426, %v1424
        %v1465 = vpack.c.b16 %v1429, %v1427
        %v1466 = vpack.c.b16 %v1430, %v1428
        %v1467 = vpack.c.b16 %v1433, %v1431
        %v1468 = vpack.c.b16 %v1434, %v1432
        %v1469 = vpack.c.b16 %v1437, %v1435
        %v1470 = vpack.c.b16 %v1438, %v1436
        %1503 = vmatprep.subr.bf16.mxu0 %v1440
        %1504 = vmatpush1.bf16.msra.mxu0 %v1439
        %1505 = vmatprep.subr.bf16.mxu0 %v1442
        %1506 = vmatpush1.bf16.msra.mxu0 %v1441
        %1507 = vmatprep.subr.bf16.mxu0 %v1444
        %1508 = vmatpush1.bf16.msra.mxu0 %v1443
        %1509 = vmatprep.subr.bf16.mxu0 %v1446
        %1510 = vmatpush1.bf16.msra.mxu0 %v1445
        %1511 = vmatprep.subr.bf16.mxu0 %v1448
        %1512 = vmatpush1.bf16.msra.mxu0 %v1447
        %1513 = vmatprep.subr.bf16.mxu0 %v1450
        %1514 = vmatpush1.bf16.msra.mxu0 %v1449
        %1515 = vmatprep.subr.bf16.mxu0 %v1452
        %1516 = vmatpush1.bf16.msra.mxu0 %v1451
        %1517 = vmatprep.subr.bf16.mxu0 %v1454
        %1518 = vmatpush1.bf16.msra.mxu0 %v1453
        %1519 = vmatprep.subr.bf16.mxu0 %v1456
        %1520 = vmatpush1.bf16.msra.mxu0 %v1455
        %1521 = vmatprep.subr.bf16.mxu0 %v1458
        %1522 = vmatpush1.bf16.msra.mxu0 %v1457
        %1523 = vmatprep.subr.bf16.mxu0 %v1460
        %1524 = vmatpush1.bf16.msra.mxu0 %v1459
        %1525 = vmatprep.subr.bf16.mxu0 %v1462
        %1526 = vmatpush1.bf16.msra.mxu0 %v1461
        %1527 = vmatprep.subr.bf16.mxu0 %v1464
        %1528 = vmatpush1.bf16.msra.mxu0 %v1463
        %1529 = vmatprep.subr.bf16.mxu0 %v1466
        %1530 = vmatpush1.bf16.msra.mxu0 %v1465
        %1531 = vmatprep.subr.bf16.mxu0 %v1468
        %1532 = vmatpush1.bf16.msra.mxu0 %v1467
        %1533 = vmatprep.subr.bf16.mxu0 %v1470
        %1534 = vmatpush1.bf16.msra.mxu0 %v1469
        %1535 = vmatprep.mubr.bf16.mxu0 %v1284
        %1536 = vmatmul.mubr.bf16.gmra.mrb[0].mxu0 %v1283
        %v1537 = vpop.f32.mrb[0].mxu0
        %v1538 = vadd.f32 %v1336, %v1537
        %v1539 = vpop.f32.mrb[0].mxu0
        %v1540 = vadd.f32 %v1340, %v1539
        %v1541 = vpop.f32.mrb[0].mxu0
        %v1542 = vadd.f32 %v1336, %v1541
        %v1543 = vpop.f32.mrb[0].mxu0
        %v1544 = vadd.f32 %v1340, %v1543
        %1545 = vmatprep.mubr.bf16.mxu0 %v1286
        %1546 = vmatmul.mubr.bf16.gmra.mrb[0].mxu0 %v1285
        %v1547 = vpop.f32.mrb[0].mxu0
        %v1548 = vadd.f32 %v1336, %v1547
        %v1549 = vpop.f32.mrb[0].mxu0
        %v1550 = vadd.f32 %v1340, %v1549
        %v1551 = vpop.f32.mrb[0].mxu0
        %v1552 = vadd.f32 %v1336, %v1551
        %v1553 = vpop.f32.mrb[0].mxu0
        %v1554 = vadd.f32 %v1340, %v1553
        %1555 = vmatprep.mubr.bf16.mxu0 %v1288
        %1556 = vmatmul.mubr.bf16.gmra.mrb[0].mxu0 %v1287
        %v1557 = vpop.f32.mrb[0].mxu0
        %v1558 = vadd.f32 %v1336, %v1557
        %v1559 = vpop.f32.mrb[0].mxu0
        %v1560 = vadd.f32 %v1340, %v1559
        %v1561 = vpop.f32.mrb[0].mxu0
        %v1562 = vadd.f32 %v1336, %v1561
        %v1563 = vpop.f32.mrb[0].mxu0
        %v1564 = vadd.f32 %v1340, %v1563
        %1565 = vmatprep.mubr.bf16.mxu0 %v1290
        %1566 = vmatmul.mubr.bf16.gmra.mrb[0].mxu0 %v1289
        %v1567 = vpop.f32.mrb[0].mxu0
        %v1568 = vadd.f32 %v1336, %v1567
        %v1569 = vpop.f32.mrb[0].mxu0
        %v1570 = vadd.f32 %v1340, %v1569
        %v1571 = vpop.f32.mrb[0].mxu0
        %v1572 = vadd.f32 %v1336, %v1571
        %v1573 = vpop.f32.mrb[0].mxu0
        %v1574 = vadd.f32 %v1340, %v1573
        %1575 = vmatprep.mubr.bf16.mxu0 %v1292
        %1576 = vmatmul.mubr.bf16.gmra.mrb[0].mxu0 %v1291
        %v1577 = vpop.f32.mrb[0].mxu0
        %v1578 = vadd.f32 %v1336, %v1577
        %v1579 = vpop.f32.mrb[0].mxu0
        %v1580 = vadd.f32 %v1340, %v1579
        %v1581 = vpop.f32.mrb[0].mxu0
        %v1582 = vadd.f32 %v1336, %v1581
        %v1583 = vpop.f32.mrb[0].mxu0
        %v1584 = vadd.f32 %v1340, %v1583
        %1585 = vmatprep.mubr.bf16.mxu0 %v1294
        %1586 = vmatmul.mubr.bf16.gmra.mrb[0].mxu0 %v1293
        %v1587 = vpop.f32.mrb[0].mxu0
        %v1588 = vadd.f32 %v1336, %v1587
        %v1589 = vpop.f32.mrb[0].mxu0
        %v1590 = vadd.f32 %v1340, %v1589
        %v1591 = vpop.f32.mrb[0].mxu0
        %v1592 = vadd.f32 %v1336, %v1591
        %v1593 = vpop.f32.mrb[0].mxu0
        %v1594 = vadd.f32 %v1340, %v1593
        %1595 = vmatprep.mubr.bf16.mxu0 %v1296
        %1596 = vmatmul.mubr.bf16.gmra.mrb[0].mxu0 %v1295
        %v1597 = vpop.f32.mrb[0].mxu0
        %v1598 = vadd.f32 %v1336, %v1597
        %v1599 = vpop.f32.mrb[0].mxu0
        %v1600 = vadd.f32 %v1340, %v1599
        %v1601 = vpop.f32.mrb[0].mxu0
        %v1602 = vadd.f32 %v1336, %v1601
        %v1603 = vpop.f32.mrb[0].mxu0
        %v1604 = vadd.f32 %v1340, %v1603
        %1605 = vmatprep.mubr.bf16.mxu0 %v1298
        %1606 = vmatmul.mubr.bf16.gmra.mrb[0].mxu0 %v1297
        %v1607 = vpop.f32.mrb[0].mxu0
        %v1608 = vadd.f32 %v1336, %v1607
        %v1609 = vpop.f32.mrb[0].mxu0
        %v1610 = vadd.f32 %v1340, %v1609
        %v1611 = vpop.f32.mrb[0].mxu0
        %v1612 = vadd.f32 %v1336, %v1611
        %v1613 = vpop.f32.mrb[0].mxu0
        %v1614 = vadd.f32 %v1340, %v1613
        %1615 = vdwg.mxu0
        %v1616 = vmax.f32 %v1538, 0.0
        %v1617 = vmax.f32 %v1540, 0.0
        %v1618 = vmax.f32 %v1542, 0.0
        %v1619 = vmax.f32 %v1544, 0.0
        %v1620 = vmax.f32 %v1548, 0.0
        %v1621 = vmax.f32 %v1550, 0.0
        %v1622 = vmax.f32 %v1552, 0.0
        %v1623 = vmax.f32 %v1554, 0.0
        %v1624 = vmax.f32 %v1558, 0.0
        %v1625 = vmax.f32 %v1560, 0.0
        %v1626 = vmax.f32 %v1562, 0.0
        %v1627 = vmax.f32 %v1564, 0.0
        %v1628 = vmax.f32 %v1568, 0.0
        %v1629 = vmax.f32 %v1570, 0.0
        %v1630 = vmax.f32 %v1572, 0.0
        %v1631 = vmax.f32 %v1574, 0.0
        %v1632 = vmax.f32 %v1578, 0.0
        %v1633 = vmax.f32 %v1580, 0.0
        %v1634 = vmax.f32 %v1582, 0.0
        %v1635 = vmax.f32 %v1584, 0.0
        %v1636 = vmax.f32 %v1588, 0.0
        %v1637 = vmax.f32 %v1590, 0.0
        %v1638 = vmax.f32 %v1592, 0.0
        %v1639 = vmax.f32 %v1594, 0.0
        %v1640 = vmax.f32 %v1598, 0.0
        %v1641 = vmax.f32 %v1600, 0.0
        %v1642 = vmax.f32 %v1602, 0.0
        %v1643 = vmax.f32 %v1604, 0.0
        %v1644 = vmax.f32 %v1608, 0.0
        %v1645 = vmax.f32 %v1610, 0.0
        %v1646 = vmax.f32 %v1612, 0.0
        %v1647 = vmax.f32 %v1614, 0.0
        %v1648 = vpack.c.bf16 %v1618, %v1616
        %v1649 = vpack.c.bf16 %v1619, %v1617
        %v1650 = vpack.c.bf16 %v1622, %v1620
        %v1651 = vpack.c.bf16 %v1623, %v1621
        %v1652 = vpack.c.bf16 %v1626, %v1624
        %v1653 = vpack.c.bf16 %v1627, %v1625
        %v1654 = vpack.c.bf16 %v1630, %v1628
        %v1655 = vpack.c.bf16 %v1631, %v1629
        %v1656 = vpack.c.bf16 %v1634, %v1632
        %v1657 = vpack.c.bf16 %v1635, %v1633
        %v1658 = vpack.c.bf16 %v1638, %v1636
        %v1659 = vpack.c.bf16 %v1639, %v1637
        %v1660 = vpack.c.bf16 %v1642, %v1640
        %v1661 = vpack.c.bf16 %v1643, %v1641
        %v1662 = vpack.c.bf16 %v1646, %v1644
        %v1663 = vpack.c.bf16 %v1647, %v1645
        %v1664 = vld [vmem:[%s6] sm:$0xff]
        %v1665 = vld [vmem:[%s6 + $0x8] sm:$0xff]
        %v1666 = vld [vmem:[%s6 + $0x10] sm:$0xff]
        %v1667 = vld [vmem:[%s6 + $0x18] sm:$0xff]
        %v1668 = vld [vmem:[%s6 + $0x20] sm:$0xff]
        %v1669 = vld [vmem:[%s6 + $0x28] sm:$0xff]
        %v1670 = vld [vmem:[%s6 + $0x30] sm:$0xff]
        %v1671 = vld [vmem:[%s6 + $0x38] sm:$0xff]
        %v1672 = vld [vmem:[%s6 + $0x40] sm:$0xff]
        %v1673 = vld [vmem:[%s6 + $0x48] sm:$0xff]
        %v1674 = vld [vmem:[%s6 + $0x50] sm:$0xff]
        %v1675 = vld [vmem:[%s6 + $0x58] sm:$0xff]
        %v1676 = vld [vmem:[%s6 + $0x60] sm:$0xff]
        %v1677 = vld [vmem:[%s6 + $0x68] sm:$0xff]
        %v1678 = vld [vmem:[%s6 + $0x70] sm:$0xff]
        %v1679 = vld [vmem:[%s6 + $0x78] sm:$0xff]
        %v1680 = vld [vmem:[%s6 + $0x80] sm:$0xff]
        %v1681 = vld [vmem:[%s6 + $0x88] sm:$0xff]
        %v1682 = vld [vmem:[%s6 + $0x90] sm:$0xff]
        %v1683 = vld [vmem:[%s6 + $0x98] sm:$0xff]
        %v1684 = vld [vmem:[%s6 + $0xa0] sm:$0xff]
        %v1685 = vld [vmem:[%s6 + $0xa8] sm:$0xff]
        %v1686 = vld [vmem:[%s6 + $0xb0] sm:$0xff]
        %v1687 = vld [vmem:[%s6 + $0xb8] sm:$0xff]
        %v1688 = vld [vmem:[%s6 + $0xc0] sm:$0xff]
        %v1689 = vld [vmem:[%s6 + $0xc8] sm:$0xff]
        %v1690 = vld [vmem:[%s6 + $0xd0] sm:$0xff]
        %v1691 = vld [vmem:[%s6 + $0xd8] sm:$0xff]
        %v1692 = vld [vmem:[%s6 + $0xe0] sm:$0xff]
        %v1693 = vld [vmem:[%s6 + $0xe8] sm:$0xff]
        %v1694 = vld [vmem:[%s6 + $0xf0] sm:$0xff]
        %v1695 = vld [vmem:[%s6 + $0xf8] sm:$0xff]
        %v1696 = vld [vmem:[%s6 + $0x100] sm:$0xff]
        %v1697 = vld [vmem:[%s6 + $0x108] sm:$0xff]
        %v1698 = vld [vmem:[%s6 + $0x110] sm:$0xff]
        %v1699 = vld [vmem:[%s6 + $0x118] sm:$0xff]
        %v1700 = vld [vmem:[%s6 + $0x120] sm:$0xff]
        %v1701 = vld [vmem:[%s6 + $0x128] sm:$0xff]
        %v1702 = vld [vmem:[%s6 + $0x130] sm:$0xff]
        %v1703 = vld [vmem:[%s6 + $0x138] sm:$0xff]
        %v1704 = vld [vmem:[%s6 + $0x140] sm:$0xff]
        %v1705 = vld [vmem:[%s6 + $0x148] sm:$0xff]
        %v1706 = vld [vmem:[%s6 + $0x150] sm:$0xff]
        %v1707 = vld [vmem:[%s6 + $0x158] sm:$0xff]
        %v1708 = vld [vmem:[%s6 + $0x160] sm:$0xff]
        %v1709 = vld [vmem:[%s6 + $0x168] sm:$0xff]
        %v1710 = vld [vmem:[%s6 + $0x170] sm:$0xff]
        %v1711 = vld [vmem:[%s6 + $0x178] sm:$0xff]
        %v1712 = vld [vmem:[%s6 + $0x180] sm:$0xff]
        %v1713 = vld [vmem:[%s6 + $0x188] sm:$0xff]
        %v1714 = vld [vmem:[%s6 + $0x190] sm:$0xff]
        %v1715 = vld [vmem:[%s6 + $0x198] sm:$0xff]
        %v1716 = vld [vmem:[%s6 + $0x1a0] sm:$0xff]
        %v1717 = vld [vmem:[%s6 + $0x1a8] sm:$0xff]
        %v1718 = vld [vmem:[%s6 + $0x1b0] sm:$0xff]
        %v1719 = vld [vmem:[%s6 + $0x1b8] sm:$0xff]
        %v1720 = vld [vmem:[%s6 + $0x1c0] sm:$0xff]
        %v1721 = vld [vmem:[%s6 + $0x1c8] sm:$0xff]
        %v1722 = vld [vmem:[%s6 + $0x1d0] sm:$0xff]
        %v1723 = vld [vmem:[%s6 + $0x1d8] sm:$0xff]
        %v1724 = vld [vmem:[%s6 + $0x1e0] sm:$0xff]
        %v1725 = vld [vmem:[%s6 + $0x1e8] sm:$0xff]
        %v1726 = vld [vmem:[%s6 + $0x1f0] sm:$0xff]
        %v1727 = vld [vmem:[%s6 + $0x1f8] sm:$0xff]
        %v1728 = vld [vmem:[%s7] sm:$0xf]
        %v1730 = vlaneseq
        %v1731 = vshrl.u32 %v1730, 7
        %v1732 = vsub.s32 0, %v1731
        %v1733 = vrot.slane %v1728, %v1732
        %v1734 = vlaneseq
        %v1735 = vshrl.u32 %v1734, 7
        %v1736 = vsub.s32 1, %v1735
        %v1737 = vrot.slane %v1728, %v1736
        %v1738 = vlaneseq
        %v1739 = vshrl.u32 %v1738, 7
        %v1740 = vsub.s32 2, %v1739
        %v1741 = vrot.slane %v1728, %v1740
        %v1742 = vlaneseq
        %v1743 = vshrl.u32 %v1742, 7
        %v1744 = vsub.s32 3, %v1743
        %v1745 = vrot.slane %v1728, %v1744
        %v1814 = vunpack.c.l.b16 %v1664
        %v1815 = vunpack.c.h.b16 %v1664
        %v1816 = vunpack.c.l.b16 %v1665
        %v1817 = vunpack.c.h.b16 %v1665
        %v1818 = vunpack.c.l.b16 %v1666
        %v1819 = vunpack.c.h.b16 %v1666
        %v1820 = vunpack.c.l.b16 %v1667
        %v1821 = vunpack.c.h.b16 %v1667
        %v1822 = vunpack.c.l.b16 %v1668
        %v1823 = vunpack.c.h.b16 %v1668
        %v1824 = vunpack.c.l.b16 %v1669
        %v1825 = vunpack.c.h.b16 %v1669
        %v1826 = vunpack.c.l.b16 %v1670
        %v1827 = vunpack.c.h.b16 %v1670
        %v1828 = vunpack.c.l.b16 %v1671
        %v1829 = vunpack.c.h.b16 %v1671
        %v1830 = vunpack.c.l.b16 %v1672
        %v1831 = vunpack.c.h.b16 %v1672
        %v1832 = vunpack.c.l.b16 %v1673
        %v1833 = vunpack.c.h.b16 %v1673
        %v1834 = vunpack.c.l.b16 %v1674
        %v1835 = vunpack.c.h.b16 %v1674
        %v1836 = vunpack.c.l.b16 %v1675
        %v1837 = vunpack.c.h.b16 %v1675
        %v1838 = vunpack.c.l.b16 %v1676
        %v1839 = vunpack.c.h.b16 %v1676
        %v1840 = vunpack.c.l.b16 %v1677
        %v1841 = vunpack.c.h.b16 %v1677
        %v1842 = vunpack.c.l.b16 %v1678
        %v1843 = vunpack.c.h.b16 %v1678
        %v1844 = vunpack.c.l.b16 %v1679
        %v1845 = vunpack.c.h.b16 %v1679
        %v1846 = vunpack.c.l.b16 %v1680
        %v1847 = vunpack.c.h.b16 %v1680
        %v1848 = vunpack.c.l.b16 %v1681
        %v1849 = vunpack.c.h.b16 %v1681
        %v1850 = vunpack.c.l.b16 %v1682
        %v1851 = vunpack.c.h.b16 %v1682
        %v1852 = vunpack.c.l.b16 %v1683
        %v1853 = vunpack.c.h.b16 %v1683
        %v1854 = vunpack.c.l.b16 %v1684
        %v1855 = vunpack.c.h.b16 %v1684
        %v1856 = vunpack.c.l.b16 %v1685
        %v1857 = vunpack.c.h.b16 %v1685
        %v1858 = vunpack.c.l.b16 %v1686
        %v1859 = vunpack.c.h.b16 %v1686
        %v1860 = vunpack.c.l.b16 %v1687
        %v1861 = vunpack.c.h.b16 %v1687
        %v1862 = vunpack.c.l.b16 %v1688
        %v1863 = vunpack.c.h.b16 %v1688
        %v1864 = vunpack.c.l.b16 %v1689
        %v1865 = vunpack.c.h.b16 %v1689
        %v1866 = vunpack.c.l.b16 %v1690
        %v1867 = vunpack.c.h.b16 %v1690
        %v1868 = vunpack.c.l.b16 %v1691
        %v1869 = vunpack.c.h.b16 %v1691
        %v1870 = vunpack.c.l.b16 %v1692
        %v1871 = vunpack.c.h.b16 %v1692
        %v1872 = vunpack.c.l.b16 %v1693
        %v1873 = vunpack.c.h.b16 %v1693
        %v1874 = vunpack.c.l.b16 %v1694
        %v1875 = vunpack.c.h.b16 %v1694
        %v1876 = vunpack.c.l.b16 %v1695
        %v1877 = vunpack.c.h.b16 %v1695
        %v1878 = vunpack.c.l.b16 %v1696
        %v1879 = vunpack.c.h.b16 %v1696
        %v1880 = vunpack.c.l.b16 %v1697
        %v1881 = vunpack.c.h.b16 %v1697
        %v1882 = vunpack.c.l.b16 %v1698
        %v1883 = vunpack.c.h.b16 %v1698
        %v1884 = vunpack.c.l.b16 %v1699
        %v1885 = vunpack.c.h.b16 %v1699
        %v1886 = vunpack.c.l.b16 %v1700
        %v1887 = vunpack.c.h.b16 %v1700
        %v1888 = vunpack.c.l.b16 %v1701
        %v1889 = vunpack.c.h.b16 %v1701
        %v1890 = vunpack.c.l.b16 %v1702
        %v1891 = vunpack.c.h.b16 %v1702
        %v1892 = vunpack.c.l.b16 %v1703
        %v1893 = vunpack.c.h.b16 %v1703
        %v1894 = vunpack.c.l.b16 %v1704
        %v1895 = vunpack.c.h.b16 %v1704
        %v1896 = vunpack.c.l.b16 %v1705
        %v1897 = vunpack.c.h.b16 %v1705
        %v1898 = vunpack.c.l.b16 %v1706
        %v1899 = vunpack.c.h.b16 %v1706
        %v1900 = vunpack.c.l.b16 %v1707
        %v1901 = vunpack.c.h.b16 %v1707
        %v1902 = vunpack.c.l.b16 %v1708
        %v1903 = vunpack.c.h.b16 %v1708
        %v1904 = vunpack.c.l.b16 %v1709
        %v1905 = vunpack.c.h.b16 %v1709
        %v1906 = vunpack.c.l.b16 %v1710
        %v1907 = vunpack.c.h.b16 %v1710
        %v1908 = vunpack.c.l.b16 %v1711
        %v1909 = vunpack.c.h.b16 %v1711
        %v1910 = vunpack.c.l.b16 %v1712
        %v1911 = vunpack.c.h.b16 %v1712
        %v1912 = vunpack.c.l.b16 %v1713
        %v1913 = vunpack.c.h.b16 %v1713
        %v1914 = vunpack.c.l.b16 %v1714
        %v1915 = vunpack.c.h.b16 %v1714
        %v1916 = vunpack.c.l.b16 %v1715
        %v1917 = vunpack.c.h.b16 %v1715
        %v1918 = vunpack.c.l.b16 %v1716
        %v1919 = vunpack.c.h.b16 %v1716
        %v1920 = vunpack.c.l.b16 %v1717
        %v1921 = vunpack.c.h.b16 %v1717
        %v1922 = vunpack.c.l.b16 %v1718
        %v1923 = vunpack.c.h.b16 %v1718
        %v1924 = vunpack.c.l.b16 %v1719
        %v1925 = vunpack.c.h.b16 %v1719
        %v1926 = vunpack.c.l.b16 %v1720
        %v1927 = vunpack.c.h.b16 %v1720
        %v1928 = vunpack.c.l.b16 %v1721
        %v1929 = vunpack.c.h.b16 %v1721
        %v1930 = vunpack.c.l.b16 %v1722
        %v1931 = vunpack.c.h.b16 %v1722
        %v1932 = vunpack.c.l.b16 %v1723
        %v1933 = vunpack.c.h.b16 %v1723
        %v1934 = vunpack.c.l.b16 %v1724
        %v1935 = vunpack.c.h.b16 %v1724
        %v1936 = vunpack.c.l.b16 %v1725
        %v1937 = vunpack.c.h.b16 %v1725
        %v1938 = vunpack.c.l.b16 %v1726
        %v1939 = vunpack.c.h.b16 %v1726
        %v1940 = vunpack.c.l.b16 %v1727
        %v1941 = vunpack.c.h.b16 %v1727
        %v1942 = vpack.c.b16 %v1818, %v1814
        %v1943 = vpack.c.b16 %v1819, %v1815
        %v1944 = vpack.c.b16 %v1820, %v1816
        %v1945 = vpack.c.b16 %v1821, %v1817
        %v1946 = vpack.c.b16 %v1826, %v1822
        %v1947 = vpack.c.b16 %v1827, %v1823
        %v1948 = vpack.c.b16 %v1828, %v1824
        %v1949 = vpack.c.b16 %v1829, %v1825
        %v1950 = vpack.c.b16 %v1834, %v1830
        %v1951 = vpack.c.b16 %v1835, %v1831
        %v1952 = vpack.c.b16 %v1836, %v1832
        %v1953 = vpack.c.b16 %v1837, %v1833
        %v1954 = vpack.c.b16 %v1842, %v1838
        %v1955 = vpack.c.b16 %v1843, %v1839
        %v1956 = vpack.c.b16 %v1844, %v1840
        %v1957 = vpack.c.b16 %v1845, %v1841
        %v1958 = vpack.c.b16 %v1850, %v1846
        %v1959 = vpack.c.b16 %v1851, %v1847
        %v1960 = vpack.c.b16 %v1852, %v1848
        %v1961 = vpack.c.b16 %v1853, %v1849
        %v1962 = vpack.c.b16 %v1858, %v1854
        %v1963 = vpack.c.b16 %v1859, %v1855
        %v1964 = vpack.c.b16 %v1860, %v1856
        %v1965 = vpack.c.b16 %v1861, %v1857
        %v1966 = vpack.c.b16 %v1866, %v1862
        %v1967 = vpack.c.b16 %v1867, %v1863
        %v1968 = vpack.c.b16 %v1868, %v1864
        %v1969 = vpack.c.b16 %v1869, %v1865
        %v1970 = vpack.c.b16 %v1874, %v1870
        %v1971 = vpack.c.b16 %v1875, %v1871
        %v1972 = vpack.c.b16 %v1876, %v1872
        %v1973 = vpack.c.b16 %v1877, %v1873
        %v1974 = vpack.c.b16 %v1882, %v1878
        %v1975 = vpack.c.b16 %v1883, %v1879
        %v1976 = vpack.c.b16 %v1884, %v1880
        %v1977 = vpack.c.b16 %v1885, %v1881
        %v1978 = vpack.c.b16 %v1890, %v1886
        %v1979 = vpack.c.b16 %v1891, %v1887
        %v1980 = vpack.c.b16 %v1892, %v1888
        %v1981 = vpack.c.b16 %v1893, %v1889
        %v1982 = vpack.c.b16 %v1898, %v1894
        %v1983 = vpack.c.b16 %v1899, %v1895
        %v1984 = vpack.c.b16 %v1900, %v1896
        %v1985 = vpack.c.b16 %v1901, %v1897
        %v1986 = vpack.c.b16 %v1906, %v1902
        %v1987 = vpack.c.b16 %v1907, %v1903
        %v1988 = vpack.c.b16 %v1908, %v1904
        %v1989 = vpack.c.b16 %v1909, %v1905
        %v1990 = vpack.c.b16 %v1914, %v1910
        %v1991 = vpack.c.b16 %v1915, %v1911
        %v1992 = vpack.c.b16 %v1916, %v1912
        %v1993 = vpack.c.b16 %v1917, %v1913
        %v1994 = vpack.c.b16 %v1922, %v1918
        %v1995 = vpack.c.b16 %v1923, %v1919
        %v1996 = vpack.c.b16 %v1924, %v1920
        %v1997 = vpack.c.b16 %v1925, %v1921
        %v1998 = vpack.c.b16 %v1930, %v1926
        %v1999 = vpack.c.b16 %v1931, %v1927
        %v2000 = vpack.c.b16 %v1932, %v1928
        %v2001 = vpack.c.b16 %v1933, %v1929
        %v2002 = vpack.c.b16 %v1938, %v1934
        %v2003 = vpack.c.b16 %v1939, %v1935
        %v2004 = vpack.c.b16 %v1940, %v1936
        %v2005 = vpack.c.b16 %v1941, %v1937
        %2070 = vmatprep.subr.bf16.mxu0 %v1943
        %2071 = vmatpush1.bf16.msra.mxu0 %v1942
        %2072 = vmatprep.subr.bf16.mxu0 %v1947
        %2073 = vmatpush1.bf16.msra.mxu0 %v1946
        %2074 = vmatprep.subr.bf16.mxu0 %v1951
        %2075 = vmatpush1.bf16.msra.mxu0 %v1950
        %2076 = vmatprep.subr.bf16.mxu0 %v1955
        %2077 = vmatpush1.bf16.msra.mxu0 %v1954
        %2078 = vmatprep.subr.bf16.mxu0 %v1959
        %2079 = vmatpush1.bf16.msra.mxu0 %v1958
        %2080 = vmatprep.subr.bf16.mxu0 %v1963
        %2081 = vmatpush1.bf16.msra.mxu0 %v1962
        %2082 = vmatprep.subr.bf16.mxu0 %v1967
        %2083 = vmatpush1.bf16.msra.mxu0 %v1966
        %2084 = vmatprep.subr.bf16.mxu0 %v1971
        %2085 = vmatpush1.bf16.msra.mxu0 %v1970
        %2086 = vmatprep.subr.bf16.mxu0 %v1975
        %2087 = vmatpush1.bf16.msra.mxu0 %v1974
        %2088 = vmatprep.subr.bf16.mxu0 %v1979
        %2089 = vmatpush1.bf16.msra.mxu0 %v1978
        %2090 = vmatprep.subr.bf16.mxu0 %v1983
        %2091 = vmatpush1.bf16.msra.mxu0 %v1982
        %2092 = vmatprep.subr.bf16.mxu0 %v1987
        %2093 = vmatpush1.bf16.msra.mxu0 %v1986
        %2094 = vmatprep.subr.bf16.mxu0 %v1991
        %2095 = vmatpush1.bf16.msra.mxu0 %v1990
        %2096 = vmatprep.subr.bf16.mxu0 %v1995
        %2097 = vmatpush1.bf16.msra.mxu0 %v1994
        %2098 = vmatprep.subr.bf16.mxu0 %v1999
        %2099 = vmatpush1.bf16.msra.mxu0 %v1998
        %2100 = vmatprep.subr.bf16.mxu0 %v2003
        %2101 = vmatpush1.bf16.msra.mxu0 %v2002
        %2102 = vmatprep.mubr.bf16.mxu0 %v1649
        %2103 = vmatmul.mubr.bf16.gmra.mrb[0].mxu0 %v1648
        %v2104 = vpop.f32.mrb[0].mxu0
        %v2105 = vadd.f32 %v1733, %v2104
        %v2106 = vpop.f32.mrb[0].mxu0
        %v2107 = vadd.f32 %v1737, %v2106
        %v2108 = vpop.f32.mrb[0].mxu0
        %v2109 = vadd.f32 %v1733, %v2108
        %v2110 = vpop.f32.mrb[0].mxu0
        %v2111 = vadd.f32 %v1737, %v2110
        %2112 = vmatprep.mubr.bf16.mxu0 %v1651
        %2113 = vmatmul.mubr.bf16.gmra.mrb[0].mxu0 %v1650
        %v2114 = vpop.f32.mrb[0].mxu0
        %v2115 = vadd.f32 %v1733, %v2114
        %v2116 = vpop.f32.mrb[0].mxu0
        %v2117 = vadd.f32 %v1737, %v2116
        %v2118 = vpop.f32.mrb[0].mxu0
        %v2119 = vadd.f32 %v1733, %v2118
        %v2120 = vpop.f32.mrb[0].mxu0
        %v2121 = vadd.f32 %v1737, %v2120
        %2122 = vmatprep.mubr.bf16.mxu0 %v1653
        %2123 = vmatmul.mubr.bf16.gmra.mrb[0].mxu0 %v1652
        %v2124 = vpop.f32.mrb[0].mxu0
        %v2125 = vadd.f32 %v1733, %v2124
        %v2126 = vpop.f32.mrb[0].mxu0
        %v2127 = vadd.f32 %v1737, %v2126
        %v2128 = vpop.f32.mrb[0].mxu0
        %v2129 = vadd.f32 %v1733, %v2128
        %v2130 = vpop.f32.mrb[0].mxu0
        %v2131 = vadd.f32 %v1737, %v2130
        %2132 = vmatprep.mubr.bf16.mxu0 %v1655
        %2133 = vmatmul.mubr.bf16.gmra.mrb[0].mxu0 %v1654
        %v2134 = vpop.f32.mrb[0].mxu0
        %v2135 = vadd.f32 %v1733, %v2134
        %v2136 = vpop.f32.mrb[0].mxu0
        %v2137 = vadd.f32 %v1737, %v2136
        %v2138 = vpop.f32.mrb[0].mxu0
        %v2139 = vadd.f32 %v1733, %v2138
        %v2140 = vpop.f32.mrb[0].mxu0
        %v2141 = vadd.f32 %v1737, %v2140
        %2142 = vmatprep.mubr.bf16.mxu0 %v1657
        %2143 = vmatmul.mubr.bf16.gmra.mrb[0].mxu0 %v1656
        %v2144 = vpop.f32.mrb[0].mxu0
        %v2145 = vadd.f32 %v1733, %v2144
        %v2146 = vpop.f32.mrb[0].mxu0
        %v2147 = vadd.f32 %v1737, %v2146
        %v2148 = vpop.f32.mrb[0].mxu0
        %v2149 = vadd.f32 %v1733, %v2148
        %v2150 = vpop.f32.mrb[0].mxu0
        %v2151 = vadd.f32 %v1737, %v2150
        %2152 = vmatprep.mubr.bf16.mxu0 %v1659
        %2153 = vmatmul.mubr.bf16.gmra.mrb[0].mxu0 %v1658
        %v2154 = vpop.f32.mrb[0].mxu0
        %v2155 = vadd.f32 %v1733, %v2154
        %v2156 = vpop.f32.mrb[0].mxu0
        %v2157 = vadd.f32 %v1737, %v2156
        %v2158 = vpop.f32.mrb[0].mxu0
        %v2159 = vadd.f32 %v1733, %v2158
        %v2160 = vpop.f32.mrb[0].mxu0
        %v2161 = vadd.f32 %v1737, %v2160
        %2162 = vmatprep.mubr.bf16.mxu0 %v1661
        %2163 = vmatmul.mubr.bf16.gmra.mrb[0].mxu0 %v1660
        %v2164 = vpop.f32.mrb[0].mxu0
        %v2165 = vadd.f32 %v1733, %v2164
        %v2166 = vpop.f32.mrb[0].mxu0
        %v2167 = vadd.f32 %v1737, %v2166
        %v2168 = vpop.f32.mrb[0].mxu0
        %v2169 = vadd.f32 %v1733, %v2168
        %v2170 = vpop.f32.mrb[0].mxu0
        %v2171 = vadd.f32 %v1737, %v2170
        %2172 = vmatprep.mubr.bf16.mxu0 %v1663
        %2173 = vmatmul.mubr.bf16.gmra.mrb[0].mxu0 %v1662
        %v2174 = vpop.f32.mrb[0].mxu0
        %v2175 = vadd.f32 %v1733, %v2174
        %v2176 = vpop.f32.mrb[0].mxu0
        %v2177 = vadd.f32 %v1737, %v2176
        %v2178 = vpop.f32.mrb[0].mxu0
        %v2179 = vadd.f32 %v1733, %v2178
        %v2180 = vpop.f32.mrb[0].mxu0
        %v2181 = vadd.f32 %v1737, %v2180
        %2182 = vdwg.mxu0
        %2183 = vmatprep.subr.bf16.mxu0 %v1945
        %2184 = vmatpush1.bf16.msra.mxu0 %v1944
        %2185 = vmatprep.subr.bf16.mxu0 %v1949
        %2186 = vmatpush1.bf16.msra.mxu0 %v1948
        %2187 = vmatprep.subr.bf16.mxu0 %v1953
        %2188 = vmatpush1.bf16.msra.mxu0 %v1952
        %2189 = vmatprep.subr.bf16.mxu0 %v1957
        %2190 = vmatpush1.bf16.msra.mxu0 %v1956
        %2191 = vmatprep.subr.bf16.mxu0 %v1961
        %2192 = vmatpush1.bf16.msra.mxu0 %v1960
        %2193 = vmatprep.subr.bf16.mxu0 %v1965
        %2194 = vmatpush1.bf16.msra.mxu0 %v1964
        %2195 = vmatprep.subr.bf16.mxu0 %v1969
        %2196 = vmatpush1.bf16.msra.mxu0 %v1968
        %2197 = vmatprep.subr.bf16.mxu0 %v1973
        %2198 = vmatpush1.bf16.msra.mxu0 %v1972
        %2199 = vmatprep.subr.bf16.mxu0 %v1977
        %2200 = vmatpush1.bf16.msra.mxu0 %v1976
        %2201 = vmatprep.subr.bf16.mxu0 %v1981
        %2202 = vmatpush1.bf16.msra.mxu0 %v1980
        %2203 = vmatprep.subr.bf16.mxu0 %v1985
        %2204 = vmatpush1.bf16.msra.mxu0 %v1984
        %2205 = vmatprep.subr.bf16.mxu0 %v1989
        %2206 = vmatpush1.bf16.msra.mxu0 %v1988
        %2207 = vmatprep.subr.bf16.mxu0 %v1993
        %2208 = vmatpush1.bf16.msra.mxu0 %v1992
        %2209 = vmatprep.subr.bf16.mxu0 %v1997
        %2210 = vmatpush1.bf16.msra.mxu0 %v1996
        %2211 = vmatprep.subr.bf16.mxu0 %v2001
        %2212 = vmatpush1.bf16.msra.mxu0 %v2000
        %2213 = vmatprep.subr.bf16.mxu0 %v2005
        %2214 = vmatpush1.bf16.msra.mxu0 %v2004
        %2215 = vmatprep.mubr.bf16.mxu0 %v1649
        %2216 = vmatmul.mubr.bf16.gmra.mrb[0].mxu0 %v1648
        %v2217 = vpop.f32.mrb[0].mxu0
        %v2218 = vadd.f32 %v1741, %v2217
        %v2219 = vpop.f32.mrb[0].mxu0
        %v2220 = vadd.f32 %v1745, %v2219
        %v2221 = vpop.f32.mrb[0].mxu0
        %v2222 = vadd.f32 %v1741, %v2221
        %v2223 = vpop.f32.mrb[0].mxu0
        %v2224 = vadd.f32 %v1745, %v2223
        %2225 = vmatprep.mubr.bf16.mxu0 %v1651
        %2226 = vmatmul.mubr.bf16.gmra.mrb[0].mxu0 %v1650
        %v2227 = vpop.f32.mrb[0].mxu0
        %v2228 = vadd.f32 %v1741, %v2227
        %v2229 = vpop.f32.mrb[0].mxu0
        %v2230 = vadd.f32 %v1745, %v2229
        %v2231 = vpop.f32.mrb[0].mxu0
        %v2232 = vadd.f32 %v1741, %v2231
        %v2233 = vpop.f32.mrb[0].mxu0
        %v2234 = vadd.f32 %v1745, %v2233
        %2235 = vmatprep.mubr.bf16.mxu0 %v1653
        %2236 = vmatmul.mubr.bf16.gmra.mrb[0].mxu0 %v1652
        %v2237 = vpop.f32.mrb[0].mxu0
        %v2238 = vadd.f32 %v1741, %v2237
        %v2239 = vpop.f32.mrb[0].mxu0
        %v2240 = vadd.f32 %v1745, %v2239
        %v2241 = vpop.f32.mrb[0].mxu0
        %v2242 = vadd.f32 %v1741, %v2241
        %v2243 = vpop.f32.mrb[0].mxu0
        %v2244 = vadd.f32 %v1745, %v2243
        %2245 = vmatprep.mubr.bf16.mxu0 %v1655
        %2246 = vmatmul.mubr.bf16.gmra.mrb[0].mxu0 %v1654
        %v2247 = vpop.f32.mrb[0].mxu0
        %v2248 = vadd.f32 %v1741, %v2247
        %v2249 = vpop.f32.mrb[0].mxu0
        %v2250 = vadd.f32 %v1745, %v2249
        %v2251 = vpop.f32.mrb[0].mxu0
        %v2252 = vadd.f32 %v1741, %v2251
        %v2253 = vpop.f32.mrb[0].mxu0
        %v2254 = vadd.f32 %v1745, %v2253
        %2255 = vmatprep.mubr.bf16.mxu0 %v1657
        %2256 = vmatmul.mubr.bf16.gmra.mrb[0].mxu0 %v1656
        %v2257 = vpop.f32.mrb[0].mxu0
        %v2258 = vadd.f32 %v1741, %v2257
        %v2259 = vpop.f32.mrb[0].mxu0
        %v2260 = vadd.f32 %v1745, %v2259
        %v2261 = vpop.f32.mrb[0].mxu0
        %v2262 = vadd.f32 %v1741, %v2261
        %v2263 = vpop.f32.mrb[0].mxu0
        %v2264 = vadd.f32 %v1745, %v2263
        %2265 = vmatprep.mubr.bf16.mxu0 %v1659
        %2266 = vmatmul.mubr.bf16.gmra.mrb[0].mxu0 %v1658
        %v2267 = vpop.f32.mrb[0].mxu0
        %v2268 = vadd.f32 %v1741, %v2267
        %v2269 = vpop.f32.mrb[0].mxu0
        %v2270 = vadd.f32 %v1745, %v2269
        %v2271 = vpop.f32.mrb[0].mxu0
        %v2272 = vadd.f32 %v1741, %v2271
        %v2273 = vpop.f32.mrb[0].mxu0
        %v2274 = vadd.f32 %v1745, %v2273
        %2275 = vmatprep.mubr.bf16.mxu0 %v1661
        %2276 = vmatmul.mubr.bf16.gmra.mrb[0].mxu0 %v1660
        %v2277 = vpop.f32.mrb[0].mxu0
        %v2278 = vadd.f32 %v1741, %v2277
        %v2279 = vpop.f32.mrb[0].mxu0
        %v2280 = vadd.f32 %v1745, %v2279
        %v2281 = vpop.f32.mrb[0].mxu0
        %v2282 = vadd.f32 %v1741, %v2281
        %v2283 = vpop.f32.mrb[0].mxu0
        %v2284 = vadd.f32 %v1745, %v2283
        %2285 = vmatprep.mubr.bf16.mxu0 %v1663
        %2286 = vmatmul.mubr.bf16.gmra.mrb[0].mxu0 %v1662
        %v2287 = vpop.f32.mrb[0].mxu0
        %v2288 = vadd.f32 %v1741, %v2287
        %v2289 = vpop.f32.mrb[0].mxu0
        %v2290 = vadd.f32 %v1745, %v2289
        %v2291 = vpop.f32.mrb[0].mxu0
        %v2292 = vadd.f32 %v1741, %v2291
        %v2293 = vpop.f32.mrb[0].mxu0
        %v2294 = vadd.f32 %v1745, %v2293
        %2295 = vdwg.mxu0
        %vm2296 = vcmp.gt.f32.partialorder %v2105, 0.0
        %vm2297 = vcmp.gt.f32.partialorder %v2107, 0.0
        %vm2298 = vcmp.gt.f32.partialorder %v2218, 0.0
        %vm2299 = vcmp.gt.f32.partialorder %v2220, 0.0
        %vm2300 = vcmp.gt.f32.partialorder %v2109, 0.0
        %vm2301 = vcmp.gt.f32.partialorder %v2111, 0.0
        %vm2302 = vcmp.gt.f32.partialorder %v2222, 0.0
        %vm2303 = vcmp.gt.f32.partialorder %v2224, 0.0
        %vm2304 = vcmp.gt.f32.partialorder %v2115, 0.0
        %vm2305 = vcmp.gt.f32.partialorder %v2117, 0.0
        %vm2306 = vcmp.gt.f32.partialorder %v2228, 0.0
        %vm2307 = vcmp.gt.f32.partialorder %v2230, 0.0
        %vm2308 = vcmp.gt.f32.partialorder %v2119, 0.0
        %vm2309 = vcmp.gt.f32.partialorder %v2121, 0.0
        %vm2310 = vcmp.gt.f32.partialorder %v2232, 0.0
        %vm2311 = vcmp.gt.f32.partialorder %v2234, 0.0
        %vm2312 = vcmp.gt.f32.partialorder %v2125, 0.0
        %vm2313 = vcmp.gt.f32.partialorder %v2127, 0.0
        %vm2314 = vcmp.gt.f32.partialorder %v2238, 0.0
        %vm2315 = vcmp.gt.f32.partialorder %v2240, 0.0
        %vm2316 = vcmp.gt.f32.partialorder %v2129, 0.0
        %vm2317 = vcmp.gt.f32.partialorder %v2131, 0.0
        %vm2318 = vcmp.gt.f32.partialorder %v2242, 0.0
        %vm2319 = vcmp.gt.f32.partialorder %v2244, 0.0
        %vm2320 = vcmp.gt.f32.partialorder %v2135, 0.0
        %vm2321 = vcmp.gt.f32.partialorder %v2137, 0.0
        %vm2322 = vcmp.gt.f32.partialorder %v2248, 0.0
        %vm2323 = vcmp.gt.f32.partialorder %v2250, 0.0
        %vm2324 = vcmp.gt.f32.partialorder %v2139, 0.0
        %vm2325 = vcmp.gt.f32.partialorder %v2141, 0.0
        %vm2326 = vcmp.gt.f32.partialorder %v2252, 0.0
        %vm2327 = vcmp.gt.f32.partialorder %v2254, 0.0
        %vm2328 = vcmp.gt.f32.partialorder %v2145, 0.0
        %vm2329 = vcmp.gt.f32.partialorder %v2147, 0.0
        %vm2330 = vcmp.gt.f32.partialorder %v2258, 0.0
        %vm2331 = vcmp.gt.f32.partialorder %v2260, 0.0
        %vm2332 = vcmp.gt.f32.partialorder %v2149, 0.0
        %vm2333 = vcmp.gt.f32.partialorder %v2151, 0.0
        %vm2334 = vcmp.gt.f32.partialorder %v2262, 0.0
        %vm2335 = vcmp.gt.f32.partialorder %v2264, 0.0
        %vm2336 = vcmp.gt.f32.partialorder %v2155, 0.0
        %vm2337 = vcmp.gt.f32.partialorder %v2157, 0.0
        %vm2338 = vcmp.gt.f32.partialorder %v2268, 0.0
        %vm2339 = vcmp.gt.f32.partialorder %v2270, 0.0
        %vm2340 = vcmp.gt.f32.partialorder %v2159, 0.0
        %vm2341 = vcmp.gt.f32.partialorder %v2161, 0.0
        %vm2342 = vcmp.gt.f32.partialorder %v2272, 0.0
        %vm2343 = vcmp.gt.f32.partialorder %v2274, 0.0
        %vm2344 = vcmp.gt.f32.partialorder %v2165, 0.0
        %vm2345 = vcmp.gt.f32.partialorder %v2167, 0.0
        %vm2346 = vcmp.gt.f32.partialorder %v2278, 0.0
        %vm2347 = vcmp.gt.f32.partialorder %v2280, 0.0
        %vm2348 = vcmp.gt.f32.partialorder %v2169, 0.0
        %vm2349 = vcmp.gt.f32.partialorder %v2171, 0.0
        %vm2350 = vcmp.gt.f32.partialorder %v2282, 0.0
        %vm2351 = vcmp.gt.f32.partialorder %v2284, 0.0
        %vm2352 = vcmp.gt.f32.partialorder %v2175, 0.0
        %vm2353 = vcmp.gt.f32.partialorder %v2177, 0.0
        %vm2354 = vcmp.gt.f32.partialorder %v2288, 0.0
        %vm2355 = vcmp.gt.f32.partialorder %v2290, 0.0
        %vm2356 = vcmp.gt.f32.partialorder %v2179, 0.0
        %vm2357 = vcmp.gt.f32.partialorder %v2181, 0.0
        %vm2358 = vcmp.gt.f32.partialorder %v2292, 0.0
        %vm2359 = vcmp.gt.f32.partialorder %v2294, 0.0
        %v2360 = vmul.f32 %v2105, 0.01
        %v2361 = vmul.f32 %v2107, 0.01
        %v2362 = vmul.f32 %v2218, 0.01
        %v2363 = vmul.f32 %v2220, 0.01
        %v2364 = vmul.f32 %v2109, 0.01
        %v2365 = vmul.f32 %v2111, 0.01
        %v2366 = vmul.f32 %v2222, 0.01
        %v2367 = vmul.f32 %v2224, 0.01
        %v2368 = vmul.f32 %v2115, 0.01
        %v2369 = vmul.f32 %v2117, 0.01
        %v2370 = vmul.f32 %v2228, 0.01
        %v2371 = vmul.f32 %v2230, 0.01
        %v2372 = vmul.f32 %v2119, 0.01
        %v2373 = vmul.f32 %v2121, 0.01
        %v2374 = vmul.f32 %v2232, 0.01
        %v2375 = vmul.f32 %v2234, 0.01
        %v2376 = vmul.f32 %v2125, 0.01
        %v2377 = vmul.f32 %v2127, 0.01
        %v2378 = vmul.f32 %v2238, 0.01
        %v2379 = vmul.f32 %v2240, 0.01
        %v2380 = vmul.f32 %v2129, 0.01
        %v2381 = vmul.f32 %v2131, 0.01
        %v2382 = vmul.f32 %v2242, 0.01
        %v2383 = vmul.f32 %v2244, 0.01
        %v2384 = vmul.f32 %v2135, 0.01
        %v2385 = vmul.f32 %v2137, 0.01
        %v2386 = vmul.f32 %v2248, 0.01
        %v2387 = vmul.f32 %v2250, 0.01
        %v2388 = vmul.f32 %v2139, 0.01
        %v2389 = vmul.f32 %v2141, 0.01
        %v2390 = vmul.f32 %v2252, 0.01
        %v2391 = vmul.f32 %v2254, 0.01
        %v2392 = vmul.f32 %v2145, 0.01
        %v2393 = vmul.f32 %v2147, 0.01
        %v2394 = vmul.f32 %v2258, 0.01
        %v2395 = vmul.f32 %v2260, 0.01
        %v2396 = vmul.f32 %v2149, 0.01
        %v2397 = vmul.f32 %v2151, 0.01
        %v2398 = vmul.f32 %v2262, 0.01
        %v2399 = vmul.f32 %v2264, 0.01
        %v2400 = vmul.f32 %v2155, 0.01
        %v2401 = vmul.f32 %v2157, 0.01
        %v2402 = vmul.f32 %v2268, 0.01
        %v2403 = vmul.f32 %v2270, 0.01
        %v2404 = vmul.f32 %v2159, 0.01
        %v2405 = vmul.f32 %v2161, 0.01
        %v2406 = vmul.f32 %v2272, 0.01
        %v2407 = vmul.f32 %v2274, 0.01
        %v2408 = vmul.f32 %v2165, 0.01
        %v2409 = vmul.f32 %v2167, 0.01
        %v2410 = vmul.f32 %v2278, 0.01
        %v2411 = vmul.f32 %v2280, 0.01
        %v2412 = vmul.f32 %v2169, 0.01
        %v2413 = vmul.f32 %v2171, 0.01
        %v2414 = vmul.f32 %v2282, 0.01
        %v2415 = vmul.f32 %v2284, 0.01
        %v2416 = vmul.f32 %v2175, 0.01
        %v2417 = vmul.f32 %v2177, 0.01
        %v2418 = vmul.f32 %v2288, 0.01
        %v2419 = vmul.f32 %v2290, 0.01
        %v2420 = vmul.f32 %v2179, 0.01
        %v2421 = vmul.f32 %v2181, 0.01
        %v2422 = vmul.f32 %v2292, 0.01
        %v2423 = vmul.f32 %v2294, 0.01
        %v2424 = vsel %vm2296, %v2105, %v2360
        %v2425 = vsel %vm2297, %v2107, %v2361
        %v2426 = vsel %vm2298, %v2218, %v2362
        %v2427 = vsel %vm2299, %v2220, %v2363
        %v2428 = vsel %vm2300, %v2109, %v2364
        %v2429 = vsel %vm2301, %v2111, %v2365
        %v2430 = vsel %vm2302, %v2222, %v2366
        %v2431 = vsel %vm2303, %v2224, %v2367
        %v2432 = vsel %vm2304, %v2115, %v2368
        %v2433 = vsel %vm2305, %v2117, %v2369
        %v2434 = vsel %vm2306, %v2228, %v2370
        %v2435 = vsel %vm2307, %v2230, %v2371
        %v2436 = vsel %vm2308, %v2119, %v2372
        %v2437 = vsel %vm2309, %v2121, %v2373
        %v2438 = vsel %vm2310, %v2232, %v2374
        %v2439 = vsel %vm2311, %v2234, %v2375
        %v2440 = vsel %vm2312, %v2125, %v2376
        %v2441 = vsel %vm2313, %v2127, %v2377
        %v2442 = vsel %vm2314, %v2238, %v2378
        %v2443 = vsel %vm2315, %v2240, %v2379
        %v2444 = vsel %vm2316, %v2129, %v2380
        %v2445 = vsel %vm2317, %v2131, %v2381
        %v2446 = vsel %vm2318, %v2242, %v2382
        %v2447 = vsel %vm2319, %v2244, %v2383
        %v2448 = vsel %vm2320, %v2135, %v2384
        %v2449 = vsel %vm2321, %v2137, %v2385
        %v2450 = vsel %vm2322, %v2248, %v2386
        %v2451 = vsel %vm2323, %v2250, %v2387
        %v2452 = vsel %vm2324, %v2139, %v2388
        %v2453 = vsel %vm2325, %v2141, %v2389
        %v2454 = vsel %vm2326, %v2252, %v2390
        %v2455 = vsel %vm2327, %v2254, %v2391
        %v2456 = vsel %vm2328, %v2145, %v2392
        %v2457 = vsel %vm2329, %v2147, %v2393
        %v2458 = vsel %vm2330, %v2258, %v2394
        %v2459 = vsel %vm2331, %v2260, %v2395
        %v2460 = vsel %vm2332, %v2149, %v2396
        %v2461 = vsel %vm2333, %v2151, %v2397
        %v2462 = vsel %vm2334, %v2262, %v2398
        %v2463 = vsel %vm2335, %v2264, %v2399
        %v2464 = vsel %vm2336, %v2155, %v2400
        %v2465 = vsel %vm2337, %v2157, %v2401
        %v2466 = vsel %vm2338, %v2268, %v2402
        %v2467 = vsel %vm2339, %v2270, %v2403
        %v2468 = vsel %vm2340, %v2159, %v2404
        %v2469 = vsel %vm2341, %v2161, %v2405
        %v2470 = vsel %vm2342, %v2272, %v2406
        %v2471 = vsel %vm2343, %v2274, %v2407
        %v2472 = vsel %vm2344, %v2165, %v2408
        %v2473 = vsel %vm2345, %v2167, %v2409
        %v2474 = vsel %vm2346, %v2278, %v2410
        %v2475 = vsel %vm2347, %v2280, %v2411
        %v2476 = vsel %vm2348, %v2169, %v2412
        %v2477 = vsel %vm2349, %v2171, %v2413
        %v2478 = vsel %vm2350, %v2282, %v2414
        %v2479 = vsel %vm2351, %v2284, %v2415
        %v2480 = vsel %vm2352, %v2175, %v2416
        %v2481 = vsel %vm2353, %v2177, %v2417
        %v2482 = vsel %vm2354, %v2288, %v2418
        %v2483 = vsel %vm2355, %v2290, %v2419
        %v2484 = vsel %vm2356, %v2179, %v2420
        %v2485 = vsel %vm2357, %v2181, %v2421
        %v2486 = vsel %vm2358, %v2292, %v2422
        %v2487 = vsel %vm2359, %v2294, %v2423
        %v2488 = vpack.c.bf16 %v2428, %v2424
        %v2489 = vpack.c.bf16 %v2429, %v2425
        %v2490 = vpack.c.bf16 %v2436, %v2432
        %v2491 = vpack.c.bf16 %v2437, %v2433
        %v2492 = vpack.c.bf16 %v2444, %v2440
        %v2493 = vpack.c.bf16 %v2445, %v2441
        %v2494 = vpack.c.bf16 %v2452, %v2448
        %v2495 = vpack.c.bf16 %v2453, %v2449
        %v2496 = vpack.c.bf16 %v2460, %v2456
        %v2497 = vpack.c.bf16 %v2461, %v2457
        %v2498 = vpack.c.bf16 %v2468, %v2464
        %v2499 = vpack.c.bf16 %v2469, %v2465
        %v2500 = vpack.c.bf16 %v2476, %v2472
        %v2501 = vpack.c.bf16 %v2477, %v2473
        %v2502 = vpack.c.bf16 %v2484, %v2480
        %v2503 = vpack.c.bf16 %v2485, %v2481
        %v2504 = vld [vmem:[%s8] sm:$0xf]
        %v2505 = vld [vmem:[%s8 + $0x4] sm:$0xf]
        %v2506 = vld [vmem:[%s8 + $0x8] sm:$0xf]
        %v2507 = vld [vmem:[%s8 + $0xc] sm:$0xf]
        %v2508 = vld [vmem:[%s8 + $0x10] sm:$0xf]
        %v2509 = vld [vmem:[%s8 + $0x14] sm:$0xf]
        %v2510 = vld [vmem:[%s8 + $0x18] sm:$0xf]
        %v2511 = vld [vmem:[%s8 + $0x1c] sm:$0xf]
        %v2512 = vld [vmem:[%s8 + $0x20] sm:$0xf]
        %v2513 = vld [vmem:[%s8 + $0x24] sm:$0xf]
        %v2514 = vld [vmem:[%s8 + $0x28] sm:$0xf]
        %v2515 = vld [vmem:[%s8 + $0x2c] sm:$0xf]
        %v2516 = vld [vmem:[%s8 + $0x30] sm:$0xf]
        %v2517 = vld [vmem:[%s8 + $0x34] sm:$0xf]
        %v2518 = vld [vmem:[%s8 + $0x38] sm:$0xf]
        %v2519 = vld [vmem:[%s8 + $0x3c] sm:$0xf]
        %v2520 = vld [vmem:[%s8 + $0x40] sm:$0xf]
        %v2521 = vld [vmem:[%s8 + $0x44] sm:$0xf]
        %v2522 = vld [vmem:[%s8 + $0x48] sm:$0xf]
        %v2523 = vld [vmem:[%s8 + $0x4c] sm:$0xf]
        %v2524 = vld [vmem:[%s8 + $0x50] sm:$0xf]
        %v2525 = vld [vmem:[%s8 + $0x54] sm:$0xf]
        %v2526 = vld [vmem:[%s8 + $0x58] sm:$0xf]
        %v2527 = vld [vmem:[%s8 + $0x5c] sm:$0xf]
        %v2528 = vld [vmem:[%s8 + $0x60] sm:$0xf]
        %v2529 = vld [vmem:[%s8 + $0x64] sm:$0xf]
        %v2530 = vld [vmem:[%s8 + $0x68] sm:$0xf]
        %v2531 = vld [vmem:[%s8 + $0x6c] sm:$0xf]
        %v2532 = vld [vmem:[%s8 + $0x70] sm:$0xf]
        %v2533 = vld [vmem:[%s8 + $0x74] sm:$0xf]
        %v2534 = vld [vmem:[%s8 + $0x78] sm:$0xf]
        %v2535 = vld [vmem:[%s8 + $0x7c] sm:$0xf]
        %v2536 = vld [vmem:[%s9] sm:$0x1]
        %v2538 = vlaneseq
        %v2539 = vshrl.u32 %v2538, 7
        %v2540 = vsub.s32 0, %v2539
        %v2541 = vrot.slane %v2536, %v2540
        %v2575 = vunpack.c.l.b16 %v2504
        %v2576 = vunpack.c.l.b16 %v2505
        %v2577 = vunpack.c.l.b16 %v2506
        %v2578 = vunpack.c.l.b16 %v2507
        %v2579 = vunpack.c.l.b16 %v2508
        %v2580 = vunpack.c.l.b16 %v2509
        %v2581 = vunpack.c.l.b16 %v2510
        %v2582 = vunpack.c.l.b16 %v2511
        %v2583 = vunpack.c.l.b16 %v2512
        %v2584 = vunpack.c.l.b16 %v2513
        %v2585 = vunpack.c.l.b16 %v2514
        %v2586 = vunpack.c.l.b16 %v2515
        %v2587 = vunpack.c.l.b16 %v2516
        %v2588 = vunpack.c.l.b16 %v2517
        %v2589 = vunpack.c.l.b16 %v2518
        %v2590 = vunpack.c.l.b16 %v2519
        %v2591 = vunpack.c.l.b16 %v2520
        %v2592 = vunpack.c.l.b16 %v2521
        %v2593 = vunpack.c.l.b16 %v2522
        %v2594 = vunpack.c.l.b16 %v2523
        %v2595 = vunpack.c.l.b16 %v2524
        %v2596 = vunpack.c.l.b16 %v2525
        %v2597 = vunpack.c.l.b16 %v2526
        %v2598 = vunpack.c.l.b16 %v2527
        %v2599 = vunpack.c.l.b16 %v2528
        %v2600 = vunpack.c.l.b16 %v2529
        %v2601 = vunpack.c.l.b16 %v2530
        %v2602 = vunpack.c.l.b16 %v2531
        %v2603 = vunpack.c.l.b16 %v2532
        %v2604 = vunpack.c.l.b16 %v2533
        %v2605 = vunpack.c.l.b16 %v2534
        %v2606 = vunpack.c.l.b16 %v2535
        %v2607 = vpack.c.b16 %v2576, %v2575
        %v2608 = vpack.c.b16 %v2578, %v2577
        %v2609 = vpack.c.b16 %v2580, %v2579
        %v2610 = vpack.c.b16 %v2582, %v2581
        %v2611 = vpack.c.b16 %v2584, %v2583
        %v2612 = vpack.c.b16 %v2586, %v2585
        %v2613 = vpack.c.b16 %v2588, %v2587
        %v2614 = vpack.c.b16 %v2590, %v2589
        %v2615 = vpack.c.b16 %v2592, %v2591
        %v2616 = vpack.c.b16 %v2594, %v2593
        %v2617 = vpack.c.b16 %v2596, %v2595
        %v2618 = vpack.c.b16 %v2598, %v2597
        %v2619 = vpack.c.b16 %v2600, %v2599
        %v2620 = vpack.c.b16 %v2602, %v2601
        %v2621 = vpack.c.b16 %v2604, %v2603
        %v2622 = vpack.c.b16 %v2606, %v2605
        %2639 = vmatprep.subr.bf16.mxu0 0
        %2640 = vmatpush1.bf16.msra.mxu0 %v2607
        %2641 = vmatprep.subr.bf16.mxu0 0
        %2642 = vmatpush1.bf16.msra.mxu0 %v2608
        %2643 = vmatprep.subr.bf16.mxu0 0
        %2644 = vmatpush1.bf16.msra.mxu0 %v2609
        %2645 = vmatprep.subr.bf16.mxu0 0
        %2646 = vmatpush1.bf16.msra.mxu0 %v2610
        %2647 = vmatprep.subr.bf16.mxu0 0
        %2648 = vmatpush1.bf16.msra.mxu0 %v2611
        %2649 = vmatprep.subr.bf16.mxu0 0
        %2650 = vmatpush1.bf16.msra.mxu0 %v2612
        %2651 = vmatprep.subr.bf16.mxu0 0
        %2652 = vmatpush1.bf16.msra.mxu0 %v2613
        %2653 = vmatprep.subr.bf16.mxu0 0
        %2654 = vmatpush1.bf16.msra.mxu0 %v2614
        %2655 = vmatprep.subr.bf16.mxu0 0
        %2656 = vmatpush1.bf16.msra.mxu0 %v2615
        %2657 = vmatprep.subr.bf16.mxu0 0
        %2658 = vmatpush1.bf16.msra.mxu0 %v2616
        %2659 = vmatprep.subr.bf16.mxu0 0
        %2660 = vmatpush1.bf16.msra.mxu0 %v2617
        %2661 = vmatprep.subr.bf16.mxu0 0
        %2662 = vmatpush1.bf16.msra.mxu0 %v2618
        %2663 = vmatprep.subr.bf16.mxu0 0
        %2664 = vmatpush1.bf16.msra.mxu0 %v2619
        %2665 = vmatprep.subr.bf16.mxu0 0
        %2666 = vmatpush1.bf16.msra.mxu0 %v2620
        %2667 = vmatprep.subr.bf16.mxu0 0
        %2668 = vmatpush1.bf16.msra.mxu0 %v2621
        %2669 = vmatprep.subr.bf16.mxu0 0
        %2670 = vmatpush1.bf16.msra.mxu0 %v2622
        %2671 = vmatprep.mubr.bf16.mxu0 %v2489
        %2672 = vmatmul.mubr.bf16.gmra.mrb[0].mxu0 %v2488
        %v2673 = vpop.f32.mrb[0].mxu0
        %v2674 = vadd.f32 %v2541, %v2673
        %v2675 = vpop.f32.mrb[0].mxu0
        %v2676 = vpop.f32.mrb[0].mxu0
        %v2677 = vadd.f32 %v2541, %v2676
        %v2678 = vpop.f32.mrb[0].mxu0
        %2679 = vmatprep.mubr.bf16.mxu0 %v2491
        %2680 = vmatmul.mubr.bf16.gmra.mrb[0].mxu0 %v2490
        %v2681 = vpop.f32.mrb[0].mxu0
        %v2682 = vadd.f32 %v2541, %v2681
        %v2683 = vpop.f32.mrb[0].mxu0
        %v2684 = vpop.f32.mrb[0].mxu0
        %v2685 = vadd.f32 %v2541, %v2684
        %v2686 = vpop.f32.mrb[0].mxu0
        %2687 = vmatprep.mubr.bf16.mxu0 %v2493
        %2688 = vmatmul.mubr.bf16.gmra.mrb[0].mxu0 %v2492
        %v2689 = vpop.f32.mrb[0].mxu0
        %v2690 = vadd.f32 %v2541, %v2689
        %v2691 = vpop.f32.mrb[0].mxu0
        %v2692 = vpop.f32.mrb[0].mxu0
        %v2693 = vadd.f32 %v2541, %v2692
        %v2694 = vpop.f32.mrb[0].mxu0
        %2695 = vmatprep.mubr.bf16.mxu0 %v2495
        %2696 = vmatmul.mubr.bf16.gmra.mrb[0].mxu0 %v2494
        %v2697 = vpop.f32.mrb[0].mxu0
        %v2698 = vadd.f32 %v2541, %v2697
        %v2699 = vpop.f32.mrb[0].mxu0
        %v2700 = vpop.f32.mrb[0].mxu0
        %v2701 = vadd.f32 %v2541, %v2700
        %v2702 = vpop.f32.mrb[0].mxu0
        %2703 = vmatprep.mubr.bf16.mxu0 %v2497
        %2704 = vmatmul.mubr.bf16.gmra.mrb[0].mxu0 %v2496
        %v2705 = vpop.f32.mrb[0].mxu0
        %v2706 = vadd.f32 %v2541, %v2705
        %v2707 = vpop.f32.mrb[0].mxu0
        %v2708 = vpop.f32.mrb[0].mxu0
        %v2709 = vadd.f32 %v2541, %v2708
        %v2710 = vpop.f32.mrb[0].mxu0
        %2711 = vmatprep.mubr.bf16.mxu0 %v2499
        %2712 = vmatmul.mubr.bf16.gmra.mrb[0].mxu0 %v2498
        %v2713 = vpop.f32.mrb[0].mxu0
        %v2714 = vadd.f32 %v2541, %v2713
        %v2715 = vpop.f32.mrb[0].mxu0
        %v2716 = vpop.f32.mrb[0].mxu0
        %v2717 = vadd.f32 %v2541, %v2716
        %v2718 = vpop.f32.mrb[0].mxu0
        %2719 = vmatprep.mubr.bf16.mxu0 %v2501
        %2720 = vmatmul.mubr.bf16.gmra.mrb[0].mxu0 %v2500
        %v2721 = vpop.f32.mrb[0].mxu0
        %v2722 = vadd.f32 %v2541, %v2721
        %v2723 = vpop.f32.mrb[0].mxu0
        %v2724 = vpop.f32.mrb[0].mxu0
        %v2725 = vadd.f32 %v2541, %v2724
        %v2726 = vpop.f32.mrb[0].mxu0
        %2727 = vmatprep.mubr.bf16.mxu0 %v2503
        %2728 = vmatmul.mubr.bf16.gmra.mrb[0].mxu0 %v2502
        %v2729 = vpop.f32.mrb[0].mxu0
        %v2730 = vadd.f32 %v2541, %v2729
        %v2731 = vpop.f32.mrb[0].mxu0
        %v2732 = vpop.f32.mrb[0].mxu0
        %v2733 = vadd.f32 %v2541, %v2732
        %v2734 = vpop.f32.mrb[0].mxu0
        %2735 = vdwg.mxu0
        %2736 = vst [vmem:[%s824] sm:$0xff] %v2674
        %2737 = vst [vmem:[%s824 + $0x8] sm:$0xff] %v2677
        %2738 = vst [vmem:[%s824 + $0x10] sm:$0xff] %v2682
        %2739 = vst [vmem:[%s824 + $0x18] sm:$0xff] %v2685
        %2740 = vst [vmem:[%s824 + $0x20] sm:$0xff] %v2690
        %2741 = vst [vmem:[%s824 + $0x28] sm:$0xff] %v2693
        %2742 = vst [vmem:[%s824 + $0x30] sm:$0xff] %v2698
        %2743 = vst [vmem:[%s824 + $0x38] sm:$0xff] %v2701
        %2744 = vst [vmem:[%s824 + $0x40] sm:$0xff] %v2706
        %2745 = vst [vmem:[%s824 + $0x48] sm:$0xff] %v2709
        %2746 = vst [vmem:[%s824 + $0x50] sm:$0xff] %v2714
        %2747 = vst [vmem:[%s824 + $0x58] sm:$0xff] %v2717
        %2748 = vst [vmem:[%s824 + $0x60] sm:$0xff] %v2722
        %2749 = vst [vmem:[%s824 + $0x68] sm:$0xff] %v2725
        %2750 = vst [vmem:[%s824 + $0x70] sm:$0xff] %v2730
        %2751 = vst [vmem:[%s824 + $0x78] sm:$0xff] %v2733
        %v2752 = vpack.c.bf16 %v2430, %v2426
        %v2753 = vpack.c.bf16 %v2431, %v2427
        %v2754 = vpack.c.bf16 %v2438, %v2434
        %v2755 = vpack.c.bf16 %v2439, %v2435
        %v2756 = vpack.c.bf16 %v2446, %v2442
        %v2757 = vpack.c.bf16 %v2447, %v2443
        %v2758 = vpack.c.bf16 %v2454, %v2450
        %v2759 = vpack.c.bf16 %v2455, %v2451
        %v2760 = vpack.c.bf16 %v2462, %v2458
        %v2761 = vpack.c.bf16 %v2463, %v2459
        %v2762 = vpack.c.bf16 %v2470, %v2466
        %v2763 = vpack.c.bf16 %v2471, %v2467
        %v2764 = vpack.c.bf16 %v2478, %v2474
        %v2765 = vpack.c.bf16 %v2479, %v2475
        %v2766 = vpack.c.bf16 %v2486, %v2482
        %v2767 = vpack.c.bf16 %v2487, %v2483
        %v2768 = vld [vmem:[#allocation7] sm:$0xf]
        %v2769 = vld [vmem:[#allocation7 + $0x4] sm:$0xf]
        %v2770 = vld [vmem:[#allocation7 + $0x8] sm:$0xf]
        %v2771 = vld [vmem:[#allocation7 + $0xc] sm:$0xf]
        %v2772 = vld [vmem:[#allocation7 + $0x10] sm:$0xf]
        %v2773 = vld [vmem:[#allocation7 + $0x14] sm:$0xf]
        %v2774 = vld [vmem:[#allocation7 + $0x18] sm:$0xf]
        %v2775 = vld [vmem:[#allocation7 + $0x1c] sm:$0xf]
        %v2776 = vld [vmem:[#allocation7 + $0x20] sm:$0xf]
        %v2777 = vld [vmem:[#allocation7 + $0x24] sm:$0xf]
        %v2778 = vld [vmem:[#allocation7 + $0x28] sm:$0xf]
        %v2779 = vld [vmem:[#allocation7 + $0x2c] sm:$0xf]
        %v2780 = vld [vmem:[#allocation7 + $0x30] sm:$0xf]
        %v2781 = vld [vmem:[#allocation7 + $0x34] sm:$0xf]
        %v2782 = vld [vmem:[#allocation7 + $0x38] sm:$0xf]
        %v2783 = vld [vmem:[#allocation7 + $0x3c] sm:$0xf]
        %v2784 = vld [vmem:[#allocation7 + $0x40] sm:$0xf]
        %v2785 = vld [vmem:[#allocation7 + $0x44] sm:$0xf]
        %v2786 = vld [vmem:[#allocation7 + $0x48] sm:$0xf]
        %v2787 = vld [vmem:[#allocation7 + $0x4c] sm:$0xf]
        %v2788 = vld [vmem:[#allocation7 + $0x50] sm:$0xf]
        %v2789 = vld [vmem:[#allocation7 + $0x54] sm:$0xf]
        %v2790 = vld [vmem:[#allocation7 + $0x58] sm:$0xf]
        %v2791 = vld [vmem:[#allocation7 + $0x5c] sm:$0xf]
        %v2792 = vld [vmem:[#allocation7 + $0x60] sm:$0xf]
        %v2793 = vld [vmem:[#allocation7 + $0x64] sm:$0xf]
        %v2794 = vld [vmem:[#allocation7 + $0x68] sm:$0xf]
        %v2795 = vld [vmem:[#allocation7 + $0x6c] sm:$0xf]
        %v2796 = vld [vmem:[#allocation7 + $0x70] sm:$0xf]
        %v2797 = vld [vmem:[#allocation7 + $0x74] sm:$0xf]
        %v2798 = vld [vmem:[#allocation7 + $0x78] sm:$0xf]
        %v2799 = vld [vmem:[#allocation7 + $0x7c] sm:$0xf]
        %v2800 = vld [vmem:[%s11] sm:$0x1]
        %v2802 = vlaneseq
        %v2803 = vshrl.u32 %v2802, 7
        %v2804 = vsub.s32 0, %v2803
        %v2805 = vrot.slane %v2800, %v2804
        %v2839 = vunpack.c.l.b16 %v2768
        %v2840 = vunpack.c.l.b16 %v2769
        %v2841 = vunpack.c.l.b16 %v2770
        %v2842 = vunpack.c.l.b16 %v2771
        %v2843 = vunpack.c.l.b16 %v2772
        %v2844 = vunpack.c.l.b16 %v2773
        %v2845 = vunpack.c.l.b16 %v2774
        %v2846 = vunpack.c.l.b16 %v2775
        %v2847 = vunpack.c.l.b16 %v2776
        %v2848 = vunpack.c.l.b16 %v2777
        %v2849 = vunpack.c.l.b16 %v2778
        %v2850 = vunpack.c.l.b16 %v2779
        %v2851 = vunpack.c.l.b16 %v2780
        %v2852 = vunpack.c.l.b16 %v2781
        %v2853 = vunpack.c.l.b16 %v2782
        %v2854 = vunpack.c.l.b16 %v2783
        %v2855 = vunpack.c.l.b16 %v2784
        %v2856 = vunpack.c.l.b16 %v2785
        %v2857 = vunpack.c.l.b16 %v2786
        %v2858 = vunpack.c.l.b16 %v2787
        %v2859 = vunpack.c.l.b16 %v2788
        %v2860 = vunpack.c.l.b16 %v2789
        %v2861 = vunpack.c.l.b16 %v2790
        %v2862 = vunpack.c.l.b16 %v2791
        %v2863 = vunpack.c.l.b16 %v2792
        %v2864 = vunpack.c.l.b16 %v2793
        %v2865 = vunpack.c.l.b16 %v2794
        %v2866 = vunpack.c.l.b16 %v2795
        %v2867 = vunpack.c.l.b16 %v2796
        %v2868 = vunpack.c.l.b16 %v2797
        %v2869 = vunpack.c.l.b16 %v2798
        %v2870 = vunpack.c.l.b16 %v2799
        %v2871 = vpack.c.b16 %v2840, %v2839
        %v2872 = vpack.c.b16 %v2842, %v2841
        %v2873 = vpack.c.b16 %v2844, %v2843
        %v2874 = vpack.c.b16 %v2846, %v2845
        %v2875 = vpack.c.b16 %v2848, %v2847
        %v2876 = vpack.c.b16 %v2850, %v2849
        %v2877 = vpack.c.b16 %v2852, %v2851
        %v2878 = vpack.c.b16 %v2854, %v2853
        %v2879 = vpack.c.b16 %v2856, %v2855
        %v2880 = vpack.c.b16 %v2858, %v2857
        %v2881 = vpack.c.b16 %v2860, %v2859
        %v2882 = vpack.c.b16 %v2862, %v2861
        %v2883 = vpack.c.b16 %v2864, %v2863
        %v2884 = vpack.c.b16 %v2866, %v2865
        %v2885 = vpack.c.b16 %v2868, %v2867
        %v2886 = vpack.c.b16 %v2870, %v2869
        %2903 = vmatprep.subr.bf16.mxu0 0
        %2904 = vmatpush1.bf16.msra.mxu0 %v2871
        %2905 = vmatprep.subr.bf16.mxu0 0
        %2906 = vmatpush1.bf16.msra.mxu0 %v2872
        %2907 = vmatprep.subr.bf16.mxu0 0
        %2908 = vmatpush1.bf16.msra.mxu0 %v2873
        %2909 = vmatprep.subr.bf16.mxu0 0
        %2910 = vmatpush1.bf16.msra.mxu0 %v2874
        %2911 = vmatprep.subr.bf16.mxu0 0
        %2912 = vmatpush1.bf16.msra.mxu0 %v2875
        %2913 = vmatprep.subr.bf16.mxu0 0
        %2914 = vmatpush1.bf16.msra.mxu0 %v2876
        %2915 = vmatprep.subr.bf16.mxu0 0
        %2916 = vmatpush1.bf16.msra.mxu0 %v2877
        %2917 = vmatprep.subr.bf16.mxu0 0
        %2918 = vmatpush1.bf16.msra.mxu0 %v2878
        %2919 = vmatprep.subr.bf16.mxu0 0
        %2920 = vmatpush1.bf16.msra.mxu0 %v2879
        %2921 = vmatprep.subr.bf16.mxu0 0
        %2922 = vmatpush1.bf16.msra.mxu0 %v2880
        %2923 = vmatprep.subr.bf16.mxu0 0
        %2924 = vmatpush1.bf16.msra.mxu0 %v2881
        %2925 = vmatprep.subr.bf16.mxu0 0
        %2926 = vmatpush1.bf16.msra.mxu0 %v2882
        %2927 = vmatprep.subr.bf16.mxu0 0
        %2928 = vmatpush1.bf16.msra.mxu0 %v2883
        %2929 = vmatprep.subr.bf16.mxu0 0
        %2930 = vmatpush1.bf16.msra.mxu0 %v2884
        %2931 = vmatprep.subr.bf16.mxu0 0
        %2932 = vmatpush1.bf16.msra.mxu0 %v2885
        %2933 = vmatprep.subr.bf16.mxu0 0
        %2934 = vmatpush1.bf16.msra.mxu0 %v2886
        %2935 = vmatprep.mubr.bf16.mxu0 %v2753
        %2936 = vmatmul.mubr.bf16.gmra.mrb[0].mxu0 %v2752
        %v2937 = vpop.f32.mrb[0].mxu0
        %v2938 = vadd.f32 %v2805, %v2937
        %v2939 = vpop.f32.mrb[0].mxu0
        %v2940 = vpop.f32.mrb[0].mxu0
        %v2941 = vadd.f32 %v2805, %v2940
        %v2942 = vpop.f32.mrb[0].mxu0
        %2943 = vmatprep.mubr.bf16.mxu0 %v2755
        %2944 = vmatmul.mubr.bf16.gmra.mrb[0].mxu0 %v2754
        %v2945 = vpop.f32.mrb[0].mxu0
        %v2946 = vadd.f32 %v2805, %v2945
        %v2947 = vpop.f32.mrb[0].mxu0
        %v2948 = vpop.f32.mrb[0].mxu0
        %v2949 = vadd.f32 %v2805, %v2948
        %v2950 = vpop.f32.mrb[0].mxu0
        %2951 = vmatprep.mubr.bf16.mxu0 %v2757
        %2952 = vmatmul.mubr.bf16.gmra.mrb[0].mxu0 %v2756
        %v2953 = vpop.f32.mrb[0].mxu0
        %v2954 = vadd.f32 %v2805, %v2953
        %v2955 = vpop.f32.mrb[0].mxu0
        %v2956 = vpop.f32.mrb[0].mxu0
        %v2957 = vadd.f32 %v2805, %v2956
        %v2958 = vpop.f32.mrb[0].mxu0
        %2959 = vmatprep.mubr.bf16.mxu0 %v2759
        %2960 = vmatmul.mubr.bf16.gmra.mrb[0].mxu0 %v2758
        %v2961 = vpop.f32.mrb[0].mxu0
        %v2962 = vadd.f32 %v2805, %v2961
        %v2963 = vpop.f32.mrb[0].mxu0
        %v2964 = vpop.f32.mrb[0].mxu0
        %v2965 = vadd.f32 %v2805, %v2964
        %v2966 = vpop.f32.mrb[0].mxu0
        %2967 = vmatprep.mubr.bf16.mxu0 %v2761
        %2968 = vmatmul.mubr.bf16.gmra.mrb[0].mxu0 %v2760
        %v2969 = vpop.f32.mrb[0].mxu0
        %v2970 = vadd.f32 %v2805, %v2969
        %v2971 = vpop.f32.mrb[0].mxu0
        %v2972 = vpop.f32.mrb[0].mxu0
        %v2973 = vadd.f32 %v2805, %v2972
        %v2974 = vpop.f32.mrb[0].mxu0
        %2975 = vmatprep.mubr.bf16.mxu0 %v2763
        %2976 = vmatmul.mubr.bf16.gmra.mrb[0].mxu0 %v2762
        %v2977 = vpop.f32.mrb[0].mxu0
        %v2978 = vadd.f32 %v2805, %v2977
        %v2979 = vpop.f32.mrb[0].mxu0
        %v2980 = vpop.f32.mrb[0].mxu0
        %v2981 = vadd.f32 %v2805, %v2980
        %v2982 = vpop.f32.mrb[0].mxu0
        %2983 = vmatprep.mubr.bf16.mxu0 %v2765
        %2984 = vmatmul.mubr.bf16.gmra.mrb[0].mxu0 %v2764
        %v2985 = vpop.f32.mrb[0].mxu0
        %v2986 = vadd.f32 %v2805, %v2985
        %v2987 = vpop.f32.mrb[0].mxu0
        %v2988 = vpop.f32.mrb[0].mxu0
        %v2989 = vadd.f32 %v2805, %v2988
        %v2990 = vpop.f32.mrb[0].mxu0
        %2991 = vmatprep.mubr.bf16.mxu0 %v2767
        %2992 = vmatmul.mubr.bf16.gmra.mrb[0].mxu0 %v2766
        %v2993 = vpop.f32.mrb[0].mxu0
        %v2994 = vadd.f32 %v2805, %v2993
        %v2995 = vpop.f32.mrb[0].mxu0
        %v2996 = vpop.f32.mrb[0].mxu0
        %v2997 = vadd.f32 %v2805, %v2996
        %v2998 = vpop.f32.mrb[0].mxu0
        %2999 = vdwg.mxu0
        %3000 = vst [vmem:[%s830] sm:$0xff] %v2938
        %3001 = vst [vmem:[%s830 + $0x8] sm:$0xff] %v2941
        %3002 = vst [vmem:[%s830 + $0x10] sm:$0xff] %v2946
        %3003 = vst [vmem:[%s830 + $0x18] sm:$0xff] %v2949
        %3004 = vst [vmem:[%s830 + $0x20] sm:$0xff] %v2954
        %3005 = vst [vmem:[%s830 + $0x28] sm:$0xff] %v2957
        %3006 = vst [vmem:[%s830 + $0x30] sm:$0xff] %v2962
        %3007 = vst [vmem:[%s830 + $0x38] sm:$0xff] %v2965
        %3008 = vst [vmem:[%s830 + $0x40] sm:$0xff] %v2970
        %3009 = vst [vmem:[%s830 + $0x48] sm:$0xff] %v2973
        %3010 = vst [vmem:[%s830 + $0x50] sm:$0xff] %v2978
        %3011 = vst [vmem:[%s830 + $0x58] sm:$0xff] %v2981
        %3012 = vst [vmem:[%s830 + $0x60] sm:$0xff] %v2986
        %3013 = vst [vmem:[%s830 + $0x68] sm:$0xff] %v2989
        %3014 = vst [vmem:[%s830 + $0x70] sm:$0xff] %v2994
        %3015 = vst [vmem:[%s830 + $0x78] sm:$0xff] %v2997
        %v3016 = vmul.f32 %v2938, 0.5
        %v3017 = vmul.f32 %v2941, 0.5
        %v3018 = vmul.f32 %v2946, 0.5
        %v3019 = vmul.f32 %v2949, 0.5
        %v3020 = vmul.f32 %v2954, 0.5
        %v3021 = vmul.f32 %v2957, 0.5
        %v3022 = vmul.f32 %v2962, 0.5
        %v3023 = vmul.f32 %v2965, 0.5
        %v3024 = vmul.f32 %v2970, 0.5
        %v3025 = vmul.f32 %v2973, 0.5
        %v3026 = vmul.f32 %v2978, 0.5
        %v3027 = vmul.f32 %v2981, 0.5
        %v3028 = vmul.f32 %v2986, 0.5
        %v3029 = vmul.f32 %v2989, 0.5
        %v3030 = vmul.f32 %v2994, 0.5
        %v3031 = vmul.f32 %v2997, 0.5
        %v3032 = vmul.f32 %v3016, 1.442695
        %v3033 = vpow.pop %v3032
        %v3034 = vmul.f32 %v3017, 1.442695
        %v3035 = vpow.pop %v3034
        %v3036 = vmul.f32 %v3018, 1.442695
        %v3037 = vpow.pop %v3036
        %v3038 = vmul.f32 %v3019, 1.442695
        %v3039 = vpow.pop %v3038
        %v3040 = vmul.f32 %v3020, 1.442695
        %v3041 = vpow.pop %v3040
        %v3042 = vmul.f32 %v3021, 1.442695
        %v3043 = vpow.pop %v3042
        %v3044 = vmul.f32 %v3022, 1.442695
        %v3045 = vpow.pop %v3044
        %v3046 = vmul.f32 %v3023, 1.442695
        %v3047 = vpow.pop %v3046
        %v3048 = vmul.f32 %v3024, 1.442695
        %v3049 = vpow.pop %v3048
        %v3050 = vmul.f32 %v3025, 1.442695
        %v3051 = vpow.pop %v3050
        %v3052 = vmul.f32 %v3026, 1.442695
        %v3053 = vpow.pop %v3052
        %v3054 = vmul.f32 %v3027, 1.442695
        %v3055 = vpow.pop %v3054
        %v3056 = vmul.f32 %v3028, 1.442695
        %v3057 = vpow.pop %v3056
        %v3058 = vmul.f32 %v3029, 1.442695
        %v3059 = vpow.pop %v3058
        %v3060 = vmul.f32 %v3030, 1.442695
        %v3061 = vpow.pop %v3060
        %v3062 = vmul.f32 %v3031, 1.442695
        %v3063 = vpow.pop %v3062
        %v3064 = vld [vmem:[%s863] sm:$0xff]
        %v3065 = vld [vmem:[%s863 + $0x8] sm:$0xff]
        %v3066 = vld [vmem:[%s863 + $0x10] sm:$0xff]
        %v3067 = vld [vmem:[%s863 + $0x18] sm:$0xff]
        %v3068 = vld [vmem:[%s863 + $0x20] sm:$0xff]
        %v3069 = vld [vmem:[%s863 + $0x28] sm:$0xff]
        %v3070 = vld [vmem:[%s863 + $0x30] sm:$0xff]
        %v3071 = vld [vmem:[%s863 + $0x38] sm:$0xff]
        %v3072 = vld [vmem:[%s863 + $0x40] sm:$0xff]
        %v3073 = vld [vmem:[%s863 + $0x48] sm:$0xff]
        %v3074 = vld [vmem:[%s863 + $0x50] sm:$0xff]
        %v3075 = vld [vmem:[%s863 + $0x58] sm:$0xff]
        %v3076 = vld [vmem:[%s863 + $0x60] sm:$0xff]
        %v3077 = vld [vmem:[%s863 + $0x68] sm:$0xff]
        %v3078 = vld [vmem:[%s863 + $0x70] sm:$0xff]
        %v3079 = vld [vmem:[%s863 + $0x78] sm:$0xff]
        %v3080 = vmul.f32 %v3033, %v3064
        %v3081 = vmul.f32 %v3035, %v3065
        %v3082 = vmul.f32 %v3037, %v3066
        %v3083 = vmul.f32 %v3039, %v3067
        %v3084 = vmul.f32 %v3041, %v3068
        %v3085 = vmul.f32 %v3043, %v3069
        %v3086 = vmul.f32 %v3045, %v3070
        %v3087 = vmul.f32 %v3047, %v3071
        %v3088 = vmul.f32 %v3049, %v3072
        %v3089 = vmul.f32 %v3051, %v3073
        %v3090 = vmul.f32 %v3053, %v3074
        %v3091 = vmul.f32 %v3055, %v3075
        %v3092 = vmul.f32 %v3057, %v3076
        %v3093 = vmul.f32 %v3059, %v3077
        %v3094 = vmul.f32 %v3061, %v3078
        %v3095 = vmul.f32 %v3063, %v3079
        %v3096 = vadd.f32 %v2674, %v3080
        %v3097 = vadd.f32 %v2677, %v3081
        %v3098 = vadd.f32 %v2682, %v3082
        %v3099 = vadd.f32 %v2685, %v3083
        %v3100 = vadd.f32 %v2690, %v3084
        %v3101 = vadd.f32 %v2693, %v3085
        %v3102 = vadd.f32 %v2698, %v3086
        %v3103 = vadd.f32 %v2701, %v3087
        %v3104 = vadd.f32 %v2706, %v3088
        %v3105 = vadd.f32 %v2709, %v3089
        %v3106 = vadd.f32 %v2714, %v3090
        %v3107 = vadd.f32 %v2717, %v3091
        %v3108 = vadd.f32 %v2722, %v3092
        %v3109 = vadd.f32 %v2725, %v3093
        %v3110 = vadd.f32 %v2730, %v3094
        %v3111 = vadd.f32 %v2733, %v3095
        %v3112 = vpack.c.bf16 %v3097, %v3096
        %v3113 = vpack.c.bf16 %v3099, %v3098
        %v3114 = vpack.c.bf16 %v3101, %v3100
        %v3115 = vpack.c.bf16 %v3103, %v3102
        %v3116 = vpack.c.bf16 %v3105, %v3104
        %v3117 = vpack.c.bf16 %v3107, %v3106
        %v3118 = vpack.c.bf16 %v3109, %v3108
        %v3119 = vpack.c.bf16 %v3111, %v3110
        %v3120 = vld [vmem:[#allocation8] sm:$0xff]
        %v3121 = vld [vmem:[#allocation8 + $0x8] sm:$0xff]
        %v3122 = vld [vmem:[#allocation8 + $0x10] sm:$0xff]
        %v3123 = vld [vmem:[#allocation8 + $0x18] sm:$0xff]
        %v3124 = vld [vmem:[#allocation8 + $0x20] sm:$0xff]
        %v3125 = vld [vmem:[#allocation8 + $0x28] sm:$0xff]
        %v3126 = vld [vmem:[#allocation8 + $0x30] sm:$0xff]
        %v3127 = vld [vmem:[#allocation8 + $0x38] sm:$0xff]
        %v3128 = vld [vmem:[#allocation8 + $0x40] sm:$0xff]
        %v3129 = vld [vmem:[#allocation8 + $0x48] sm:$0xff]
        %v3130 = vld [vmem:[#allocation8 + $0x50] sm:$0xff]
        %v3131 = vld [vmem:[#allocation8 + $0x58] sm:$0xff]
        %v3132 = vld [vmem:[#allocation8 + $0x60] sm:$0xff]
        %v3133 = vld [vmem:[#allocation8 + $0x68] sm:$0xff]
        %v3134 = vld [vmem:[#allocation8 + $0x70] sm:$0xff]
        %v3135 = vld [vmem:[#allocation8 + $0x78] sm:$0xff]
        %v3136 = vld [vmem:[%s13] sm:$0x3]
        %v3138 = vlaneseq
        %v3139 = vshrl.u32 %v3138, 7
        %v3140 = vsub.s32 0, %v3139
        %v3141 = vrot.slane %v3136, %v3140
        %v3142 = vlaneseq
        %v3143 = vshrl.u32 %v3142, 7
        %v3144 = vsub.s32 1, %v3143
        %v3145 = vrot.slane %v3136, %v3144
        %v3164 = vunpack.c.l.b16 %v3120
        %v3165 = vunpack.c.h.b16 %v3120
        %v3166 = vunpack.c.l.b16 %v3121
        %v3167 = vunpack.c.h.b16 %v3121
        %v3168 = vunpack.c.l.b16 %v3122
        %v3169 = vunpack.c.h.b16 %v3122
        %v3170 = vunpack.c.l.b16 %v3123
        %v3171 = vunpack.c.h.b16 %v3123
        %v3172 = vunpack.c.l.b16 %v3124
        %v3173 = vunpack.c.h.b16 %v3124
        %v3174 = vunpack.c.l.b16 %v3125
        %v3175 = vunpack.c.h.b16 %v3125
        %v3176 = vunpack.c.l.b16 %v3126
        %v3177 = vunpack.c.h.b16 %v3126
        %v3178 = vunpack.c.l.b16 %v3127
        %v3179 = vunpack.c.h.b16 %v3127
        %v3180 = vunpack.c.l.b16 %v3128
        %v3181 = vunpack.c.h.b16 %v3128
        %v3182 = vunpack.c.l.b16 %v3129
        %v3183 = vunpack.c.h.b16 %v3129
        %v3184 = vunpack.c.l.b16 %v3130
        %v3185 = vunpack.c.h.b16 %v3130
        %v3186 = vunpack.c.l.b16 %v3131
        %v3187 = vunpack.c.h.b16 %v3131
        %v3188 = vunpack.c.l.b16 %v3132
        %v3189 = vunpack.c.h.b16 %v3132
        %v3190 = vunpack.c.l.b16 %v3133
        %v3191 = vunpack.c.h.b16 %v3133
        %v3192 = vunpack.c.l.b16 %v3134
        %v3193 = vunpack.c.h.b16 %v3134
        %v3194 = vunpack.c.l.b16 %v3135
        %v3195 = vunpack.c.h.b16 %v3135
        %v3196 = vpack.c.b16 %v3166, %v3164
        %v3197 = vpack.c.b16 %v3167, %v3165
        %v3198 = vpack.c.b16 %v3170, %v3168
        %v3199 = vpack.c.b16 %v3171, %v3169
        %v3200 = vpack.c.b16 %v3174, %v3172
        %v3201 = vpack.c.b16 %v3175, %v3173
        %v3202 = vpack.c.b16 %v3178, %v3176
        %v3203 = vpack.c.b16 %v3179, %v3177
        %v3204 = vpack.c.b16 %v3182, %v3180
        %v3205 = vpack.c.b16 %v3183, %v3181
        %v3206 = vpack.c.b16 %v3186, %v3184
        %v3207 = vpack.c.b16 %v3187, %v3185
        %v3208 = vpack.c.b16 %v3190, %v3188
        %v3209 = vpack.c.b16 %v3191, %v3189
        %v3210 = vpack.c.b16 %v3194, %v3192
        %v3211 = vpack.c.b16 %v3195, %v3193
        %3228 = vmatprep.subr.bf16.mxu0 %v3197
        %3229 = vmatpush1.bf16.msra.mxu0 %v3196
        %3230 = vmatprep.subr.bf16.mxu0 %v3199
        %3231 = vmatpush1.bf16.msra.mxu0 %v3198
        %3232 = vmatprep.subr.bf16.mxu0 %v3201
        %3233 = vmatpush1.bf16.msra.mxu0 %v3200
        %3234 = vmatprep.subr.bf16.mxu0 %v3203
        %3235 = vmatpush1.bf16.msra.mxu0 %v3202
        %3236 = vmatprep.subr.bf16.mxu0 %v3205
        %3237 = vmatpush1.bf16.msra.mxu0 %v3204
        %3238 = vmatprep.subr.bf16.mxu0 %v3207
        %3239 = vmatpush1.bf16.msra.mxu0 %v3206
        %3240 = vmatprep.subr.bf16.mxu0 %v3209
        %3241 = vmatpush1.bf16.msra.mxu0 %v3208
        %3242 = vmatprep.subr.bf16.mxu0 %v3211
        %3243 = vmatpush1.bf16.msra.mxu0 %v3210
        %3244 = vmatprep.subr.bf16.mxu0 0
        %3245 = vmatpush1.bf16.msra.mxu0 0
        %3246 = vmatprep.subr.bf16.mxu0 0
        %3247 = vmatpush1.bf16.msra.mxu0 0
        %3248 = vmatprep.subr.bf16.mxu0 0
        %3249 = vmatpush1.bf16.msra.mxu0 0
        %3250 = vmatprep.subr.bf16.mxu0 0
        %3251 = vmatpush1.bf16.msra.mxu0 0
        %3252 = vmatprep.subr.bf16.mxu0 0
        %3253 = vmatpush1.bf16.msra.mxu0 0
        %3254 = vmatprep.subr.bf16.mxu0 0
        %3255 = vmatpush1.bf16.msra.mxu0 0
        %3256 = vmatprep.subr.bf16.mxu0 0
        %3257 = vmatpush1.bf16.msra.mxu0 0
        %3258 = vmatprep.subr.bf16.mxu0 0
        %3259 = vmatpush1.bf16.msra.mxu0 0
        %3260 = vmatprep.mubr.bf16.mxu0 0
        %3261 = vmatmul.mubr.bf16.gmra.mrb[0].mxu0 %v3112
        %v3262 = vpop.f32.mrb[0].mxu0
        %v3263 = vadd.f32 %v3141, %v3262
        %v3264 = vpop.f32.mrb[0].mxu0
        %v3265 = vadd.f32 %v3145, %v3264
        %v3266 = vpop.f32.mrb[0].mxu0
        %v3267 = vadd.f32 %v3141, %v3266
        %v3268 = vpop.f32.mrb[0].mxu0
        %v3269 = vadd.f32 %v3145, %v3268
        %3270 = vmatprep.mubr.bf16.mxu0 0
        %3271 = vmatmul.mubr.bf16.gmra.mrb[0].mxu0 %v3113
        %v3272 = vpop.f32.mrb[0].mxu0
        %v3273 = vadd.f32 %v3141, %v3272
        %v3274 = vpop.f32.mrb[0].mxu0
        %v3275 = vadd.f32 %v3145, %v3274
        %v3276 = vpop.f32.mrb[0].mxu0
        %v3277 = vadd.f32 %v3141, %v3276
        %v3278 = vpop.f32.mrb[0].mxu0
        %v3279 = vadd.f32 %v3145, %v3278
        %3280 = vmatprep.mubr.bf16.mxu0 0
        %3281 = vmatmul.mubr.bf16.gmra.mrb[0].mxu0 %v3114
        %v3282 = vpop.f32.mrb[0].mxu0
        %v3283 = vadd.f32 %v3141, %v3282
        %v3284 = vpop.f32.mrb[0].mxu0
        %v3285 = vadd.f32 %v3145, %v3284
        %v3286 = vpop.f32.mrb[0].mxu0
        %v3287 = vadd.f32 %v3141, %v3286
        %v3288 = vpop.f32.mrb[0].mxu0
        %v3289 = vadd.f32 %v3145, %v3288
        %3290 = vmatprep.mubr.bf16.mxu0 0
        %3291 = vmatmul.mubr.bf16.gmra.mrb[0].mxu0 %v3115
        %v3292 = vpop.f32.mrb[0].mxu0
        %v3293 = vadd.f32 %v3141, %v3292
        %v3294 = vpop.f32.mrb[0].mxu0
        %v3295 = vadd.f32 %v3145, %v3294
        %v3296 = vpop.f32.mrb[0].mxu0
        %v3297 = vadd.f32 %v3141, %v3296
        %v3298 = vpop.f32.mrb[0].mxu0
        %v3299 = vadd.f32 %v3145, %v3298
        %3300 = vmatprep.mubr.bf16.mxu0 0
        %3301 = vmatmul.mubr.bf16.gmra.mrb[0].mxu0 %v3116
        %v3302 = vpop.f32.mrb[0].mxu0
        %v3303 = vadd.f32 %v3141, %v3302
        %v3304 = vpop.f32.mrb[0].mxu0
        %v3305 = vadd.f32 %v3145, %v3304
        %v3306 = vpop.f32.mrb[0].mxu0
        %v3307 = vadd.f32 %v3141, %v3306
        %v3308 = vpop.f32.mrb[0].mxu0
        %v3309 = vadd.f32 %v3145, %v3308
        %3310 = vmatprep.mubr.bf16.mxu0 0
        %3311 = vmatmul.mubr.bf16.gmra.mrb[0].mxu0 %v3117
        %v3312 = vpop.f32.mrb[0].mxu0
        %v3313 = vadd.f32 %v3141, %v3312
        %v3314 = vpop.f32.mrb[0].mxu0
        %v3315 = vadd.f32 %v3145, %v3314
        %v3316 = vpop.f32.mrb[0].mxu0
        %v3317 = vadd.f32 %v3141, %v3316
        %v3318 = vpop.f32.mrb[0].mxu0
        %v3319 = vadd.f32 %v3145, %v3318
        %3320 = vmatprep.mubr.bf16.mxu0 0
        %3321 = vmatmul.mubr.bf16.gmra.mrb[0].mxu0 %v3118
        %v3322 = vpop.f32.mrb[0].mxu0
        %v3323 = vadd.f32 %v3141, %v3322
        %v3324 = vpop.f32.mrb[0].mxu0
        %v3325 = vadd.f32 %v3145, %v3324
        %v3326 = vpop.f32.mrb[0].mxu0
        %v3327 = vadd.f32 %v3141, %v3326
        %v3328 = vpop.f32.mrb[0].mxu0
        %v3329 = vadd.f32 %v3145, %v3328
        %3330 = vmatprep.mubr.bf16.mxu0 0
        %3331 = vmatmul.mubr.bf16.gmra.mrb[0].mxu0 %v3119
        %v3332 = vpop.f32.mrb[0].mxu0
        %v3333 = vadd.f32 %v3141, %v3332
        %v3334 = vpop.f32.mrb[0].mxu0
        %v3335 = vadd.f32 %v3145, %v3334
        %v3336 = vpop.f32.mrb[0].mxu0
        %v3337 = vadd.f32 %v3141, %v3336
        %v3338 = vpop.f32.mrb[0].mxu0
        %v3339 = vadd.f32 %v3145, %v3338
        %3340 = vdwg.mxu0
        %v3341 = vmax.f32 %v3263, 0.0
        %v3342 = vmax.f32 %v3265, 0.0
        %v3343 = vmax.f32 %v3267, 0.0
        %v3344 = vmax.f32 %v3269, 0.0
        %v3345 = vmax.f32 %v3273, 0.0
        %v3346 = vmax.f32 %v3275, 0.0
        %v3347 = vmax.f32 %v3277, 0.0
        %v3348 = vmax.f32 %v3279, 0.0
        %v3349 = vmax.f32 %v3283, 0.0
        %v3350 = vmax.f32 %v3285, 0.0
        %v3351 = vmax.f32 %v3287, 0.0
        %v3352 = vmax.f32 %v3289, 0.0
        %v3353 = vmax.f32 %v3293, 0.0
        %v3354 = vmax.f32 %v3295, 0.0
        %v3355 = vmax.f32 %v3297, 0.0
        %v3356 = vmax.f32 %v3299, 0.0
        %v3357 = vmax.f32 %v3303, 0.0
        %v3358 = vmax.f32 %v3305, 0.0
        %v3359 = vmax.f32 %v3307, 0.0
        %v3360 = vmax.f32 %v3309, 0.0
        %v3361 = vmax.f32 %v3313, 0.0
        %v3362 = vmax.f32 %v3315, 0.0
        %v3363 = vmax.f32 %v3317, 0.0
        %v3364 = vmax.f32 %v3319, 0.0
        %v3365 = vmax.f32 %v3323, 0.0
        %v3366 = vmax.f32 %v3325, 0.0
        %v3367 = vmax.f32 %v3327, 0.0
        %v3368 = vmax.f32 %v3329, 0.0
        %v3369 = vmax.f32 %v3333, 0.0
        %v3370 = vmax.f32 %v3335, 0.0
        %v3371 = vmax.f32 %v3337, 0.0
        %v3372 = vmax.f32 %v3339, 0.0
        %v3373 = vpack.c.bf16 %v3343, %v3341
        %v3374 = vpack.c.bf16 %v3344, %v3342
        %v3375 = vpack.c.bf16 %v3347, %v3345
        %v3376 = vpack.c.bf16 %v3348, %v3346
        %v3377 = vpack.c.bf16 %v3351, %v3349
        %v3378 = vpack.c.bf16 %v3352, %v3350
        %v3379 = vpack.c.bf16 %v3355, %v3353
        %v3380 = vpack.c.bf16 %v3356, %v3354
        %v3381 = vpack.c.bf16 %v3359, %v3357
        %v3382 = vpack.c.bf16 %v3360, %v3358
        %v3383 = vpack.c.bf16 %v3363, %v3361
        %v3384 = vpack.c.bf16 %v3364, %v3362
        %v3385 = vpack.c.bf16 %v3367, %v3365
        %v3386 = vpack.c.bf16 %v3368, %v3366
        %v3387 = vpack.c.bf16 %v3371, %v3369
        %v3388 = vpack.c.bf16 %v3372, %v3370
        %v3389 = vld [vmem:[#allocation10] sm:$0xff]
        %v3390 = vld [vmem:[#allocation10 + $0x8] sm:$0xff]
        %v3391 = vld [vmem:[#allocation10 + $0x10] sm:$0xff]
        %v3392 = vld [vmem:[#allocation10 + $0x18] sm:$0xff]
        %v3393 = vld [vmem:[#allocation10 + $0x20] sm:$0xff]
        %v3394 = vld [vmem:[#allocation10 + $0x28] sm:$0xff]
        %v3395 = vld [vmem:[#allocation10 + $0x30] sm:$0xff]
        %v3396 = vld [vmem:[#allocation10 + $0x38] sm:$0xff]
        %v3397 = vld [vmem:[#allocation10 + $0x40] sm:$0xff]
        %v3398 = vld [vmem:[#allocation10 + $0x48] sm:$0xff]
        %v3399 = vld [vmem:[#allocation10 + $0x50] sm:$0xff]
        %v3400 = vld [vmem:[#allocation10 + $0x58] sm:$0xff]
        %v3401 = vld [vmem:[#allocation10 + $0x60] sm:$0xff]
        %v3402 = vld [vmem:[#allocation10 + $0x68] sm:$0xff]
        %v3403 = vld [vmem:[#allocation10 + $0x70] sm:$0xff]
        %v3404 = vld [vmem:[#allocation10 + $0x78] sm:$0xff]
        %v3405 = vld [vmem:[#allocation10 + $0x80] sm:$0xff]
        %v3406 = vld [vmem:[#allocation10 + $0x88] sm:$0xff]
        %v3407 = vld [vmem:[#allocation10 + $0x90] sm:$0xff]
        %v3408 = vld [vmem:[#allocation10 + $0x98] sm:$0xff]
        %v3409 = vld [vmem:[#allocation10 + $0xa0] sm:$0xff]
        %v3410 = vld [vmem:[#allocation10 + $0xa8] sm:$0xff]
        %v3411 = vld [vmem:[#allocation10 + $0xb0] sm:$0xff]
        %v3412 = vld [vmem:[#allocation10 + $0xb8] sm:$0xff]
        %v3413 = vld [vmem:[#allocation10 + $0xc0] sm:$0xff]
        %v3414 = vld [vmem:[#allocation10 + $0xc8] sm:$0xff]
        %v3415 = vld [vmem:[#allocation10 + $0xd0] sm:$0xff]
        %v3416 = vld [vmem:[#allocation10 + $0xd8] sm:$0xff]
        %v3417 = vld [vmem:[#allocation10 + $0xe0] sm:$0xff]
        %v3418 = vld [vmem:[#allocation10 + $0xe8] sm:$0xff]
        %v3419 = vld [vmem:[#allocation10 + $0xf0] sm:$0xff]
        %v3420 = vld [vmem:[#allocation10 + $0xf8] sm:$0xff]
        %v3421 = vld [vmem:[%s15] sm:$0x3]
        %v3423 = vlaneseq
        %v3424 = vshrl.u32 %v3423, 7
        %v3425 = vsub.s32 0, %v3424
        %v3426 = vrot.slane %v3421, %v3425
        %v3427 = vlaneseq
        %v3428 = vshrl.u32 %v3427, 7
        %v3429 = vsub.s32 1, %v3428
        %v3430 = vrot.slane %v3421, %v3429
        %v3465 = vunpack.c.l.b16 %v3389
        %v3466 = vunpack.c.h.b16 %v3389
        %v3467 = vunpack.c.l.b16 %v3390
        %v3468 = vunpack.c.h.b16 %v3390
        %v3469 = vunpack.c.l.b16 %v3391
        %v3470 = vunpack.c.h.b16 %v3391
        %v3471 = vunpack.c.l.b16 %v3392
        %v3472 = vunpack.c.h.b16 %v3392
        %v3473 = vunpack.c.l.b16 %v3393
        %v3474 = vunpack.c.h.b16 %v3393
        %v3475 = vunpack.c.l.b16 %v3394
        %v3476 = vunpack.c.h.b16 %v3394
        %v3477 = vunpack.c.l.b16 %v3395
        %v3478 = vunpack.c.h.b16 %v3395
        %v3479 = vunpack.c.l.b16 %v3396
        %v3480 = vunpack.c.h.b16 %v3396
        %v3481 = vunpack.c.l.b16 %v3397
        %v3482 = vunpack.c.h.b16 %v3397
        %v3483 = vunpack.c.l.b16 %v3398
        %v3484 = vunpack.c.h.b16 %v3398
        %v3485 = vunpack.c.l.b16 %v3399
        %v3486 = vunpack.c.h.b16 %v3399
        %v3487 = vunpack.c.l.b16 %v3400
        %v3488 = vunpack.c.h.b16 %v3400
        %v3489 = vunpack.c.l.b16 %v3401
        %v3490 = vunpack.c.h.b16 %v3401
        %v3491 = vunpack.c.l.b16 %v3402
        %v3492 = vunpack.c.h.b16 %v3402
        %v3493 = vunpack.c.l.b16 %v3403
        %v3494 = vunpack.c.h.b16 %v3403
        %v3495 = vunpack.c.l.b16 %v3404
        %v3496 = vunpack.c.h.b16 %v3404
        %v3497 = vunpack.c.l.b16 %v3405
        %v3498 = vunpack.c.h.b16 %v3405
        %v3499 = vunpack.c.l.b16 %v3406
        %v3500 = vunpack.c.h.b16 %v3406
        %v3501 = vunpack.c.l.b16 %v3407
        %v3502 = vunpack.c.h.b16 %v3407
        %v3503 = vunpack.c.l.b16 %v3408
        %v3504 = vunpack.c.h.b16 %v3408
        %v3505 = vunpack.c.l.b16 %v3409
        %v3506 = vunpack.c.h.b16 %v3409
        %v3507 = vunpack.c.l.b16 %v3410
        %v3508 = vunpack.c.h.b16 %v3410
        %v3509 = vunpack.c.l.b16 %v3411
        %v3510 = vunpack.c.h.b16 %v3411
        %v3511 = vunpack.c.l.b16 %v3412
        %v3512 = vunpack.c.h.b16 %v3412
        %v3513 = vunpack.c.l.b16 %v3413
        %v3514 = vunpack.c.h.b16 %v3413
        %v3515 = vunpack.c.l.b16 %v3414
        %v3516 = vunpack.c.h.b16 %v3414
        %v3517 = vunpack.c.l.b16 %v3415
        %v3518 = vunpack.c.h.b16 %v3415
        %v3519 = vunpack.c.l.b16 %v3416
        %v3520 = vunpack.c.h.b16 %v3416
        %v3521 = vunpack.c.l.b16 %v3417
        %v3522 = vunpack.c.h.b16 %v3417
        %v3523 = vunpack.c.l.b16 %v3418
        %v3524 = vunpack.c.h.b16 %v3418
        %v3525 = vunpack.c.l.b16 %v3419
        %v3526 = vunpack.c.h.b16 %v3419
        %v3527 = vunpack.c.l.b16 %v3420
        %v3528 = vunpack.c.h.b16 %v3420
        %v3529 = vpack.c.b16 %v3467, %v3465
        %v3530 = vpack.c.b16 %v3468, %v3466
        %v3531 = vpack.c.b16 %v3471, %v3469
        %v3532 = vpack.c.b16 %v3472, %v3470
        %v3533 = vpack.c.b16 %v3475, %v3473
        %v3534 = vpack.c.b16 %v3476, %v3474
        %v3535 = vpack.c.b16 %v3479, %v3477
        %v3536 = vpack.c.b16 %v3480, %v3478
        %v3537 = vpack.c.b16 %v3483, %v3481
        %v3538 = vpack.c.b16 %v3484, %v3482
        %v3539 = vpack.c.b16 %v3487, %v3485
        %v3540 = vpack.c.b16 %v3488, %v3486
        %v3541 = vpack.c.b16 %v3491, %v3489
        %v3542 = vpack.c.b16 %v3492, %v3490
        %v3543 = vpack.c.b16 %v3495, %v3493
        %v3544 = vpack.c.b16 %v3496, %v3494
        %v3545 = vpack.c.b16 %v3499, %v3497
        %v3546 = vpack.c.b16 %v3500, %v3498
        %v3547 = vpack.c.b16 %v3503, %v3501
        %v3548 = vpack.c.b16 %v3504, %v3502
        %v3549 = vpack.c.b16 %v3507, %v3505
        %v3550 = vpack.c.b16 %v3508, %v3506
        %v3551 = vpack.c.b16 %v3511, %v3509
        %v3552 = vpack.c.b16 %v3512, %v3510
        %v3553 = vpack.c.b16 %v3515, %v3513
        %v3554 = vpack.c.b16 %v3516, %v3514
        %v3555 = vpack.c.b16 %v3519, %v3517
        %v3556 = vpack.c.b16 %v3520, %v3518
        %v3557 = vpack.c.b16 %v3523, %v3521
        %v3558 = vpack.c.b16 %v3524, %v3522
        %v3559 = vpack.c.b16 %v3527, %v3525
        %v3560 = vpack.c.b16 %v3528, %v3526
        %3593 = vmatprep.subr.bf16.mxu0 %v3530
        %3594 = vmatpush1.bf16.msra.mxu0 %v3529
        %3595 = vmatprep.subr.bf16.mxu0 %v3532
        %3596 = vmatpush1.bf16.msra.mxu0 %v3531
        %3597 = vmatprep.subr.bf16.mxu0 %v3534
        %3598 = vmatpush1.bf16.msra.mxu0 %v3533
        %3599 = vmatprep.subr.bf16.mxu0 %v3536
        %3600 = vmatpush1.bf16.msra.mxu0 %v3535
        %3601 = vmatprep.subr.bf16.mxu0 %v3538
        %3602 = vmatpush1.bf16.msra.mxu0 %v3537
        %3603 = vmatprep.subr.bf16.mxu0 %v3540
        %3604 = vmatpush1.bf16.msra.mxu0 %v3539
        %3605 = vmatprep.subr.bf16.mxu0 %v3542
        %3606 = vmatpush1.bf16.msra.mxu0 %v3541
        %3607 = vmatprep.subr.bf16.mxu0 %v3544
        %3608 = vmatpush1.bf16.msra.mxu0 %v3543
        %3609 = vmatprep.subr.bf16.mxu0 %v3546
        %3610 = vmatpush1.bf16.msra.mxu0 %v3545
        %3611 = vmatprep.subr.bf16.mxu0 %v3548
        %3612 = vmatpush1.bf16.msra.mxu0 %v3547
        %3613 = vmatprep.subr.bf16.mxu0 %v3550
        %3614 = vmatpush1.bf16.msra.mxu0 %v3549
        %3615 = vmatprep.subr.bf16.mxu0 %v3552
        %3616 = vmatpush1.bf16.msra.mxu0 %v3551
        %3617 = vmatprep.subr.bf16.mxu0 %v3554
        %3618 = vmatpush1.bf16.msra.mxu0 %v3553
        %3619 = vmatprep.subr.bf16.mxu0 %v3556
        %3620 = vmatpush1.bf16.msra.mxu0 %v3555
        %3621 = vmatprep.subr.bf16.mxu0 %v3558
        %3622 = vmatpush1.bf16.msra.mxu0 %v3557
        %3623 = vmatprep.subr.bf16.mxu0 %v3560
        %3624 = vmatpush1.bf16.msra.mxu0 %v3559
        %3625 = vmatprep.mubr.bf16.mxu0 %v3374
        %3626 = vmatmul.mubr.bf16.gmra.mrb[0].mxu0 %v3373
        %v3627 = vpop.f32.mrb[0].mxu0
        %v3628 = vadd.f32 %v3426, %v3627
        %v3629 = vpop.f32.mrb[0].mxu0
        %v3630 = vadd.f32 %v3430, %v3629
        %v3631 = vpop.f32.mrb[0].mxu0
        %v3632 = vadd.f32 %v3426, %v3631
        %v3633 = vpop.f32.mrb[0].mxu0
        %v3634 = vadd.f32 %v3430, %v3633
        %3635 = vmatprep.mubr.bf16.mxu0 %v3376
        %3636 = vmatmul.mubr.bf16.gmra.mrb[0].mxu0 %v3375
        %v3637 = vpop.f32.mrb[0].mxu0
        %v3638 = vadd.f32 %v3426, %v3637
        %v3639 = vpop.f32.mrb[0].mxu0
        %v3640 = vadd.f32 %v3430, %v3639
        %v3641 = vpop.f32.mrb[0].mxu0
        %v3642 = vadd.f32 %v3426, %v3641
        %v3643 = vpop.f32.mrb[0].mxu0
        %v3644 = vadd.f32 %v3430, %v3643
        %3645 = vmatprep.mubr.bf16.mxu0 %v3378
        %3646 = vmatmul.mubr.bf16.gmra.mrb[0].mxu0 %v3377
        %v3647 = vpop.f32.mrb[0].mxu0
        %v3648 = vadd.f32 %v3426, %v3647
        %v3649 = vpop.f32.mrb[0].mxu0
        %v3650 = vadd.f32 %v3430, %v3649
        %v3651 = vpop.f32.mrb[0].mxu0
        %v3652 = vadd.f32 %v3426, %v3651
        %v3653 = vpop.f32.mrb[0].mxu0
        %v3654 = vadd.f32 %v3430, %v3653
        %3655 = vmatprep.mubr.bf16.mxu0 %v3380
        %3656 = vmatmul.mubr.bf16.gmra.mrb[0].mxu0 %v3379
        %v3657 = vpop.f32.mrb[0].mxu0
        %v3658 = vadd.f32 %v3426, %v3657
        %v3659 = vpop.f32.mrb[0].mxu0
        %v3660 = vadd.f32 %v3430, %v3659
        %v3661 = vpop.f32.mrb[0].mxu0
        %v3662 = vadd.f32 %v3426, %v3661
        %v3663 = vpop.f32.mrb[0].mxu0
        %v3664 = vadd.f32 %v3430, %v3663
        %3665 = vmatprep.mubr.bf16.mxu0 %v3382
        %3666 = vmatmul.mubr.bf16.gmra.mrb[0].mxu0 %v3381
        %v3667 = vpop.f32.mrb[0].mxu0
        %v3668 = vadd.f32 %v3426, %v3667
        %v3669 = vpop.f32.mrb[0].mxu0
        %v3670 = vadd.f32 %v3430, %v3669
        %v3671 = vpop.f32.mrb[0].mxu0
        %v3672 = vadd.f32 %v3426, %v3671
        %v3673 = vpop.f32.mrb[0].mxu0
        %v3674 = vadd.f32 %v3430, %v3673
        %3675 = vmatprep.mubr.bf16.mxu0 %v3384
        %3676 = vmatmul.mubr.bf16.gmra.mrb[0].mxu0 %v3383
        %v3677 = vpop.f32.mrb[0].mxu0
        %v3678 = vadd.f32 %v3426, %v3677
        %v3679 = vpop.f32.mrb[0].mxu0
        %v3680 = vadd.f32 %v3430, %v3679
        %v3681 = vpop.f32.mrb[0].mxu0
        %v3682 = vadd.f32 %v3426, %v3681
        %v3683 = vpop.f32.mrb[0].mxu0
        %v3684 = vadd.f32 %v3430, %v3683
        %3685 = vmatprep.mubr.bf16.mxu0 %v3386
        %3686 = vmatmul.mubr.bf16.gmra.mrb[0].mxu0 %v3385
        %v3687 = vpop.f32.mrb[0].mxu0
        %v3688 = vadd.f32 %v3426, %v3687
        %v3689 = vpop.f32.mrb[0].mxu0
        %v3690 = vadd.f32 %v3430, %v3689
        %v3691 = vpop.f32.mrb[0].mxu0
        %v3692 = vadd.f32 %v3426, %v3691
        %v3693 = vpop.f32.mrb[0].mxu0
        %v3694 = vadd.f32 %v3430, %v3693
        %3695 = vmatprep.mubr.bf16.mxu0 %v3388
        %3696 = vmatmul.mubr.bf16.gmra.mrb[0].mxu0 %v3387
        %v3697 = vpop.f32.mrb[0].mxu0
        %v3698 = vadd.f32 %v3426, %v3697
        %v3699 = vpop.f32.mrb[0].mxu0
        %v3700 = vadd.f32 %v3430, %v3699
        %v3701 = vpop.f32.mrb[0].mxu0
        %v3702 = vadd.f32 %v3426, %v3701
        %v3703 = vpop.f32.mrb[0].mxu0
        %v3704 = vadd.f32 %v3430, %v3703
        %3705 = vdwg.mxu0
        %v3706 = vmax.f32 %v3628, 0.0
        %v3707 = vmax.f32 %v3630, 0.0
        %v3708 = vmax.f32 %v3632, 0.0
        %v3709 = vmax.f32 %v3634, 0.0
        %v3710 = vmax.f32 %v3638, 0.0
        %v3711 = vmax.f32 %v3640, 0.0
        %v3712 = vmax.f32 %v3642, 0.0
        %v3713 = vmax.f32 %v3644, 0.0
        %v3714 = vmax.f32 %v3648, 0.0
        %v3715 = vmax.f32 %v3650, 0.0
        %v3716 = vmax.f32 %v3652, 0.0
        %v3717 = vmax.f32 %v3654, 0.0
        %v3718 = vmax.f32 %v3658, 0.0
        %v3719 = vmax.f32 %v3660, 0.0
        %v3720 = vmax.f32 %v3662, 0.0
        %v3721 = vmax.f32 %v3664, 0.0
        %v3722 = vmax.f32 %v3668, 0.0
        %v3723 = vmax.f32 %v3670, 0.0
        %v3724 = vmax.f32 %v3672, 0.0
        %v3725 = vmax.f32 %v3674, 0.0
        %v3726 = vmax.f32 %v3678, 0.0
        %v3727 = vmax.f32 %v3680, 0.0
        %v3728 = vmax.f32 %v3682, 0.0
        %v3729 = vmax.f32 %v3684, 0.0
        %v3730 = vmax.f32 %v3688, 0.0
        %v3731 = vmax.f32 %v3690, 0.0
        %v3732 = vmax.f32 %v3692, 0.0
        %v3733 = vmax.f32 %v3694, 0.0
        %v3734 = vmax.f32 %v3698, 0.0
        %v3735 = vmax.f32 %v3700, 0.0
        %v3736 = vmax.f32 %v3702, 0.0
        %v3737 = vmax.f32 %v3704, 0.0
        %v3738 = vpack.c.bf16 %v3708, %v3706
        %v3739 = vpack.c.bf16 %v3709, %v3707
        %v3740 = vpack.c.bf16 %v3712, %v3710
        %v3741 = vpack.c.bf16 %v3713, %v3711
        %v3742 = vpack.c.bf16 %v3716, %v3714
        %v3743 = vpack.c.bf16 %v3717, %v3715
        %v3744 = vpack.c.bf16 %v3720, %v3718
        %v3745 = vpack.c.bf16 %v3721, %v3719
        %v3746 = vpack.c.bf16 %v3724, %v3722
        %v3747 = vpack.c.bf16 %v3725, %v3723
        %v3748 = vpack.c.bf16 %v3728, %v3726
        %v3749 = vpack.c.bf16 %v3729, %v3727
        %v3750 = vpack.c.bf16 %v3732, %v3730
        %v3751 = vpack.c.bf16 %v3733, %v3731
        %v3752 = vpack.c.bf16 %v3736, %v3734
        %v3753 = vpack.c.bf16 %v3737, %v3735
        %v3754 = vld [vmem:[#allocation11] sm:$0xff]
        %v3755 = vld [vmem:[#allocation11 + $0x8] sm:$0xff]
        %v3756 = vld [vmem:[#allocation11 + $0x10] sm:$0xff]
        %v3757 = vld [vmem:[#allocation11 + $0x18] sm:$0xff]
        %v3758 = vld [vmem:[#allocation11 + $0x20] sm:$0xff]
        %v3759 = vld [vmem:[#allocation11 + $0x28] sm:$0xff]
        %v3760 = vld [vmem:[#allocation11 + $0x30] sm:$0xff]
        %v3761 = vld [vmem:[#allocation11 + $0x38] sm:$0xff]
        %v3762 = vld [vmem:[#allocation11 + $0x40] sm:$0xff]
        %v3763 = vld [vmem:[#allocation11 + $0x48] sm:$0xff]
        %v3764 = vld [vmem:[#allocation11 + $0x50] sm:$0xff]
        %v3765 = vld [vmem:[#allocation11 + $0x58] sm:$0xff]
        %v3766 = vld [vmem:[#allocation11 + $0x60] sm:$0xff]
        %v3767 = vld [vmem:[#allocation11 + $0x68] sm:$0xff]
        %v3768 = vld [vmem:[#allocation11 + $0x70] sm:$0xff]
        %v3769 = vld [vmem:[#allocation11 + $0x78] sm:$0xff]
        %v3770 = vld [vmem:[#allocation11 + $0x80] sm:$0xff]
        %v3771 = vld [vmem:[#allocation11 + $0x88] sm:$0xff]
        %v3772 = vld [vmem:[#allocation11 + $0x90] sm:$0xff]
        %v3773 = vld [vmem:[#allocation11 + $0x98] sm:$0xff]
        %v3774 = vld [vmem:[#allocation11 + $0xa0] sm:$0xff]
        %v3775 = vld [vmem:[#allocation11 + $0xa8] sm:$0xff]
        %v3776 = vld [vmem:[#allocation11 + $0xb0] sm:$0xff]
        %v3777 = vld [vmem:[#allocation11 + $0xb8] sm:$0xff]
        %v3778 = vld [vmem:[#allocation11 + $0xc0] sm:$0xff]
        %v3779 = vld [vmem:[#allocation11 + $0xc8] sm:$0xff]
        %v3780 = vld [vmem:[#allocation11 + $0xd0] sm:$0xff]
        %v3781 = vld [vmem:[#allocation11 + $0xd8] sm:$0xff]
        %v3782 = vld [vmem:[#allocation11 + $0xe0] sm:$0xff]
        %v3783 = vld [vmem:[#allocation11 + $0xe8] sm:$0xff]
        %v3784 = vld [vmem:[#allocation11 + $0xf0] sm:$0xff]
        %v3785 = vld [vmem:[#allocation11 + $0xf8] sm:$0xff]
        %v3786 = vld [vmem:[%s17] sm:$0x3]
        %v3788 = vlaneseq
        %v3789 = vshrl.u32 %v3788, 7
        %v3790 = vsub.s32 0, %v3789
        %v3791 = vrot.slane %v3786, %v3790
        %v3792 = vlaneseq
        %v3793 = vshrl.u32 %v3792, 7
        %v3794 = vsub.s32 1, %v3793
        %v3795 = vrot.slane %v3786, %v3794
        %v3830 = vunpack.c.l.b16 %v3754
        %v3831 = vunpack.c.h.b16 %v3754
        %v3832 = vunpack.c.l.b16 %v3755
        %v3833 = vunpack.c.h.b16 %v3755
        %v3834 = vunpack.c.l.b16 %v3756
        %v3835 = vunpack.c.h.b16 %v3756
        %v3836 = vunpack.c.l.b16 %v3757
        %v3837 = vunpack.c.h.b16 %v3757
        %v3838 = vunpack.c.l.b16 %v3758
        %v3839 = vunpack.c.h.b16 %v3758
        %v3840 = vunpack.c.l.b16 %v3759
        %v3841 = vunpack.c.h.b16 %v3759
        %v3842 = vunpack.c.l.b16 %v3760
        %v3843 = vunpack.c.h.b16 %v3760
        %v3844 = vunpack.c.l.b16 %v3761
        %v3845 = vunpack.c.h.b16 %v3761
        %v3846 = vunpack.c.l.b16 %v3762
        %v3847 = vunpack.c.h.b16 %v3762
        %v3848 = vunpack.c.l.b16 %v3763
        %v3849 = vunpack.c.h.b16 %v3763
        %v3850 = vunpack.c.l.b16 %v3764
        %v3851 = vunpack.c.h.b16 %v3764
        %v3852 = vunpack.c.l.b16 %v3765
        %v3853 = vunpack.c.h.b16 %v3765
        %v3854 = vunpack.c.l.b16 %v3766
        %v3855 = vunpack.c.h.b16 %v3766
        %v3856 = vunpack.c.l.b16 %v3767
        %v3857 = vunpack.c.h.b16 %v3767
        %v3858 = vunpack.c.l.b16 %v3768
        %v3859 = vunpack.c.h.b16 %v3768
        %v3860 = vunpack.c.l.b16 %v3769
        %v3861 = vunpack.c.h.b16 %v3769
        %v3862 = vunpack.c.l.b16 %v3770
        %v3863 = vunpack.c.h.b16 %v3770
        %v3864 = vunpack.c.l.b16 %v3771
        %v3865 = vunpack.c.h.b16 %v3771
        %v3866 = vunpack.c.l.b16 %v3772
        %v3867 = vunpack.c.h.b16 %v3772
        %v3868 = vunpack.c.l.b16 %v3773
        %v3869 = vunpack.c.h.b16 %v3773
        %v3870 = vunpack.c.l.b16 %v3774
        %v3871 = vunpack.c.h.b16 %v3774
        %v3872 = vunpack.c.l.b16 %v3775
        %v3873 = vunpack.c.h.b16 %v3775
        %v3874 = vunpack.c.l.b16 %v3776
        %v3875 = vunpack.c.h.b16 %v3776
        %v3876 = vunpack.c.l.b16 %v3777
        %v3877 = vunpack.c.h.b16 %v3777
        %v3878 = vunpack.c.l.b16 %v3778
        %v3879 = vunpack.c.h.b16 %v3778
        %v3880 = vunpack.c.l.b16 %v3779
        %v3881 = vunpack.c.h.b16 %v3779
        %v3882 = vunpack.c.l.b16 %v3780
        %v3883 = vunpack.c.h.b16 %v3780
        %v3884 = vunpack.c.l.b16 %v3781
        %v3885 = vunpack.c.h.b16 %v3781
        %v3886 = vunpack.c.l.b16 %v3782
        %v3887 = vunpack.c.h.b16 %v3782
        %v3888 = vunpack.c.l.b16 %v3783
        %v3889 = vunpack.c.h.b16 %v3783
        %v3890 = vunpack.c.l.b16 %v3784
        %v3891 = vunpack.c.h.b16 %v3784
        %v3892 = vunpack.c.l.b16 %v3785
        %v3893 = vunpack.c.h.b16 %v3785
        %v3894 = vpack.c.b16 %v3832, %v3830
        %v3895 = vpack.c.b16 %v3833, %v3831
        %v3896 = vpack.c.b16 %v3836, %v3834
        %v3897 = vpack.c.b16 %v3837, %v3835
        %v3898 = vpack.c.b16 %v3840, %v3838
        %v3899 = vpack.c.b16 %v3841, %v3839
        %v3900 = vpack.c.b16 %v3844, %v3842
        %v3901 = vpack.c.b16 %v3845, %v3843
        %v3902 = vpack.c.b16 %v3848, %v3846
        %v3903 = vpack.c.b16 %v3849, %v3847
        %v3904 = vpack.c.b16 %v3852, %v3850
        %v3905 = vpack.c.b16 %v3853, %v3851
        %v3906 = vpack.c.b16 %v3856, %v3854
        %v3907 = vpack.c.b16 %v3857, %v3855
        %v3908 = vpack.c.b16 %v3860, %v3858
        %v3909 = vpack.c.b16 %v3861, %v3859
        %v3910 = vpack.c.b16 %v3864, %v3862
        %v3911 = vpack.c.b16 %v3865, %v3863
        %v3912 = vpack.c.b16 %v3868, %v3866
        %v3913 = vpack.c.b16 %v3869, %v3867
        %v3914 = vpack.c.b16 %v3872, %v3870
        %v3915 = vpack.c.b16 %v3873, %v3871
        %v3916 = vpack.c.b16 %v3876, %v3874
        %v3917 = vpack.c.b16 %v3877, %v3875
        %v3918 = vpack.c.b16 %v3880, %v3878
        %v3919 = vpack.c.b16 %v3881, %v3879
        %v3920 = vpack.c.b16 %v3884, %v3882
        %v3921 = vpack.c.b16 %v3885, %v3883
        %v3922 = vpack.c.b16 %v3888, %v3886
        %v3923 = vpack.c.b16 %v3889, %v3887
        %v3924 = vpack.c.b16 %v3892, %v3890
        %v3925 = vpack.c.b16 %v3893, %v3891
        %3958 = vmatprep.subr.bf16.mxu0 %v3895
        %3959 = vmatpush1.bf16.msra.mxu0 %v3894
        %3960 = vmatprep.subr.bf16.mxu0 %v3897
        %3961 = vmatpush1.bf16.msra.mxu0 %v3896
        %3962 = vmatprep.subr.bf16.mxu0 %v3899
        %3963 = vmatpush1.bf16.msra.mxu0 %v3898
        %3964 = vmatprep.subr.bf16.mxu0 %v3901
        %3965 = vmatpush1.bf16.msra.mxu0 %v3900
        %3966 = vmatprep.subr.bf16.mxu0 %v3903
        %3967 = vmatpush1.bf16.msra.mxu0 %v3902
        %3968 = vmatprep.subr.bf16.mxu0 %v3905
        %3969 = vmatpush1.bf16.msra.mxu0 %v3904
        %3970 = vmatprep.subr.bf16.mxu0 %v3907
        %3971 = vmatpush1.bf16.msra.mxu0 %v3906
        %3972 = vmatprep.subr.bf16.mxu0 %v3909
        %3973 = vmatpush1.bf16.msra.mxu0 %v3908
        %3974 = vmatprep.subr.bf16.mxu0 %v3911
        %3975 = vmatpush1.bf16.msra.mxu0 %v3910
        %3976 = vmatprep.subr.bf16.mxu0 %v3913
        %3977 = vmatpush1.bf16.msra.mxu0 %v3912
        %3978 = vmatprep.subr.bf16.mxu0 %v3915
        %3979 = vmatpush1.bf16.msra.mxu0 %v3914
        %3980 = vmatprep.subr.bf16.mxu0 %v3917
        %3981 = vmatpush1.bf16.msra.mxu0 %v3916
        %3982 = vmatprep.subr.bf16.mxu0 %v3919
        %3983 = vmatpush1.bf16.msra.mxu0 %v3918
        %3984 = vmatprep.subr.bf16.mxu0 %v3921
        %3985 = vmatpush1.bf16.msra.mxu0 %v3920
        %3986 = vmatprep.subr.bf16.mxu0 %v3923
        %3987 = vmatpush1.bf16.msra.mxu0 %v3922
        %3988 = vmatprep.subr.bf16.mxu0 %v3925
        %3989 = vmatpush1.bf16.msra.mxu0 %v3924
        %3990 = vmatprep.mubr.bf16.mxu0 %v3739
        %3991 = vmatmul.mubr.bf16.gmra.mrb[0].mxu0 %v3738
        %v3992 = vpop.f32.mrb[0].mxu0
        %v3993 = vadd.f32 %v3791, %v3992
        %v3994 = vpop.f32.mrb[0].mxu0
        %v3995 = vadd.f32 %v3795, %v3994
        %v3996 = vpop.f32.mrb[0].mxu0
        %v3997 = vadd.f32 %v3791, %v3996
        %v3998 = vpop.f32.mrb[0].mxu0
        %v3999 = vadd.f32 %v3795, %v3998
        %4000 = vmatprep.mubr.bf16.mxu0 %v3741
        %4001 = vmatmul.mubr.bf16.gmra.mrb[0].mxu0 %v3740
        %v4002 = vpop.f32.mrb[0].mxu0
        %v4003 = vadd.f32 %v3791, %v4002
        %v4004 = vpop.f32.mrb[0].mxu0
        %v4005 = vadd.f32 %v3795, %v4004
        %v4006 = vpop.f32.mrb[0].mxu0
        %v4007 = vadd.f32 %v3791, %v4006
        %v4008 = vpop.f32.mrb[0].mxu0
        %v4009 = vadd.f32 %v3795, %v4008
        %4010 = vmatprep.mubr.bf16.mxu0 %v3743
        %4011 = vmatmul.mubr.bf16.gmra.mrb[0].mxu0 %v3742
        %v4012 = vpop.f32.mrb[0].mxu0
        %v4013 = vadd.f32 %v3791, %v4012
        %v4014 = vpop.f32.mrb[0].mxu0
        %v4015 = vadd.f32 %v3795, %v4014
        %v4016 = vpop.f32.mrb[0].mxu0
        %v4017 = vadd.f32 %v3791, %v4016
        %v4018 = vpop.f32.mrb[0].mxu0
        %v4019 = vadd.f32 %v3795, %v4018
        %4020 = vmatprep.mubr.bf16.mxu0 %v3745
        %4021 = vmatmul.mubr.bf16.gmra.mrb[0].mxu0 %v3744
        %v4022 = vpop.f32.mrb[0].mxu0
        %v4023 = vadd.f32 %v3791, %v4022
        %v4024 = vpop.f32.mrb[0].mxu0
        %v4025 = vadd.f32 %v3795, %v4024
        %v4026 = vpop.f32.mrb[0].mxu0
        %v4027 = vadd.f32 %v3791, %v4026
        %v4028 = vpop.f32.mrb[0].mxu0
        %v4029 = vadd.f32 %v3795, %v4028
        %4030 = vmatprep.mubr.bf16.mxu0 %v3747
        %4031 = vmatmul.mubr.bf16.gmra.mrb[0].mxu0 %v3746
        %v4032 = vpop.f32.mrb[0].mxu0
        %v4033 = vadd.f32 %v3791, %v4032
        %v4034 = vpop.f32.mrb[0].mxu0
        %v4035 = vadd.f32 %v3795, %v4034
        %v4036 = vpop.f32.mrb[0].mxu0
        %v4037 = vadd.f32 %v3791, %v4036
        %v4038 = vpop.f32.mrb[0].mxu0
        %v4039 = vadd.f32 %v3795, %v4038
        %4040 = vmatprep.mubr.bf16.mxu0 %v3749
        %4041 = vmatmul.mubr.bf16.gmra.mrb[0].mxu0 %v3748
        %v4042 = vpop.f32.mrb[0].mxu0
        %v4043 = vadd.f32 %v3791, %v4042
        %v4044 = vpop.f32.mrb[0].mxu0
        %v4045 = vadd.f32 %v3795, %v4044
        %v4046 = vpop.f32.mrb[0].mxu0
        %v4047 = vadd.f32 %v3791, %v4046
        %v4048 = vpop.f32.mrb[0].mxu0
        %v4049 = vadd.f32 %v3795, %v4048
        %4050 = vmatprep.mubr.bf16.mxu0 %v3751
        %4051 = vmatmul.mubr.bf16.gmra.mrb[0].mxu0 %v3750
        %v4052 = vpop.f32.mrb[0].mxu0
        %v4053 = vadd.f32 %v3791, %v4052
        %v4054 = vpop.f32.mrb[0].mxu0
        %v4055 = vadd.f32 %v3795, %v4054
        %v4056 = vpop.f32.mrb[0].mxu0
        %v4057 = vadd.f32 %v3791, %v4056
        %v4058 = vpop.f32.mrb[0].mxu0
        %v4059 = vadd.f32 %v3795, %v4058
        %4060 = vmatprep.mubr.bf16.mxu0 %v3753
        %4061 = vmatmul.mubr.bf16.gmra.mrb[0].mxu0 %v3752
        %v4062 = vpop.f32.mrb[0].mxu0
        %v4063 = vadd.f32 %v3791, %v4062
        %v4064 = vpop.f32.mrb[0].mxu0
        %v4065 = vadd.f32 %v3795, %v4064
        %v4066 = vpop.f32.mrb[0].mxu0
        %v4067 = vadd.f32 %v3791, %v4066
        %v4068 = vpop.f32.mrb[0].mxu0
        %v4069 = vadd.f32 %v3795, %v4068
        %4070 = vdwg.mxu0
        %vm4071 = vcmp.gt.f32.partialorder %v3993, 0.0
        %vm4072 = vcmp.gt.f32.partialorder %v3995, 0.0
        %vm4073 = vcmp.gt.f32.partialorder %v3997, 0.0
        %vm4074 = vcmp.gt.f32.partialorder %v3999, 0.0
        %vm4075 = vcmp.gt.f32.partialorder %v4003, 0.0
        %vm4076 = vcmp.gt.f32.partialorder %v4005, 0.0
        %vm4077 = vcmp.gt.f32.partialorder %v4007, 0.0
        %vm4078 = vcmp.gt.f32.partialorder %v4009, 0.0
        %vm4079 = vcmp.gt.f32.partialorder %v4013, 0.0
        %vm4080 = vcmp.gt.f32.partialorder %v4015, 0.0
        %vm4081 = vcmp.gt.f32.partialorder %v4017, 0.0
        %vm4082 = vcmp.gt.f32.partialorder %v4019, 0.0
        %vm4083 = vcmp.gt.f32.partialorder %v4023, 0.0
        %vm4084 = vcmp.gt.f32.partialorder %v4025, 0.0
        %vm4085 = vcmp.gt.f32.partialorder %v4027, 0.0
        %vm4086 = vcmp.gt.f32.partialorder %v4029, 0.0
        %vm4087 = vcmp.gt.f32.partialorder %v4033, 0.0
        %vm4088 = vcmp.gt.f32.partialorder %v4035, 0.0
        %vm4089 = vcmp.gt.f32.partialorder %v4037, 0.0
        %vm4090 = vcmp.gt.f32.partialorder %v4039, 0.0
        %vm4091 = vcmp.gt.f32.partialorder %v4043, 0.0
        %vm4092 = vcmp.gt.f32.partialorder %v4045, 0.0
        %vm4093 = vcmp.gt.f32.partialorder %v4047, 0.0
        %vm4094 = vcmp.gt.f32.partialorder %v4049, 0.0
        %vm4095 = vcmp.gt.f32.partialorder %v4053, 0.0
        %vm4096 = vcmp.gt.f32.partialorder %v4055, 0.0
        %vm4097 = vcmp.gt.f32.partialorder %v4057, 0.0
        %vm4098 = vcmp.gt.f32.partialorder %v4059, 0.0
        %vm4099 = vcmp.gt.f32.partialorder %v4063, 0.0
        %vm4100 = vcmp.gt.f32.partialorder %v4065, 0.0
        %vm4101 = vcmp.gt.f32.partialorder %v4067, 0.0
        %vm4102 = vcmp.gt.f32.partialorder %v4069, 0.0
        %v4103 = vmul.f32 %v3993, 0.01
        %v4104 = vmul.f32 %v3995, 0.01
        %v4105 = vmul.f32 %v3997, 0.01
        %v4106 = vmul.f32 %v3999, 0.01
        %v4107 = vmul.f32 %v4003, 0.01
        %v4108 = vmul.f32 %v4005, 0.01
        %v4109 = vmul.f32 %v4007, 0.01
        %v4110 = vmul.f32 %v4009, 0.01
        %v4111 = vmul.f32 %v4013, 0.01
        %v4112 = vmul.f32 %v4015, 0.01
        %v4113 = vmul.f32 %v4017, 0.01
        %v4114 = vmul.f32 %v4019, 0.01
        %v4115 = vmul.f32 %v4023, 0.01
        %v4116 = vmul.f32 %v4025, 0.01
        %v4117 = vmul.f32 %v4027, 0.01
        %v4118 = vmul.f32 %v4029, 0.01
        %v4119 = vmul.f32 %v4033, 0.01
        %v4120 = vmul.f32 %v4035, 0.01
        %v4121 = vmul.f32 %v4037, 0.01
        %v4122 = vmul.f32 %v4039, 0.01
        %v4123 = vmul.f32 %v4043, 0.01
        %v4124 = vmul.f32 %v4045, 0.01
        %v4125 = vmul.f32 %v4047, 0.01
        %v4126 = vmul.f32 %v4049, 0.01
        %v4127 = vmul.f32 %v4053, 0.01
        %v4128 = vmul.f32 %v4055, 0.01
        %v4129 = vmul.f32 %v4057, 0.01
        %v4130 = vmul.f32 %v4059, 0.01
        %v4131 = vmul.f32 %v4063, 0.01
        %v4132 = vmul.f32 %v4065, 0.01
        %v4133 = vmul.f32 %v4067, 0.01
        %v4134 = vmul.f32 %v4069, 0.01
        %v4135 = vsel %vm4071, %v3993, %v4103
        %v4136 = vsel %vm4072, %v3995, %v4104
        %v4137 = vsel %vm4073, %v3997, %v4105
        %v4138 = vsel %vm4074, %v3999, %v4106
        %v4139 = vsel %vm4075, %v4003, %v4107
        %v4140 = vsel %vm4076, %v4005, %v4108
        %v4141 = vsel %vm4077, %v4007, %v4109
        %v4142 = vsel %vm4078, %v4009, %v4110
        %v4143 = vsel %vm4079, %v4013, %v4111
        %v4144 = vsel %vm4080, %v4015, %v4112
        %v4145 = vsel %vm4081, %v4017, %v4113
        %v4146 = vsel %vm4082, %v4019, %v4114
        %v4147 = vsel %vm4083, %v4023, %v4115
        %v4148 = vsel %vm4084, %v4025, %v4116
        %v4149 = vsel %vm4085, %v4027, %v4117
        %v4150 = vsel %vm4086, %v4029, %v4118
        %v4151 = vsel %vm4087, %v4033, %v4119
        %v4152 = vsel %vm4088, %v4035, %v4120
        %v4153 = vsel %vm4089, %v4037, %v4121
        %v4154 = vsel %vm4090, %v4039, %v4122
        %v4155 = vsel %vm4091, %v4043, %v4123
        %v4156 = vsel %vm4092, %v4045, %v4124
        %v4157 = vsel %vm4093, %v4047, %v4125
        %v4158 = vsel %vm4094, %v4049, %v4126
        %v4159 = vsel %vm4095, %v4053, %v4127
        %v4160 = vsel %vm4096, %v4055, %v4128
        %v4161 = vsel %vm4097, %v4057, %v4129
        %v4162 = vsel %vm4098, %v4059, %v4130
        %v4163 = vsel %vm4099, %v4063, %v4131
        %v4164 = vsel %vm4100, %v4065, %v4132
        %v4165 = vsel %vm4101, %v4067, %v4133
        %v4166 = vsel %vm4102, %v4069, %v4134
        %v4167 = vpack.c.bf16 %v4137, %v4135
        %v4168 = vpack.c.bf16 %v4138, %v4136
        %v4169 = vpack.c.bf16 %v4141, %v4139
        %v4170 = vpack.c.bf16 %v4142, %v4140
        %v4171 = vpack.c.bf16 %v4145, %v4143
        %v4172 = vpack.c.bf16 %v4146, %v4144
        %v4173 = vpack.c.bf16 %v4149, %v4147
        %v4174 = vpack.c.bf16 %v4150, %v4148
        %v4175 = vpack.c.bf16 %v4153, %v4151
        %v4176 = vpack.c.bf16 %v4154, %v4152
        %v4177 = vpack.c.bf16 %v4157, %v4155
        %v4178 = vpack.c.bf16 %v4158, %v4156
        %v4179 = vpack.c.bf16 %v4161, %v4159
        %v4180 = vpack.c.bf16 %v4162, %v4160
        %v4181 = vpack.c.bf16 %v4165, %v4163
        %v4182 = vpack.c.bf16 %v4166, %v4164
        %v4183 = vld [vmem:[#allocation13] sm:$0xff]
        %v4184 = vld [vmem:[#allocation13 + $0x8] sm:$0xff]
        %v4185 = vld [vmem:[#allocation13 + $0x10] sm:$0xff]
        %v4186 = vld [vmem:[#allocation13 + $0x18] sm:$0xff]
        %v4187 = vld [vmem:[#allocation13 + $0x20] sm:$0xff]
        %v4188 = vld [vmem:[#allocation13 + $0x28] sm:$0xff]
        %v4189 = vld [vmem:[#allocation13 + $0x30] sm:$0xff]
        %v4190 = vld [vmem:[#allocation13 + $0x38] sm:$0xff]
        %v4191 = vld [vmem:[#allocation13 + $0x40] sm:$0xff]
        %v4192 = vld [vmem:[#allocation13 + $0x48] sm:$0xff]
        %v4193 = vld [vmem:[#allocation13 + $0x50] sm:$0xff]
        %v4194 = vld [vmem:[#allocation13 + $0x58] sm:$0xff]
        %v4195 = vld [vmem:[#allocation13 + $0x60] sm:$0xff]
        %v4196 = vld [vmem:[#allocation13 + $0x68] sm:$0xff]
        %v4197 = vld [vmem:[#allocation13 + $0x70] sm:$0xff]
        %v4198 = vld [vmem:[#allocation13 + $0x78] sm:$0xff]
        %v4199 = vld [vmem:[#allocation13 + $0x80] sm:$0xff]
        %v4200 = vld [vmem:[#allocation13 + $0x88] sm:$0xff]
        %v4201 = vld [vmem:[#allocation13 + $0x90] sm:$0xff]
        %v4202 = vld [vmem:[#allocation13 + $0x98] sm:$0xff]
        %v4203 = vld [vmem:[#allocation13 + $0xa0] sm:$0xff]
        %v4204 = vld [vmem:[#allocation13 + $0xa8] sm:$0xff]
        %v4205 = vld [vmem:[#allocation13 + $0xb0] sm:$0xff]
        %v4206 = vld [vmem:[#allocation13 + $0xb8] sm:$0xff]
        %v4207 = vld [vmem:[#allocation13 + $0xc0] sm:$0xff]
        %v4208 = vld [vmem:[#allocation13 + $0xc8] sm:$0xff]
        %v4209 = vld [vmem:[#allocation13 + $0xd0] sm:$0xff]
        %v4210 = vld [vmem:[#allocation13 + $0xd8] sm:$0xff]
        %v4211 = vld [vmem:[#allocation13 + $0xe0] sm:$0xff]
        %v4212 = vld [vmem:[#allocation13 + $0xe8] sm:$0xff]
        %v4213 = vld [vmem:[#allocation13 + $0xf0] sm:$0xff]
        %v4214 = vld [vmem:[#allocation13 + $0xf8] sm:$0xff]
        %v4215 = vld [vmem:[%s19] sm:$0x3]
        %v4217 = vlaneseq
        %v4218 = vshrl.u32 %v4217, 7
        %v4219 = vsub.s32 0, %v4218
        %v4220 = vrot.slane %v4215, %v4219
        %v4221 = vlaneseq
        %v4222 = vshrl.u32 %v4221, 7
        %v4223 = vsub.s32 1, %v4222
        %v4224 = vrot.slane %v4215, %v4223
        %v4259 = vunpack.c.l.b16 %v4183
        %v4260 = vunpack.c.h.b16 %v4183
        %v4261 = vunpack.c.l.b16 %v4184
        %v4262 = vunpack.c.h.b16 %v4184
        %v4263 = vunpack.c.l.b16 %v4185
        %v4264 = vunpack.c.h.b16 %v4185
        %v4265 = vunpack.c.l.b16 %v4186
        %v4266 = vunpack.c.h.b16 %v4186
        %v4267 = vunpack.c.l.b16 %v4187
        %v4268 = vunpack.c.h.b16 %v4187
        %v4269 = vunpack.c.l.b16 %v4188
        %v4270 = vunpack.c.h.b16 %v4188
        %v4271 = vunpack.c.l.b16 %v4189
        %v4272 = vunpack.c.h.b16 %v4189
        %v4273 = vunpack.c.l.b16 %v4190
        %v4274 = vunpack.c.h.b16 %v4190
        %v4275 = vunpack.c.l.b16 %v4191
        %v4276 = vunpack.c.h.b16 %v4191
        %v4277 = vunpack.c.l.b16 %v4192
        %v4278 = vunpack.c.h.b16 %v4192
        %v4279 = vunpack.c.l.b16 %v4193
        %v4280 = vunpack.c.h.b16 %v4193
        %v4281 = vunpack.c.l.b16 %v4194
        %v4282 = vunpack.c.h.b16 %v4194
        %v4283 = vunpack.c.l.b16 %v4195
        %v4284 = vunpack.c.h.b16 %v4195
        %v4285 = vunpack.c.l.b16 %v4196
        %v4286 = vunpack.c.h.b16 %v4196
        %v4287 = vunpack.c.l.b16 %v4197
        %v4288 = vunpack.c.h.b16 %v4197
        %v4289 = vunpack.c.l.b16 %v4198
        %v4290 = vunpack.c.h.b16 %v4198
        %v4291 = vunpack.c.l.b16 %v4199
        %v4292 = vunpack.c.h.b16 %v4199
        %v4293 = vunpack.c.l.b16 %v4200
        %v4294 = vunpack.c.h.b16 %v4200
        %v4295 = vunpack.c.l.b16 %v4201
        %v4296 = vunpack.c.h.b16 %v4201
        %v4297 = vunpack.c.l.b16 %v4202
        %v4298 = vunpack.c.h.b16 %v4202
        %v4299 = vunpack.c.l.b16 %v4203
        %v4300 = vunpack.c.h.b16 %v4203
        %v4301 = vunpack.c.l.b16 %v4204
        %v4302 = vunpack.c.h.b16 %v4204
        %v4303 = vunpack.c.l.b16 %v4205
        %v4304 = vunpack.c.h.b16 %v4205
        %v4305 = vunpack.c.l.b16 %v4206
        %v4306 = vunpack.c.h.b16 %v4206
        %v4307 = vunpack.c.l.b16 %v4207
        %v4308 = vunpack.c.h.b16 %v4207
        %v4309 = vunpack.c.l.b16 %v4208
        %v4310 = vunpack.c.h.b16 %v4208
        %v4311 = vunpack.c.l.b16 %v4209
        %v4312 = vunpack.c.h.b16 %v4209
        %v4313 = vunpack.c.l.b16 %v4210
        %v4314 = vunpack.c.h.b16 %v4210
        %v4315 = vunpack.c.l.b16 %v4211
        %v4316 = vunpack.c.h.b16 %v4211
        %v4317 = vunpack.c.l.b16 %v4212
        %v4318 = vunpack.c.h.b16 %v4212
        %v4319 = vunpack.c.l.b16 %v4213
        %v4320 = vunpack.c.h.b16 %v4213
        %v4321 = vunpack.c.l.b16 %v4214
        %v4322 = vunpack.c.h.b16 %v4214
        %v4323 = vpack.c.b16 %v4261, %v4259
        %v4324 = vpack.c.b16 %v4262, %v4260
        %v4325 = vpack.c.b16 %v4265, %v4263
        %v4326 = vpack.c.b16 %v4266, %v4264
        %v4327 = vpack.c.b16 %v4269, %v4267
        %v4328 = vpack.c.b16 %v4270, %v4268
        %v4329 = vpack.c.b16 %v4273, %v4271
        %v4330 = vpack.c.b16 %v4274, %v4272
        %v4331 = vpack.c.b16 %v4277, %v4275
        %v4332 = vpack.c.b16 %v4278, %v4276
        %v4333 = vpack.c.b16 %v4281, %v4279
        %v4334 = vpack.c.b16 %v4282, %v4280
        %v4335 = vpack.c.b16 %v4285, %v4283
        %v4336 = vpack.c.b16 %v4286, %v4284
        %v4337 = vpack.c.b16 %v4289, %v4287
        %v4338 = vpack.c.b16 %v4290, %v4288
        %v4339 = vpack.c.b16 %v4293, %v4291
        %v4340 = vpack.c.b16 %v4294, %v4292
        %v4341 = vpack.c.b16 %v4297, %v4295
        %v4342 = vpack.c.b16 %v4298, %v4296
        %v4343 = vpack.c.b16 %v4301, %v4299
        %v4344 = vpack.c.b16 %v4302, %v4300
        %v4345 = vpack.c.b16 %v4305, %v4303
        %v4346 = vpack.c.b16 %v4306, %v4304
        %v4347 = vpack.c.b16 %v4309, %v4307
        %v4348 = vpack.c.b16 %v4310, %v4308
        %v4349 = vpack.c.b16 %v4313, %v4311
        %v4350 = vpack.c.b16 %v4314, %v4312
        %v4351 = vpack.c.b16 %v4317, %v4315
        %v4352 = vpack.c.b16 %v4318, %v4316
        %v4353 = vpack.c.b16 %v4321, %v4319
        %v4354 = vpack.c.b16 %v4322, %v4320
        %4387 = vmatprep.subr.bf16.mxu0 %v4324
        %4388 = vmatpush1.bf16.msra.mxu0 %v4323
        %4389 = vmatprep.subr.bf16.mxu0 %v4326
        %4390 = vmatpush1.bf16.msra.mxu0 %v4325
        %4391 = vmatprep.subr.bf16.mxu0 %v4328
        %4392 = vmatpush1.bf16.msra.mxu0 %v4327
        %4393 = vmatprep.subr.bf16.mxu0 %v4330
        %4394 = vmatpush1.bf16.msra.mxu0 %v4329
        %4395 = vmatprep.subr.bf16.mxu0 %v4332
        %4396 = vmatpush1.bf16.msra.mxu0 %v4331
        %4397 = vmatprep.subr.bf16.mxu0 %v4334
        %4398 = vmatpush1.bf16.msra.mxu0 %v4333
        %4399 = vmatprep.subr.bf16.mxu0 %v4336
        %4400 = vmatpush1.bf16.msra.mxu0 %v4335
        %4401 = vmatprep.subr.bf16.mxu0 %v4338
        %4402 = vmatpush1.bf16.msra.mxu0 %v4337
        %4403 = vmatprep.subr.bf16.mxu0 %v4340
        %4404 = vmatpush1.bf16.msra.mxu0 %v4339
        %4405 = vmatprep.subr.bf16.mxu0 %v4342
        %4406 = vmatpush1.bf16.msra.mxu0 %v4341
        %4407 = vmatprep.subr.bf16.mxu0 %v4344
        %4408 = vmatpush1.bf16.msra.mxu0 %v4343
        %4409 = vmatprep.subr.bf16.mxu0 %v4346
        %4410 = vmatpush1.bf16.msra.mxu0 %v4345
        %4411 = vmatprep.subr.bf16.mxu0 %v4348
        %4412 = vmatpush1.bf16.msra.mxu0 %v4347
        %4413 = vmatprep.subr.bf16.mxu0 %v4350
        %4414 = vmatpush1.bf16.msra.mxu0 %v4349
        %4415 = vmatprep.subr.bf16.mxu0 %v4352
        %4416 = vmatpush1.bf16.msra.mxu0 %v4351
        %4417 = vmatprep.subr.bf16.mxu0 %v4354
        %4418 = vmatpush1.bf16.msra.mxu0 %v4353
        %4419 = vmatprep.mubr.bf16.mxu0 %v4168
        %4420 = vmatmul.mubr.bf16.gmra.mrb[0].mxu0 %v4167
        %v4421 = vpop.f32.mrb[0].mxu0
        %v4422 = vadd.f32 %v4220, %v4421
        %v4423 = vpop.f32.mrb[0].mxu0
        %v4424 = vadd.f32 %v4224, %v4423
        %v4425 = vpop.f32.mrb[0].mxu0
        %v4426 = vadd.f32 %v4220, %v4425
        %v4427 = vpop.f32.mrb[0].mxu0
        %v4428 = vadd.f32 %v4224, %v4427
        %4429 = vmatprep.mubr.bf16.mxu0 %v4170
        %4430 = vmatmul.mubr.bf16.gmra.mrb[0].mxu0 %v4169
        %v4431 = vpop.f32.mrb[0].mxu0
        %v4432 = vadd.f32 %v4220, %v4431
        %v4433 = vpop.f32.mrb[0].mxu0
        %v4434 = vadd.f32 %v4224, %v4433
        %v4435 = vpop.f32.mrb[0].mxu0
        %v4436 = vadd.f32 %v4220, %v4435
        %v4437 = vpop.f32.mrb[0].mxu0
        %v4438 = vadd.f32 %v4224, %v4437
        %4439 = vmatprep.mubr.bf16.mxu0 %v4172
        %4440 = vmatmul.mubr.bf16.gmra.mrb[0].mxu0 %v4171
        %v4441 = vpop.f32.mrb[0].mxu0
        %v4442 = vadd.f32 %v4220, %v4441
        %v4443 = vpop.f32.mrb[0].mxu0
        %v4444 = vadd.f32 %v4224, %v4443
        %v4445 = vpop.f32.mrb[0].mxu0
        %v4446 = vadd.f32 %v4220, %v4445
        %v4447 = vpop.f32.mrb[0].mxu0
        %v4448 = vadd.f32 %v4224, %v4447
        %4449 = vmatprep.mubr.bf16.mxu0 %v4174
        %4450 = vmatmul.mubr.bf16.gmra.mrb[0].mxu0 %v4173
        %v4451 = vpop.f32.mrb[0].mxu0
        %v4452 = vadd.f32 %v4220, %v4451
        %v4453 = vpop.f32.mrb[0].mxu0
        %v4454 = vadd.f32 %v4224, %v4453
        %v4455 = vpop.f32.mrb[0].mxu0
        %v4456 = vadd.f32 %v4220, %v4455
        %v4457 = vpop.f32.mrb[0].mxu0
        %v4458 = vadd.f32 %v4224, %v4457
        %4459 = vmatprep.mubr.bf16.mxu0 %v4176
        %4460 = vmatmul.mubr.bf16.gmra.mrb[0].mxu0 %v4175
        %v4461 = vpop.f32.mrb[0].mxu0
        %v4462 = vadd.f32 %v4220, %v4461
        %v4463 = vpop.f32.mrb[0].mxu0
        %v4464 = vadd.f32 %v4224, %v4463
        %v4465 = vpop.f32.mrb[0].mxu0
        %v4466 = vadd.f32 %v4220, %v4465
        %v4467 = vpop.f32.mrb[0].mxu0
        %v4468 = vadd.f32 %v4224, %v4467
        %4469 = vmatprep.mubr.bf16.mxu0 %v4178
        %4470 = vmatmul.mubr.bf16.gmra.mrb[0].mxu0 %v4177
        %v4471 = vpop.f32.mrb[0].mxu0
        %v4472 = vadd.f32 %v4220, %v4471
        %v4473 = vpop.f32.mrb[0].mxu0
        %v4474 = vadd.f32 %v4224, %v4473
        %v4475 = vpop.f32.mrb[0].mxu0
        %v4476 = vadd.f32 %v4220, %v4475
        %v4477 = vpop.f32.mrb[0].mxu0
        %v4478 = vadd.f32 %v4224, %v4477
        %4479 = vmatprep.mubr.bf16.mxu0 %v4180
        %4480 = vmatmul.mubr.bf16.gmra.mrb[0].mxu0 %v4179
        %v4481 = vpop.f32.mrb[0].mxu0
        %v4482 = vadd.f32 %v4220, %v4481
        %v4483 = vpop.f32.mrb[0].mxu0
        %v4484 = vadd.f32 %v4224, %v4483
        %v4485 = vpop.f32.mrb[0].mxu0
        %v4486 = vadd.f32 %v4220, %v4485
        %v4487 = vpop.f32.mrb[0].mxu0
        %v4488 = vadd.f32 %v4224, %v4487
        %4489 = vmatprep.mubr.bf16.mxu0 %v4182
        %4490 = vmatmul.mubr.bf16.gmra.mrb[0].mxu0 %v4181
        %v4491 = vpop.f32.mrb[0].mxu0
        %v4492 = vadd.f32 %v4220, %v4491
        %v4493 = vpop.f32.mrb[0].mxu0
        %v4494 = vadd.f32 %v4224, %v4493
        %v4495 = vpop.f32.mrb[0].mxu0
        %v4496 = vadd.f32 %v4220, %v4495
        %v4497 = vpop.f32.mrb[0].mxu0
        %v4498 = vadd.f32 %v4224, %v4497
        %4499 = vdwg.mxu0
        %4500 = vst [vmem:[%s837] sm:$0xff] %v4422
        %4501 = vst [vmem:[%s837 + $0x8] sm:$0xff] %v4424
        %4502 = vst [vmem:[%s837 + $0x10] sm:$0xff] %v4426
        %4503 = vst [vmem:[%s837 + $0x18] sm:$0xff] %v4428
        %4504 = vst [vmem:[%s837 + $0x20] sm:$0xff] %v4432
        %4505 = vst [vmem:[%s837 + $0x28] sm:$0xff] %v4434
        %4506 = vst [vmem:[%s837 + $0x30] sm:$0xff] %v4436
        %4507 = vst [vmem:[%s837 + $0x38] sm:$0xff] %v4438
        %4508 = vst [vmem:[%s837 + $0x40] sm:$0xff] %v4442
        %4509 = vst [vmem:[%s837 + $0x48] sm:$0xff] %v4444
        %4510 = vst [vmem:[%s837 + $0x50] sm:$0xff] %v4446
        %4511 = vst [vmem:[%s837 + $0x58] sm:$0xff] %v4448
        %4512 = vst [vmem:[%s837 + $0x60] sm:$0xff] %v4452
        %4513 = vst [vmem:[%s837 + $0x68] sm:$0xff] %v4454
        %4514 = vst [vmem:[%s837 + $0x70] sm:$0xff] %v4456
        %4515 = vst [vmem:[%s837 + $0x78] sm:$0xff] %v4458
        %4516 = vst [vmem:[%s837 + $0x80] sm:$0xff] %v4462
        %4517 = vst [vmem:[%s837 + $0x88] sm:$0xff] %v4464
        %4518 = vst [vmem:[%s837 + $0x90] sm:$0xff] %v4466
        %4519 = vst [vmem:[%s837 + $0x98] sm:$0xff] %v4468
        %4520 = vst [vmem:[%s837 + $0xa0] sm:$0xff] %v4472
        %4521 = vst [vmem:[%s837 + $0xa8] sm:$0xff] %v4474
        %4522 = vst [vmem:[%s837 + $0xb0] sm:$0xff] %v4476
        %4523 = vst [vmem:[%s837 + $0xb8] sm:$0xff] %v4478
        %4524 = vst [vmem:[%s837 + $0xc0] sm:$0xff] %v4482
        %4525 = vst [vmem:[%s837 + $0xc8] sm:$0xff] %v4484
        %4526 = vst [vmem:[%s837 + $0xd0] sm:$0xff] %v4486
        %4527 = vst [vmem:[%s837 + $0xd8] sm:$0xff] %v4488
        %4528 = vst [vmem:[%s837 + $0xe0] sm:$0xff] %v4492
        %4529 = vst [vmem:[%s837 + $0xe8] sm:$0xff] %v4494
        %4530 = vst [vmem:[%s837 + $0xf0] sm:$0xff] %v4496
        %4531 = vst [vmem:[%s837 + $0xf8] sm:$0xff] %v4498
        %s4532 = sand.u32 %s479, 1
        %s4533 = sand.u32 %s479, 1
        %s4534 = smul.addr %s4533, 128
        %s4535 = scalar_lea.vmem [#allocation14], %s4534
        %s4536 = sand.u32 %s505, 1
        %s4537 = sand.u32 %s505, 1
        %s4538 = smul.addr %s4537, 128
        %s4539 = scalar_lea.vmem [#allocation15], %s4538
        %s4540 = sand.u32 %s531, 1
        %s4541 = scalar_lea.sflag [#allocation4], %s4540
        %s4542 = sand.u32 %s531, 1
        %s4543 = smul.addr %s4542, 256
        %s4544 = scalar_lea.vmem [#allocation16], %s4543
        // Predicated region
        $region129: #{sigma_vae_forward.1} parent=99 // pred_check
          %p4545 = pneg %p489
        $region130: #{sigma_vae_forward.1} parent=99 // pred_check_branch
          %4547 = sbr.rel (%p4545) target = $region132
        $region131: #{sigma_vae_forward.1} parent=99 // pred_region
          %s4548 = smul.u32 16, %s41
          %s4549 = ssub.s32 25, %s4548
          %p4550 = scmp.lt.s32.totalorder %s4549, 16
          %s4551 = scalar_select %p4550, %s4549, 16
          %s4552 = smul.u32 128, %s4551
          %p4553 = scmp.ne.s32.totalorder 0, %s4552
          %s4554 = smul.addr %s4548, 8
          %s4555 = scalar_lea.vmem %s20, %s4554
          // Predicated region
          $region133: #{sigma_vae_forward.1} parent=131 // pred_check
            %p4556 = pneg %p4553
          $region134: #{sigma_vae_forward.1} parent=131 // pred_check_branch
            %4558 = sbr.rel (%p4556) target = $region136
          $region135: #{sigma_vae_forward.1} parent=131 // pred_region
            // Predicated region
            $region137: #{sigma_vae_forward.1} parent=135 // pred_check
              _
            $region138: #{sigma_vae_forward.1} parent=135 // pred_check_branch
              %4560 = sbr.rel (0) target = $region140
            $region139: #{sigma_vae_forward.1} parent=135 // pred_region
              // Predicated region
              $region159: #{sigma_vae_forward.1} parent=139 // pred_check
                _
              $region160: #{sigma_vae_forward.1} parent=139 // pred_check_branch
                %4639 = sbr.rel (0) target = $region162
              $region161: #{sigma_vae_forward.1} parent=139 // pred_region
                %s4640 = sshrl.u32 %s4551, 4
                // While loop
                $region163: #{sigma_vae_forward.1} parent=161 // loop_pre_header
                  _
                $region164: #{sigma_vae_forward.1} parent=161 // loop_header
                  %s4642 = sphi 0, %s4644
                  %p4643 = scmp.ge.s32.totalorder %s4642, %s4640
                  %s4647 = sphi 0, %s4684
                  %s4648 = sphi %s4535, %s4687
                  %s4649 = sphi %s4555, %s4688
                $region165: #{sigma_vae_forward.1} parent=161 // loop_header_branch
                  %4646 = sbr.rel (%p4643) target = $region169
                $region166: #{sigma_vae_forward.1} parent=161 // loop_body
                  %v4650 = vld [vmem:[%s4648] sm:$0xff]
                  %4651 = vst [vmem:[%s4649] sm:$0xff] %v4650
                  %v4652 = vld [vmem:[%s4648 + $0x8] sm:$0xff]
                  %4653 = vst [vmem:[%s4649 + $0x8] sm:$0xff] %v4652
                  %v4654 = vld [vmem:[%s4648 + $0x10] sm:$0xff]
                  %4655 = vst [vmem:[%s4649 + $0x10] sm:$0xff] %v4654
                  %v4656 = vld [vmem:[%s4648 + $0x18] sm:$0xff]
                  %4657 = vst [vmem:[%s4649 + $0x18] sm:$0xff] %v4656
                  %v4658 = vld [vmem:[%s4648 + $0x20] sm:$0xff]
                  %4659 = vst [vmem:[%s4649 + $0x20] sm:$0xff] %v4658
                  %v4660 = vld [vmem:[%s4648 + $0x28] sm:$0xff]
                  %4661 = vst [vmem:[%s4649 + $0x28] sm:$0xff] %v4660
                  %v4662 = vld [vmem:[%s4648 + $0x30] sm:$0xff]
                  %4663 = vst [vmem:[%s4649 + $0x30] sm:$0xff] %v4662
                  %v4664 = vld [vmem:[%s4648 + $0x38] sm:$0xff]
                  %4665 = vst [vmem:[%s4649 + $0x38] sm:$0xff] %v4664
                  %v4666 = vld [vmem:[%s4648 + $0x40] sm:$0xff]
                  %4667 = vst [vmem:[%s4649 + $0x40] sm:$0xff] %v4666
                  %v4668 = vld [vmem:[%s4648 + $0x48] sm:$0xff]
                  %4669 = vst [vmem:[%s4649 + $0x48] sm:$0xff] %v4668
                  %v4670 = vld [vmem:[%s4648 + $0x50] sm:$0xff]
                  %4671 = vst [vmem:[%s4649 + $0x50] sm:$0xff] %v4670
                  %v4672 = vld [vmem:[%s4648 + $0x58] sm:$0xff]
                  %4673 = vst [vmem:[%s4649 + $0x58] sm:$0xff] %v4672
                  %v4674 = vld [vmem:[%s4648 + $0x60] sm:$0xff]
                  %4675 = vst [vmem:[%s4649 + $0x60] sm:$0xff] %v4674
                  %v4676 = vld [vmem:[%s4648 + $0x68] sm:$0xff]
                  %4677 = vst [vmem:[%s4649 + $0x68] sm:$0xff] %v4676
                  %v4678 = vld [vmem:[%s4648 + $0x70] sm:$0xff]
                  %4679 = vst [vmem:[%s4649 + $0x70] sm:$0xff] %v4678
                  %v4680 = vld [vmem:[%s4648 + $0x78] sm:$0xff]
                  %4681 = vst [vmem:[%s4649 + $0x78] sm:$0xff] %v4680
                  %s4682 = sadd.s32 1, %s4647
                  %p4683 = scmp.ge.s32.totalorder %s4682, %s4640
                  %s4684 = scalar_select %p4683, 0, %s4682
                  %s4685 = smul.u32 %s4684, 128
                  %s4686 = smul.u32 %s4684, 128
                  %s4687 = scalar_lea.vmem %s4535, %s4685 [#allocation14]
                  %s4688 = scalar_lea.vmem %s4555, %s4686
                $region167: #{sigma_vae_forward.1} parent=161 // loop_footer
                  %s4644 = sadd.s32 %s4642, 1
                $region168: #{sigma_vae_forward.1} parent=161 // loop_footer_branch
                  %4641 = sbr.rel target = $region164
                $region169: #{sigma_vae_forward.1} parent=161 // loop_exit
                  _
                %s4689 = sshrl.u32 %s4551, 4
                %s4690 = sand.u32 %s4551, 15
                %s4691 = smul.u32 %s4689, 16
                %s4692 = smul.u32 8, %s4691
                %s4693 = scalar_lea.vmem %s4535, %s4692 [#allocation14]
                %s4694 = smul.u32 8, %s4691
                %s4695 = scalar_lea.vmem %s4555, %s4694
                // While loop
                $region170: #{sigma_vae_forward.1} parent=161 // loop_pre_header
                  _
                $region171: #{sigma_vae_forward.1} parent=161 // loop_header
                  %s4697 = sphi 0, %s4699
                  %p4698 = scmp.ge.s32.totalorder %s4697, %s4690
                  %s4702 = sphi 0, %s4709
                  %s4703 = sphi %s4693, %s4712
                  %s4704 = sphi %s4695, %s4713
                $region172: #{sigma_vae_forward.1} parent=161 // loop_header_branch
                  %4701 = sbr.rel (%p4698) target = $region176
                $region173: #{sigma_vae_forward.1} parent=161 // loop_body
                  %v4705 = vld [vmem:[%s4703] sm:$0xff]
                  %4706 = vst [vmem:[%s4704] sm:$0xff] %v4705
                  %s4707 = sadd.s32 1, %s4702
                  %p4708 = scmp.ge.s32.totalorder %s4707, %s4690
                  %s4709 = scalar_select %p4708, 0, %s4707
                  %s4710 = smul.u32 %s4709, 8
                  %s4711 = smul.u32 %s4709, 8
                  %s4712 = scalar_lea.vmem %s4693, %s4710 [#allocation14]
                  %s4713 = scalar_lea.vmem %s4695, %s4711
                $region174: #{sigma_vae_forward.1} parent=161 // loop_footer
                  %s4699 = sadd.s32 %s4697, 1
                $region175: #{sigma_vae_forward.1} parent=161 // loop_footer_branch
                  %4696 = sbr.rel target = $region171
                $region176: #{sigma_vae_forward.1} parent=161 // loop_exit
                  _
              $region162: #{sigma_vae_forward.1} parent=139 // pred_fallthru
                _
              // Predicated region
              $region177: #{sigma_vae_forward.1} parent=139 // pred_check
                _
              $region178: #{sigma_vae_forward.1} parent=139 // pred_check_branch
                %4715 = sbr.rel target = $region180
              $region179: #{sigma_vae_forward.1} parent=139 // pred_region
                _
              $region180: #{sigma_vae_forward.1} parent=139 // pred_fallthru
                _
            $region140: #{sigma_vae_forward.1} parent=135 // pred_fallthru
              _
            // Predicated region
            $region141: #{sigma_vae_forward.1} parent=135 // pred_check
              _
            $region142: #{sigma_vae_forward.1} parent=135 // pred_check_branch
              %4562 = sbr.rel target = $region144
            $region143: #{sigma_vae_forward.1} parent=135 // pred_region
              %s4564 = sshrl.u32 %s4551, 4
              // While loop
              $region145: #{sigma_vae_forward.1} parent=143 // loop_pre_header
                _
              $region146: #{sigma_vae_forward.1} parent=143 // loop_header
                %s4566 = sphi 0, %s4568
                %p4567 = scmp.ge.s32.totalorder %s4566, %s4564
                %s4571 = sphi 0, %s4608
                %s4572 = sphi %s4535, %s4611
                %s4573 = sphi %s4555, %s4612
              $region147: #{sigma_vae_forward.1} parent=143 // loop_header_branch
                %4570 = sbr.rel (%p4567) target = $region151
              $region148: #{sigma_vae_forward.1} parent=143 // loop_body
                %v4574 = vld [vmem:[%s4572] sm:$0xff]
                %4575 = vst [vmem:[%s4573] sm:$0xff] %v4574
                %v4576 = vld [vmem:[%s4572 + $0x8] sm:$0xff]
                %4577 = vst [vmem:[%s4573 + $0x8] sm:$0xff] %v4576
                %v4578 = vld [vmem:[%s4572 + $0x10] sm:$0xff]
                %4579 = vst [vmem:[%s4573 + $0x10] sm:$0xff] %v4578
                %v4580 = vld [vmem:[%s4572 + $0x18] sm:$0xff]
                %4581 = vst [vmem:[%s4573 + $0x18] sm:$0xff] %v4580
                %v4582 = vld [vmem:[%s4572 + $0x20] sm:$0xff]
                %4583 = vst [vmem:[%s4573 + $0x20] sm:$0xff] %v4582
                %v4584 = vld [vmem:[%s4572 + $0x28] sm:$0xff]
                %4585 = vst [vmem:[%s4573 + $0x28] sm:$0xff] %v4584
                %v4586 = vld [vmem:[%s4572 + $0x30] sm:$0xff]
                %4587 = vst [vmem:[%s4573 + $0x30] sm:$0xff] %v4586
                %v4588 = vld [vmem:[%s4572 + $0x38] sm:$0xff]
                %4589 = vst [vmem:[%s4573 + $0x38] sm:$0xff] %v4588
                %v4590 = vld [vmem:[%s4572 + $0x40] sm:$0xff]
                %4591 = vst [vmem:[%s4573 + $0x40] sm:$0xff] %v4590
                %v4592 = vld [vmem:[%s4572 + $0x48] sm:$0xff]
                %4593 = vst [vmem:[%s4573 + $0x48] sm:$0xff] %v4592
                %v4594 = vld [vmem:[%s4572 + $0x50] sm:$0xff]
                %4595 = vst [vmem:[%s4573 + $0x50] sm:$0xff] %v4594
                %v4596 = vld [vmem:[%s4572 + $0x58] sm:$0xff]
                %4597 = vst [vmem:[%s4573 + $0x58] sm:$0xff] %v4596
                %v4598 = vld [vmem:[%s4572 + $0x60] sm:$0xff]
                %4599 = vst [vmem:[%s4573 + $0x60] sm:$0xff] %v4598
                %v4600 = vld [vmem:[%s4572 + $0x68] sm:$0xff]
                %4601 = vst [vmem:[%s4573 + $0x68] sm:$0xff] %v4600
                %v4602 = vld [vmem:[%s4572 + $0x70] sm:$0xff]
                %4603 = vst [vmem:[%s4573 + $0x70] sm:$0xff] %v4602
                %v4604 = vld [vmem:[%s4572 + $0x78] sm:$0xff]
                %4605 = vst [vmem:[%s4573 + $0x78] sm:$0xff] %v4604
                %s4606 = sadd.s32 1, %s4571
                %p4607 = scmp.ge.s32.totalorder %s4606, %s4564
                %s4608 = scalar_select %p4607, 0, %s4606
                %s4609 = smul.u32 %s4608, 128
                %s4610 = smul.u32 %s4608, 128
                %s4611 = scalar_lea.vmem %s4535, %s4609 [#allocation14]
                %s4612 = scalar_lea.vmem %s4555, %s4610
              $region149: #{sigma_vae_forward.1} parent=143 // loop_footer
                %s4568 = sadd.s32 %s4566, 1
              $region150: #{sigma_vae_forward.1} parent=143 // loop_footer_branch
                %4565 = sbr.rel target = $region146
              $region151: #{sigma_vae_forward.1} parent=143 // loop_exit
                _
              %s4613 = sshrl.u32 %s4551, 4
              %s4614 = sand.u32 %s4551, 15
              %s4615 = smul.u32 %s4613, 16
              %s4616 = smul.u32 8, %s4615
              %s4617 = scalar_lea.vmem %s4535, %s4616 [#allocation14]
              %s4618 = smul.u32 8, %s4615
              %s4619 = scalar_lea.vmem %s4555, %s4618
              // While loop
              $region152: #{sigma_vae_forward.1} parent=143 // loop_pre_header
                _
              $region153: #{sigma_vae_forward.1} parent=143 // loop_header
                %s4621 = sphi 0, %s4623
                %p4622 = scmp.ge.s32.totalorder %s4621, %s4614
                %s4626 = sphi 0, %s4633
                %s4627 = sphi %s4617, %s4636
                %s4628 = sphi %s4619, %s4637
              $region154: #{sigma_vae_forward.1} parent=143 // loop_header_branch
                %4625 = sbr.rel (%p4622) target = $region158
              $region155: #{sigma_vae_forward.1} parent=143 // loop_body
                %v4629 = vld [vmem:[%s4627] sm:$0xff]
                %4630 = vst [vmem:[%s4628] sm:$0xff] %v4629
                %s4631 = sadd.s32 1, %s4626
                %p4632 = scmp.ge.s32.totalorder %s4631, %s4614
                %s4633 = scalar_select %p4632, 0, %s4631
                %s4634 = smul.u32 %s4633, 8
                %s4635 = smul.u32 %s4633, 8
                %s4636 = scalar_lea.vmem %s4617, %s4634 [#allocation14]
                %s4637 = scalar_lea.vmem %s4619, %s4635
              $region156: #{sigma_vae_forward.1} parent=143 // loop_footer
                %s4623 = sadd.s32 %s4621, 1
              $region157: #{sigma_vae_forward.1} parent=143 // loop_footer_branch
                %4620 = sbr.rel target = $region153
              $region158: #{sigma_vae_forward.1} parent=143 // loop_exit
                _
            $region144: #{sigma_vae_forward.1} parent=135 // pred_fallthru
              _
          $region136: #{sigma_vae_forward.1} parent=131 // pred_fallthru
            _
          %4716 = vnop
        $region132: #{sigma_vae_forward.1} parent=99 // pred_fallthru
          _
        // Predicated region
        $region181: #{sigma_vae_forward.1} parent=99 // pred_check
          %p4717 = pneg %p515
        $region182: #{sigma_vae_forward.1} parent=99 // pred_check_branch
          %4719 = sbr.rel (%p4717) target = $region184
        $region183: #{sigma_vae_forward.1} parent=99 // pred_region
          %s4720 = smul.u32 16, %s41
          %s4721 = ssub.s32 25, %s4720
          %p4722 = scmp.lt.s32.totalorder %s4721, 16
          %s4723 = scalar_select %p4722, %s4721, 16
          %s4724 = smul.u32 128, %s4723
          %p4725 = scmp.ne.s32.totalorder 0, %s4724
          %s4726 = smul.addr %s4720, 8
          %s4727 = scalar_lea.vmem %s21, %s4726
          // Predicated region
          $region185: #{sigma_vae_forward.1} parent=183 // pred_check
            %p4728 = pneg %p4725
          $region186: #{sigma_vae_forward.1} parent=183 // pred_check_branch
            %4730 = sbr.rel (%p4728) target = $region188
          $region187: #{sigma_vae_forward.1} parent=183 // pred_region
            // Predicated region
            $region189: #{sigma_vae_forward.1} parent=187 // pred_check
              _
            $region190: #{sigma_vae_forward.1} parent=187 // pred_check_branch
              %4732 = sbr.rel (0) target = $region192
            $region191: #{sigma_vae_forward.1} parent=187 // pred_region
              // Predicated region
              $region211: #{sigma_vae_forward.1} parent=191 // pred_check
                _
              $region212: #{sigma_vae_forward.1} parent=191 // pred_check_branch
                %4811 = sbr.rel (0) target = $region214
              $region213: #{sigma_vae_forward.1} parent=191 // pred_region
                %s4812 = sshrl.u32 %s4723, 4
                // While loop
                $region215: #{sigma_vae_forward.1} parent=213 // loop_pre_header
                  _
                $region216: #{sigma_vae_forward.1} parent=213 // loop_header
                  %s4814 = sphi 0, %s4816
                  %p4815 = scmp.ge.s32.totalorder %s4814, %s4812
                  %s4819 = sphi 0, %s4856
                  %s4820 = sphi %s4539, %s4859
                  %s4821 = sphi %s4727, %s4860
                $region217: #{sigma_vae_forward.1} parent=213 // loop_header_branch
                  %4818 = sbr.rel (%p4815) target = $region221
                $region218: #{sigma_vae_forward.1} parent=213 // loop_body
                  %v4822 = vld [vmem:[%s4820] sm:$0xff]
                  %4823 = vst [vmem:[%s4821] sm:$0xff] %v4822
                  %v4824 = vld [vmem:[%s4820 + $0x8] sm:$0xff]
                  %4825 = vst [vmem:[%s4821 + $0x8] sm:$0xff] %v4824
                  %v4826 = vld [vmem:[%s4820 + $0x10] sm:$0xff]
                  %4827 = vst [vmem:[%s4821 + $0x10] sm:$0xff] %v4826
                  %v4828 = vld [vmem:[%s4820 + $0x18] sm:$0xff]
                  %4829 = vst [vmem:[%s4821 + $0x18] sm:$0xff] %v4828
                  %v4830 = vld [vmem:[%s4820 + $0x20] sm:$0xff]
                  %4831 = vst [vmem:[%s4821 + $0x20] sm:$0xff] %v4830
                  %v4832 = vld [vmem:[%s4820 + $0x28] sm:$0xff]
                  %4833 = vst [vmem:[%s4821 + $0x28] sm:$0xff] %v4832
                  %v4834 = vld [vmem:[%s4820 + $0x30] sm:$0xff]
                  %4835 = vst [vmem:[%s4821 + $0x30] sm:$0xff] %v4834
                  %v4836 = vld [vmem:[%s4820 + $0x38] sm:$0xff]
                  %4837 = vst [vmem:[%s4821 + $0x38] sm:$0xff] %v4836
                  %v4838 = vld [vmem:[%s4820 + $0x40] sm:$0xff]
                  %4839 = vst [vmem:[%s4821 + $0x40] sm:$0xff] %v4838
                  %v4840 = vld [vmem:[%s4820 + $0x48] sm:$0xff]
                  %4841 = vst [vmem:[%s4821 + $0x48] sm:$0xff] %v4840
                  %v4842 = vld [vmem:[%s4820 + $0x50] sm:$0xff]
                  %4843 = vst [vmem:[%s4821 + $0x50] sm:$0xff] %v4842
                  %v4844 = vld [vmem:[%s4820 + $0x58] sm:$0xff]
                  %4845 = vst [vmem:[%s4821 + $0x58] sm:$0xff] %v4844
                  %v4846 = vld [vmem:[%s4820 + $0x60] sm:$0xff]
                  %4847 = vst [vmem:[%s4821 + $0x60] sm:$0xff] %v4846
                  %v4848 = vld [vmem:[%s4820 + $0x68] sm:$0xff]
                  %4849 = vst [vmem:[%s4821 + $0x68] sm:$0xff] %v4848
                  %v4850 = vld [vmem:[%s4820 + $0x70] sm:$0xff]
                  %4851 = vst [vmem:[%s4821 + $0x70] sm:$0xff] %v4850
                  %v4852 = vld [vmem:[%s4820 + $0x78] sm:$0xff]
                  %4853 = vst [vmem:[%s4821 + $0x78] sm:$0xff] %v4852
                  %s4854 = sadd.s32 1, %s4819
                  %p4855 = scmp.ge.s32.totalorder %s4854, %s4812
                  %s4856 = scalar_select %p4855, 0, %s4854
                  %s4857 = smul.u32 %s4856, 128
                  %s4858 = smul.u32 %s4856, 128
                  %s4859 = scalar_lea.vmem %s4539, %s4857 [#allocation15]
                  %s4860 = scalar_lea.vmem %s4727, %s4858
                $region219: #{sigma_vae_forward.1} parent=213 // loop_footer
                  %s4816 = sadd.s32 %s4814, 1
                $region220: #{sigma_vae_forward.1} parent=213 // loop_footer_branch
                  %4813 = sbr.rel target = $region216
                $region221: #{sigma_vae_forward.1} parent=213 // loop_exit
                  _
                %s4861 = sshrl.u32 %s4723, 4
                %s4862 = sand.u32 %s4723, 15
                %s4863 = smul.u32 %s4861, 16
                %s4864 = smul.u32 8, %s4863
                %s4865 = scalar_lea.vmem %s4539, %s4864 [#allocation15]
                %s4866 = smul.u32 8, %s4863
                %s4867 = scalar_lea.vmem %s4727, %s4866
                // While loop
                $region222: #{sigma_vae_forward.1} parent=213 // loop_pre_header
                  _
                $region223: #{sigma_vae_forward.1} parent=213 // loop_header
                  %s4869 = sphi 0, %s4871
                  %p4870 = scmp.ge.s32.totalorder %s4869, %s4862
                  %s4874 = sphi 0, %s4881
                  %s4875 = sphi %s4865, %s4884
                  %s4876 = sphi %s4867, %s4885
                $region224: #{sigma_vae_forward.1} parent=213 // loop_header_branch
                  %4873 = sbr.rel (%p4870) target = $region228
                $region225: #{sigma_vae_forward.1} parent=213 // loop_body
                  %v4877 = vld [vmem:[%s4875] sm:$0xff]
                  %4878 = vst [vmem:[%s4876] sm:$0xff] %v4877
                  %s4879 = sadd.s32 1, %s4874
                  %p4880 = scmp.ge.s32.totalorder %s4879, %s4862
                  %s4881 = scalar_select %p4880, 0, %s4879
                  %s4882 = smul.u32 %s4881, 8
                  %s4883 = smul.u32 %s4881, 8
                  %s4884 = scalar_lea.vmem %s4865, %s4882 [#allocation15]
                  %s4885 = scalar_lea.vmem %s4867, %s4883
                $region226: #{sigma_vae_forward.1} parent=213 // loop_footer
                  %s4871 = sadd.s32 %s4869, 1
                $region227: #{sigma_vae_forward.1} parent=213 // loop_footer_branch
                  %4868 = sbr.rel target = $region223
                $region228: #{sigma_vae_forward.1} parent=213 // loop_exit
                  _
              $region214: #{sigma_vae_forward.1} parent=191 // pred_fallthru
                _
              // Predicated region
              $region229: #{sigma_vae_forward.1} parent=191 // pred_check
                _
              $region230: #{sigma_vae_forward.1} parent=191 // pred_check_branch
                %4887 = sbr.rel target = $region232
              $region231: #{sigma_vae_forward.1} parent=191 // pred_region
                _
              $region232: #{sigma_vae_forward.1} parent=191 // pred_fallthru
                _
            $region192: #{sigma_vae_forward.1} parent=187 // pred_fallthru
              _
            // Predicated region
            $region193: #{sigma_vae_forward.1} parent=187 // pred_check
              _
            $region194: #{sigma_vae_forward.1} parent=187 // pred_check_branch
              %4734 = sbr.rel target = $region196
            $region195: #{sigma_vae_forward.1} parent=187 // pred_region
              %s4736 = sshrl.u32 %s4723, 4
              // While loop
              $region197: #{sigma_vae_forward.1} parent=195 // loop_pre_header
                _
              $region198: #{sigma_vae_forward.1} parent=195 // loop_header
                %s4738 = sphi 0, %s4740
                %p4739 = scmp.ge.s32.totalorder %s4738, %s4736
                %s4743 = sphi 0, %s4780
                %s4744 = sphi %s4539, %s4783
                %s4745 = sphi %s4727, %s4784
              $region199: #{sigma_vae_forward.1} parent=195 // loop_header_branch
                %4742 = sbr.rel (%p4739) target = $region203
              $region200: #{sigma_vae_forward.1} parent=195 // loop_body
                %v4746 = vld [vmem:[%s4744] sm:$0xff]
                %4747 = vst [vmem:[%s4745] sm:$0xff] %v4746
                %v4748 = vld [vmem:[%s4744 + $0x8] sm:$0xff]
                %4749 = vst [vmem:[%s4745 + $0x8] sm:$0xff] %v4748
                %v4750 = vld [vmem:[%s4744 + $0x10] sm:$0xff]
                %4751 = vst [vmem:[%s4745 + $0x10] sm:$0xff] %v4750
                %v4752 = vld [vmem:[%s4744 + $0x18] sm:$0xff]
                %4753 = vst [vmem:[%s4745 + $0x18] sm:$0xff] %v4752
                %v4754 = vld [vmem:[%s4744 + $0x20] sm:$0xff]
                %4755 = vst [vmem:[%s4745 + $0x20] sm:$0xff] %v4754
                %v4756 = vld [vmem:[%s4744 + $0x28] sm:$0xff]
                %4757 = vst [vmem:[%s4745 + $0x28] sm:$0xff] %v4756
                %v4758 = vld [vmem:[%s4744 + $0x30] sm:$0xff]
                %4759 = vst [vmem:[%s4745 + $0x30] sm:$0xff] %v4758
                %v4760 = vld [vmem:[%s4744 + $0x38] sm:$0xff]
                %4761 = vst [vmem:[%s4745 + $0x38] sm:$0xff] %v4760
                %v4762 = vld [vmem:[%s4744 + $0x40] sm:$0xff]
                %4763 = vst [vmem:[%s4745 + $0x40] sm:$0xff] %v4762
                %v4764 = vld [vmem:[%s4744 + $0x48] sm:$0xff]
                %4765 = vst [vmem:[%s4745 + $0x48] sm:$0xff] %v4764
                %v4766 = vld [vmem:[%s4744 + $0x50] sm:$0xff]
                %4767 = vst [vmem:[%s4745 + $0x50] sm:$0xff] %v4766
                %v4768 = vld [vmem:[%s4744 + $0x58] sm:$0xff]
                %4769 = vst [vmem:[%s4745 + $0x58] sm:$0xff] %v4768
                %v4770 = vld [vmem:[%s4744 + $0x60] sm:$0xff]
                %4771 = vst [vmem:[%s4745 + $0x60] sm:$0xff] %v4770
                %v4772 = vld [vmem:[%s4744 + $0x68] sm:$0xff]
                %4773 = vst [vmem:[%s4745 + $0x68] sm:$0xff] %v4772
                %v4774 = vld [vmem:[%s4744 + $0x70] sm:$0xff]
                %4775 = vst [vmem:[%s4745 + $0x70] sm:$0xff] %v4774
                %v4776 = vld [vmem:[%s4744 + $0x78] sm:$0xff]
                %4777 = vst [vmem:[%s4745 + $0x78] sm:$0xff] %v4776
                %s4778 = sadd.s32 1, %s4743
                %p4779 = scmp.ge.s32.totalorder %s4778, %s4736
                %s4780 = scalar_select %p4779, 0, %s4778
                %s4781 = smul.u32 %s4780, 128
                %s4782 = smul.u32 %s4780, 128
                %s4783 = scalar_lea.vmem %s4539, %s4781 [#allocation15]
                %s4784 = scalar_lea.vmem %s4727, %s4782
              $region201: #{sigma_vae_forward.1} parent=195 // loop_footer
                %s4740 = sadd.s32 %s4738, 1
              $region202: #{sigma_vae_forward.1} parent=195 // loop_footer_branch
                %4737 = sbr.rel target = $region198
              $region203: #{sigma_vae_forward.1} parent=195 // loop_exit
                _
              %s4785 = sshrl.u32 %s4723, 4
              %s4786 = sand.u32 %s4723, 15
              %s4787 = smul.u32 %s4785, 16
              %s4788 = smul.u32 8, %s4787
              %s4789 = scalar_lea.vmem %s4539, %s4788 [#allocation15]
              %s4790 = smul.u32 8, %s4787
              %s4791 = scalar_lea.vmem %s4727, %s4790
              // While loop
              $region204: #{sigma_vae_forward.1} parent=195 // loop_pre_header
                _
              $region205: #{sigma_vae_forward.1} parent=195 // loop_header
                %s4793 = sphi 0, %s4795
                %p4794 = scmp.ge.s32.totalorder %s4793, %s4786
                %s4798 = sphi 0, %s4805
                %s4799 = sphi %s4789, %s4808
                %s4800 = sphi %s4791, %s4809
              $region206: #{sigma_vae_forward.1} parent=195 // loop_header_branch
                %4797 = sbr.rel (%p4794) target = $region210
              $region207: #{sigma_vae_forward.1} parent=195 // loop_body
                %v4801 = vld [vmem:[%s4799] sm:$0xff]
                %4802 = vst [vmem:[%s4800] sm:$0xff] %v4801
                %s4803 = sadd.s32 1, %s4798
                %p4804 = scmp.ge.s32.totalorder %s4803, %s4786
                %s4805 = scalar_select %p4804, 0, %s4803
                %s4806 = smul.u32 %s4805, 8
                %s4807 = smul.u32 %s4805, 8
                %s4808 = scalar_lea.vmem %s4789, %s4806 [#allocation15]
                %s4809 = scalar_lea.vmem %s4791, %s4807
              $region208: #{sigma_vae_forward.1} parent=195 // loop_footer
                %s4795 = sadd.s32 %s4793, 1
              $region209: #{sigma_vae_forward.1} parent=195 // loop_footer_branch
                %4792 = sbr.rel target = $region205
              $region210: #{sigma_vae_forward.1} parent=195 // loop_exit
                _
            $region196: #{sigma_vae_forward.1} parent=187 // pred_fallthru
              _
          $region188: #{sigma_vae_forward.1} parent=183 // pred_fallthru
            _
          %4888 = vnop
        $region184: #{sigma_vae_forward.1} parent=99 // pred_fallthru
          _
        // Predicated region
        $region233: #{sigma_vae_forward.1} parent=99 // pred_check
          %p4889 = pneg %p541
        $region234: #{sigma_vae_forward.1} parent=99 // pred_check_branch
          %4891 = sbr.rel (%p4889) target = $region236
        $region235: #{sigma_vae_forward.1} parent=99 // pred_region
          %s4892 = smul.u32 16, %s41
          %s4893 = ssub.s32 25, %s4892
          %p4894 = scmp.lt.s32.totalorder %s4893, 16
          %s4895 = scalar_select %p4894, %s4893, 16
          %s4896 = smul.u32 128, %s4895
          %s4897 = smul.u32 %s4896, 2
          %s4899 = ssub.s32 4096, %s4897
          %4900 = vsyncadd %s4541, %s4899
          %p4901 = scmp.ne.s32.totalorder 0, %s4897
          %s4902 = smul.addr %s4892, 2
          %s4903 = smul.addr %s4902, 128
          %s4904 = scalar_lea.hbm %s22, %s4903
          %s4905 = smul.u32 16, %s4895
          %s4906 = sshll.u32 %s4544, 4
          %s4907 = int_to_ptr.vmem [resolvable:$true] %s4906
          %s4908 = sshll.u32 %s4905, 4
          %4912 = dma.vmem_to_hbm [thread:$0]  (%p4901), %s4907, %s4908, %s4904, %s4541, 256, 256, 16
        $region236: #{sigma_vae_forward.1} parent=99 // pred_fallthru
          _
      $region100: #{sigma_vae_forward.1} parent=5 // pred_fallthru
        _
      %p4913 = scmp.le.s32.totalorder 2, %s36
      // Predicated region
      $region237: #{sigma_vae_forward.1} parent=5 // pred_check
        %p4914 = pneg %p4913
      $region238: #{sigma_vae_forward.1} parent=5 // pred_check_branch
        %4916 = sbr.rel (%p4914) target = $region240
      $region239: #{sigma_vae_forward.1} parent=5 // pred_region
        %s4917 = ssub.s32 %s36, 2
        // Predicated region
        $region241: #{sigma_vae_forward.1} parent=239 // pred_check
          %p4918 = pneg %p495
        $region242: #{sigma_vae_forward.1} parent=239 // pred_check_branch
          %4920 = sbr.rel (%p4918) target = $region244
        $region243: #{sigma_vae_forward.1} parent=239 // pred_region
          %s4921 = sand.u32 %s480, 1
          %s4922 = sand.u32 %s480, 1
          %s4923 = smul.addr %s4922, 128
          %s4924 = scalar_lea.vmem [#allocation14], %s4923
        $region244: #{sigma_vae_forward.1} parent=239 // pred_fallthru
          _
        // Predicated region
        $region245: #{sigma_vae_forward.1} parent=239 // pred_check
          %p4925 = pneg %p521
        $region246: #{sigma_vae_forward.1} parent=239 // pred_check_branch
          %4927 = sbr.rel (%p4925) target = $region248
        $region247: #{sigma_vae_forward.1} parent=239 // pred_region
          %s4928 = sand.u32 %s506, 1
          %s4929 = sand.u32 %s506, 1
          %s4930 = smul.addr %s4929, 128
          %s4931 = scalar_lea.vmem [#allocation15], %s4930
        $region248: #{sigma_vae_forward.1} parent=239 // pred_fallthru
          _
        // Predicated region
        $region249: #{sigma_vae_forward.1} parent=239 // pred_check
          %p4932 = pneg %p547
        $region250: #{sigma_vae_forward.1} parent=239 // pred_check_branch
          %4934 = sbr.rel (%p4932) target = $region252
        $region251: #{sigma_vae_forward.1} parent=239 // pred_region
          %s4935 = sand.u32 %s532, 1
          %s4936 = scalar_lea.sflag [#allocation4], %s4935
          %s4937 = sand.u32 %s532, 1
          %s4938 = smul.addr %s4937, 256
          %s4939 = scalar_lea.vmem [#allocation16], %s4938
          %4940 = dma.done %s4936, 4096
        $region252: #{sigma_vae_forward.1} parent=239 // pred_fallthru
          _
      $region240: #{sigma_vae_forward.1} parent=5 // pred_fallthru
        _
    $region6: #{sigma_vae_forward.1} parent=1 // loop_footer
      %s40 = sadd.s32 1, %s36
    $region7: #{sigma_vae_forward.1} parent=1 // loop_footer_branch
      %35 = sbr.rel target = $region3
    $region8: #{sigma_vae_forward.1} parent=1 // loop_exit
      _
    %4941 = vsyncpa [#allocation3], 1
    %s4942 = scalar_lea.sflag [#allocation3], 1
    %4943 = vsyncpa %s4942, 1
    %4944 = vsyncpa [#allocation6], 1
    %4945 = vsyncpa [#allocation9], 1
    %4946 = vsyncpa [#allocation12], 1
    %4947 = vsyncpa [#allocation4], 1
    %s4948 = scalar_lea.sflag [#allocation4], 1
    %4949 = vsyncpa %s4948, 1

</llo_original>
